<compile_context>
chip_gen: v6e
topology: v6e:2x2x1
jax: 0.10.0
libtpu: 0.0.40
codegen_flags: <defaults>
</compile_context>

<pallas_src>
import functools

import jax
import jax.numpy as jnp
from jax import lax
from jax.experimental import pallas as pl
from jax.experimental.pallas import tpu as pltpu

EMBED_DIM = 100
EMBED_MAX_NORM = 1.0


def _round_up(x: int, m: int) -> int:
    return ((x + m - 1) // m) * m


def _cbow_kernel(ids_ref, emb_ref, w_ref, b_ref, out_ref, bag_ref, *,
                 n_ctx, tb, max_norm):
    bi = pl.program_id(0)   # batch tile (parallel)
    vi = pl.program_id(1)   # vocab tile (arbitrary, innermost)
    d = bag_ref.shape[1]

    # Build the (TB, D) mean-of-context bag once per batch tile.  max_norm renorm
    # is applied per looked-up row (exact torch embedding_renorm_ lookup
    # semantics: scale = max_norm / (norm + 1e-7) when norm > max_norm).
    @pl.when(vi == 0)
    def _build_bag():
        inv_c = jnp.float32(1.0 / n_ctx)
        mn = jnp.float32(max_norm)

        def row_body(r, carry):
            base = (bi * tb + r) * n_ctx
            acc = jnp.zeros((1, d), jnp.float32)
            for c in range(n_ctx):                       # small static context loop
                row = emb_ref[pl.ds(ids_ref[base + c], 1), :]
                nrm = jnp.sqrt(jnp.sum(row * row))
                scale = jnp.where(nrm > mn, mn / (nrm + 1e-7), jnp.float32(1.0))
                acc = acc + row * scale
            bag_ref[pl.ds(r, 1), :] = acc * inv_c
            return carry

        # unroll=8: rows are independent, interleave their gather/renorm chains.
        lax.fori_loop(0, tb, row_body, 0, unroll=8)

    # logits tile = bag @ W_tile^T + bias_tile  (bf16 inputs, f32 accumulation).
    logits = lax.dot_general(
        bag_ref[...].astype(jnp.bfloat16), w_ref[...],
        dimension_numbers=(((1,), (1,)), ((), ())),
        preferred_element_type=jnp.float32,
    )
    out_ref[...] = (logits + b_ref[...]).astype(out_ref.dtype)


def prepare_cbow_params(emb_weight, lin_weight, lin_bias, *,
                        max_norm=EMBED_MAX_NORM, tv=None):
    """One-time layout prep, hoisted out of the per-call forward path:
    pad D to 128 lanes, pad V to the vocab tile, cast the linear weight to bf16."""
    V, D = emb_weight.shape
    d_pad = _round_up(D, 128)
    if tv is None:
        tv = min(4096, _round_up(V, 256))      # 256-aligned for the v6e/v7x MXU
    v_pad = _round_up(V, tv)
    v_emb = _round_up(V, 8)

    # Embedding table stays f32 (renorm happens in-kernel on gathered rows).
    emb_p = jnp.pad(emb_weight.astype(jnp.float32),
                    ((0, v_emb - V), (0, d_pad - D)))
    # Linear weight streamed in bf16; zero padding is exact for the dot products.
    w_p = jnp.pad(lin_weight.astype(jnp.bfloat16),
                  ((0, v_pad - V), (0, d_pad - D)))
    bias_p = jnp.pad(lin_bias.astype(jnp.float32), (0, v_pad - V)).reshape(1, v_pad)

    return dict(emb=emb_p, w=w_p, bias=bias_p, vocab_size=int(V),
                embed_dim=int(D), tv=int(tv), max_norm=float(max_norm))


def cbow_forward(inputs, params, *, tb=None):
    """inputs: (B, C) int32 token ids; returns logits (B, V) float32."""
    B, C = inputs.shape
    V = params["vocab_size"]
    emb_p, w_p, bias_p = params["emb"], params["w"], params["bias"]
    tv = params["tv"]
    v_emb, d_pad = emb_p.shape
    v_pad = w_p.shape[0]

    if tb is None:
        # 256-row LHS feeds the 256x256 MXU on v6e/v7x; with small batches the
        # kernel is W-stream bound and TB is neutral.
        tb = 256 if B >= 256 else min(128, _round_up(B, 8))
    b_pad = _round_up(B, tb)

    ids_flat = jnp.pad(inputs.astype(jnp.int32),
                       ((0, b_pad - B), (0, 0))).reshape(-1)

    grid = (b_pad // tb, v_pad // tv)
    kernel = functools.partial(_cbow_kernel, n_ctx=int(C), tb=int(tb),
                               max_norm=params["max_norm"])

    # VMEM budget: single-buffered f32 table + double-buffered bf16 W tile,
    # f32 out tile + bias tile, plus the bag scratch (+ headroom).
    vmem_bytes = (v_emb * d_pad * 4
                  + 2 * tv * d_pad * 2
                  + 2 * tb * tv * 4
                  + 2 * tv * 4
                  + tb * d_pad * 4)
    vmem_limit = int(min(vmem_bytes + (8 << 20), 64 << 20))

    cost = pl.CostEstimate(
        flops=2 * b_pad * v_pad * d_pad,
        transcendentals=b_pad * C,
        bytes_accessed=(grid[0] * v_pad * d_pad * 2    # bf16 W re-streamed per batch tile
                        + v_emb * d_pad * 4            # embedding table
                        + b_pad * v_pad * 4            # logits
                        + b_pad * C * 4),              # ids
    )

    out = pl.pallas_call(
        kernel,
        out_shape=jax.ShapeDtypeStruct((b_pad, v_pad), jnp.float32),
        grid_spec=pltpu.PrefetchScalarGridSpec(
            num_scalar_prefetch=1,                                   # flat ids -> SMEM
            grid=grid,
            in_specs=[
                # Embedding table: whole (padded) f32 table resident in VMEM,
                # single-buffered (its block never changes -> no pipelining).
                # TODO(synk): for very large V use memory_space=pl.ANY + manual
                # DMA gather of only the TB*C looked-up rows per batch tile.
                pl.BlockSpec(memory_space=pltpu.MemorySpace.VMEM),
                # Linear weight streamed by vocab tile in bf16 (HBM-pipelined).
                pl.BlockSpec((tv, d_pad), lambda b, v, ids: (v, 0)),
                # Bias tile.
                pl.BlockSpec((1, tv), lambda b, v, ids: (0, v)),
            ],
            out_specs=pl.BlockSpec((tb, tv), lambda b, v, ids: (b, v)),
            scratch_shapes=[pltpu.VMEM((tb, d_pad), jnp.float32)],   # bag accumulator
        ),
        compiler_params=pltpu.CompilerParams(
            dimension_semantics=("parallel", "arbitrary"),
            vmem_limit_bytes=vmem_limit,
        ),
        cost_estimate=cost,
    )(ids_flat, emb_p, w_p, bias_p)

    return out[:B, :V]


def _reference(inputs, emb_weight, lin_weight, lin_bias, *, max_norm=EMBED_MAX_NORM):
    emb = emb_weight[inputs]                                          # (B, C, D)
    nrm = jnp.sqrt(jnp.sum(emb * emb, axis=-1, keepdims=True))
    scale = jnp.where(nrm > max_norm, max_norm / (nrm + 1e-7), 1.0)
    emb = emb * scale
    bag = emb.mean(axis=1)                                            # (B, D)
    return bag @ lin_weight.T + lin_bias                              # (B, V)


if __name__ == "__main__":
    VOCAB = 128
    D = EMBED_DIM            # 100
    B, C = 8, 6

    key = jax.random.PRNGKey(0)
    k_emb, k_lin, k_idx = jax.random.split(key, 3)

    # nn.init.uniform_(embeddings.weight, -0.1, 0.1)
    emb_weight = jax.random.uniform(k_emb, (VOCAB, D), jnp.float32, -0.1, 0.1)
    # nn.init.xavier_uniform_(linear.weight): bound = sqrt(6 / (fan_in + fan_out))
    bound = (6.0 / (D + VOCAB)) ** 0.5
    lin_weight = jax.random.uniform(k_lin, (VOCAB, D), jnp.float32, -bound, bound)
    # nn.init.zeros_(linear.bias)
    lin_bias = jnp.zeros((VOCAB,), jnp.float32)

    inputs = jax.random.randint(k_idx, (B, C), 0, VOCAB, dtype=jnp.int32)

    # scale 1.0: spec init (norms < 1, renorm inactive); scale 3.0 exercises the
    # max_norm renorm path.  Tolerance sized for the bf16 linear-weight stream.
    for tbl_scale in (1.0, 3.0):
        emb_w = emb_weight * tbl_scale
        params = prepare_cbow_params(emb_w, lin_weight, lin_bias)
        logits = jax.block_until_ready(cbow_forward(inputs, params))
        ref = _reference(inputs, emb_w, lin_weight, lin_bias)
        assert logits.shape == (B, VOCAB)
        err = float(jnp.max(jnp.abs(logits - ref)))
        assert jnp.allclose(logits, ref, atol=2e-2, rtol=2e-2), (
            f"mismatch vs reference (scale={tbl_scale}, max abs err={err})")

    print("KERNEL_OK")
</pallas_src>

<mosaic_0001>
module attributes {stable_mosaic.version = 11 : i64} {
  func.func @_cbow_kernel(%arg0: i32, %arg1: i32, %arg2: memref<48xi32, #tpu.memory_space<smem>>, %arg3: memref<128x128xf32, #tpu.memory_space<vmem>>, %arg4: memref<256x128xbf16, #tpu.memory_space<vmem>>, %arg5: memref<1x256xf32, #tpu.memory_space<vmem>>, %arg6: memref<8x256xf32, #tpu.memory_space<vmem>>, %arg7: memref<8x128xf32, #tpu.memory_space<vmem>>) attributes {dimension_semantics = [#tpu.dimension_semantics<parallel>, #tpu.dimension_semantics<arbitrary>], iteration_bounds = array<i64: 1, 1>, scalar_prefetch = 1 : i64, scratch_operands = 1 : i64, tpu.core_type = #tpu.core_type<tc>, window_params = [{pipeline_mode = #tpu.pipeline_mode<synchronous>, transform_indices = @transform_0, window_bounds = array<i64: 128, 128>}, {transform_indices = @transform_1, window_bounds = array<i64: 256, 128>}, {transform_indices = @transform_2, window_bounds = array<i64: 1, 256>}, {transform_indices = @transform_3, window_bounds = array<i64: 8, 256>}]} {
    %c0_i32 = arith.constant 0 : i32
    %0 = arith.cmpi eq, %arg1, %c0_i32 : i32
    %1 = arith.extui %0 : i1 to i32
    %c0_i32_0 = arith.constant 0 : i32
    %2 = arith.cmpi ne, %1, %c0_i32_0 : i32
    scf.if %2 {
      %cst_8 = arith.constant 1.000000e+00 : f32
      %cst_9 = arith.constant 0.166666672 : f32
      %c0_i32_10 = arith.constant 0 : i32
      %c8_i32 = arith.constant 8 : i32
      %11 = arith.muli %arg0, %c8_i32 : i32
      %12 = arith.addi %11, %c0_i32_10 : i32
      %c6_i32 = arith.constant 6 : i32
      %13 = arith.muli %12, %c6_i32 : i32
      %cst_11 = arith.constant 0.000000e+00 : f32
      %14 = vector.broadcast %cst_11 : f32 to vector<1x128xf32>
      %c0_i32_12 = arith.constant 0 : i32
      %15 = arith.addi %13, %c0_i32_12 : i32
      %16 = arith.index_cast %15 : i32 to index
      %17 = memref.load %arg2[%16] : memref<48xi32, #tpu.memory_space<smem>>
      %18 = arith.index_cast %17 : i32 to index
      %c0_13 = arith.constant 0 : index
      %19 = vector.load %arg3[%18, %c0_13] : memref<128x128xf32, #tpu.memory_space<vmem>>, vector<1x128xf32>
      %20 = arith.mulf %19, %19 : vector<1x128xf32>
      %21 = vector.shape_cast %20 : vector<1x128xf32> to vector<1x1x128xf32>
      %cst_14 = arith.constant dense<0.000000e+00> : vector<1xf32>
      %22 = vector.multi_reduction <add>, %21, %cst_14 [1, 2] : vector<1x1x128xf32> to vector<1xf32>
      %23 = vector.shape_cast %22 : vector<1xf32> to vector<1x1x1xf32>
      %24 = vector.extract %23[0, 0, 0] : f32 from vector<1x1x1xf32>
      %25 = math.sqrt %24 : f32
      %26 = arith.cmpf ogt, %25, %cst_8 : f32
      %cst_15 = arith.constant 1.000000e-07 : f32
      %27 = arith.addf %25, %cst_15 : f32
      %28 = arith.divf %cst_8, %27 : f32
      %cst_16 = arith.constant 1.000000e+00 : f32
      %29 = arith.select %26, %28, %cst_16 : f32
      %30 = vector.broadcast %29 : f32 to vector<1x128xf32>
      %31 = arith.mulf %19, %30 : vector<1x128xf32>
      %32 = arith.addf %14, %31 : vector<1x128xf32>
      %c1_i32 = arith.constant 1 : i32
      %33 = arith.addi %13, %c1_i32 : i32
      %34 = arith.index_cast %33 : i32 to index
      %35 = memref.load %arg2[%34] : memref<48xi32, #tpu.memory_space<smem>>
      %36 = arith.index_cast %35 : i32 to index
      %c0_17 = arith.constant 0 : index
      %37 = vector.load %arg3[%36, %c0_17] : memref<128x128xf32, #tpu.memory_space<vmem>>, vector<1x128xf32>
      %38 = arith.mulf %37, %37 : vector<1x128xf32>
      %39 = vector.shape_cast %38 : vector<1x128xf32> to vector<1x1x128xf32>
      %cst_18 = arith.constant dense<0.000000e+00> : vector<1xf32>
      %40 = vector.multi_reduction <add>, %39, %cst_18 [1, 2] : vector<1x1x128xf32> to vector<1xf32>
      %41 = vector.shape_cast %40 : vector<1xf32> to vector<1x1x1xf32>
      %42 = vector.extract %41[0, 0, 0] : f32 from vector<1x1x1xf32>
      %43 = math.sqrt %42 : f32
      %44 = arith.cmpf ogt, %43, %cst_8 : f32
      %cst_19 = arith.constant 1.000000e-07 : f32
      %45 = arith.addf %43, %cst_19 : f32
      %46 = arith.divf %cst_8, %45 : f32
      %cst_20 = arith.constant 1.000000e+00 : f32
      %47 = arith.select %44, %46, %cst_20 : f32
      %48 = vector.broadcast %47 : f32 to vector<1x128xf32>
      %49 = arith.mulf %37, %48 : vector<1x128xf32>
      %50 = arith.addf %32, %49 : vector<1x128xf32>
      %c2_i32 = arith.constant 2 : i32
      %51 = arith.addi %13, %c2_i32 : i32
      %52 = arith.index_cast %51 : i32 to index
      %53 = memref.load %arg2[%52] : memref<48xi32, #tpu.memory_space<smem>>
      %54 = arith.index_cast %53 : i32 to index
      %c0_21 = arith.constant 0 : index
      %55 = vector.load %arg3[%54, %c0_21] : memref<128x128xf32, #tpu.memory_space<vmem>>, vector<1x128xf32>
      %56 = arith.mulf %55, %55 : vector<1x128xf32>
      %57 = vector.shape_cast %56 : vector<1x128xf32> to vector<1x1x128xf32>
      %cst_22 = arith.constant dense<0.000000e+00> : vector<1xf32>
      %58 = vector.multi_reduction <add>, %57, %cst_22 [1, 2] : vector<1x1x128xf32> to vector<1xf32>
      %59 = vector.shape_cast %58 : vector<1xf32> to vector<1x1x1xf32>
      %60 = vector.extract %59[0, 0, 0] : f32 from vector<1x1x1xf32>
      %61 = math.sqrt %60 : f32
      %62 = arith.cmpf ogt, %61, %cst_8 : f32
      %cst_23 = arith.constant 1.000000e-07 : f32
      %63 = arith.addf %61, %cst_23 : f32
      %64 = arith.divf %cst_8, %63 : f32
      %cst_24 = arith.constant 1.000000e+00 : f32
      %65 = arith.select %62, %64, %cst_24 : f32
      %66 = vector.broadcast %65 : f32 to vector<1x128xf32>
      %67 = arith.mulf %55, %66 : vector<1x128xf32>
      %68 = arith.addf %50, %67 : vector<1x128xf32>
      %c3_i32 = arith.constant 3 : i32
      %69 = arith.addi %13, %c3_i32 : i32
      %70 = arith.index_cast %69 : i32 to index
      %71 = memref.load %arg2[%70] : memref<48xi32, #tpu.memory_space<smem>>
      %72 = arith.index_cast %71 : i32 to index
      %c0_25 = arith.constant 0 : index
      %73 = vector.load %arg3[%72, %c0_25] : memref<128x128xf32, #tpu.memory_space<vmem>>, vector<1x128xf32>
      %74 = arith.mulf %73, %73 : vector<1x128xf32>
      %75 = vector.shape_cast %74 : vector<1x128xf32> to vector<1x1x128xf32>
      %cst_26 = arith.constant dense<0.000000e+00> : vector<1xf32>
      %76 = vector.multi_reduction <add>, %75, %cst_26 [1, 2] : vector<1x1x128xf32> to vector<1xf32>
      %77 = vector.shape_cast %76 : vector<1xf32> to vector<1x1x1xf32>
      %78 = vector.extract %77[0, 0, 0] : f32 from vector<1x1x1xf32>
      %79 = math.sqrt %78 : f32
      %80 = arith.cmpf ogt, %79, %cst_8 : f32
      %cst_27 = arith.constant 1.000000e-07 : f32
      %81 = arith.addf %79, %cst_27 : f32
      %82 = arith.divf %cst_8, %81 : f32
      %cst_28 = arith.constant 1.000000e+00 : f32
      %83 = arith.select %80, %82, %cst_28 : f32
      %84 = vector.broadcast %83 : f32 to vector<1x128xf32>
      %85 = arith.mulf %73, %84 : vector<1x128xf32>
      %86 = arith.addf %68, %85 : vector<1x128xf32>
      %c4_i32 = arith.constant 4 : i32
      %87 = arith.addi %13, %c4_i32 : i32
      %88 = arith.index_cast %87 : i32 to index
      %89 = memref.load %arg2[%88] : memref<48xi32, #tpu.memory_space<smem>>
      %90 = arith.index_cast %89 : i32 to index
      %c0_29 = arith.constant 0 : index
      %91 = vector.load %arg3[%90, %c0_29] : memref<128x128xf32, #tpu.memory_space<vmem>>, vector<1x128xf32>
      %92 = arith.mulf %91, %91 : vector<1x128xf32>
      %93 = vector.shape_cast %92 : vector<1x128xf32> to vector<1x1x128xf32>
      %cst_30 = arith.constant dense<0.000000e+00> : vector<1xf32>
      %94 = vector.multi_reduction <add>, %93, %cst_30 [1, 2] : vector<1x1x128xf32> to vector<1xf32>
      %95 = vector.shape_cast %94 : vector<1xf32> to vector<1x1x1xf32>
      %96 = vector.extract %95[0, 0, 0] : f32 from vector<1x1x1xf32>
      %97 = math.sqrt %96 : f32
      %98 = arith.cmpf ogt, %97, %cst_8 : f32
      %cst_31 = arith.constant 1.000000e-07 : f32
      %99 = arith.addf %97, %cst_31 : f32
      %100 = arith.divf %cst_8, %99 : f32
      %cst_32 = arith.constant 1.000000e+00 : f32
      %101 = arith.select %98, %100, %cst_32 : f32
      %102 = vector.broadcast %101 : f32 to vector<1x128xf32>
      %103 = arith.mulf %91, %102 : vector<1x128xf32>
      %104 = arith.addf %86, %103 : vector<1x128xf32>
      %c5_i32 = arith.constant 5 : i32
      %105 = arith.addi %13, %c5_i32 : i32
      %106 = arith.index_cast %105 : i32 to index
      %107 = memref.load %arg2[%106] : memref<48xi32, #tpu.memory_space<smem>>
      %108 = arith.index_cast %107 : i32 to index
      %c0_33 = arith.constant 0 : index
      %109 = vector.load %arg3[%108, %c0_33] : memref<128x128xf32, #tpu.memory_space<vmem>>, vector<1x128xf32>
      %110 = arith.mulf %109, %109 : vector<1x128xf32>
      %111 = vector.shape_cast %110 : vector<1x128xf32> to vector<1x1x128xf32>
      %cst_34 = arith.constant dense<0.000000e+00> : vector<1xf32>
      %112 = vector.multi_reduction <add>, %111, %cst_34 [1, 2] : vector<1x1x128xf32> to vector<1xf32>
      %113 = vector.shape_cast %112 : vector<1xf32> to vector<1x1x1xf32>
      %114 = vector.extract %113[0, 0, 0] : f32 from vector<1x1x1xf32>
      %115 = math.sqrt %114 : f32
      %116 = arith.cmpf ogt, %115, %cst_8 : f32
      %cst_35 = arith.constant 1.000000e-07 : f32
      %117 = arith.addf %115, %cst_35 : f32
      %118 = arith.divf %cst_8, %117 : f32
      %cst_36 = arith.constant 1.000000e+00 : f32
      %119 = arith.select %116, %118, %cst_36 : f32
      %120 = vector.broadcast %119 : f32 to vector<1x128xf32>
      %121 = arith.mulf %109, %120 : vector<1x128xf32>
      %122 = arith.addf %104, %121 : vector<1x128xf32>
      %123 = vector.broadcast %cst_9 : f32 to vector<1x128xf32>
      %124 = arith.mulf %122, %123 : vector<1x128xf32>
      %125 = arith.index_cast %c0_i32_10 : i32 to index
      %c0_37 = arith.constant 0 : index
      %126 = vector.load %arg7[%125, %c0_37] : memref<8x128xf32, #tpu.memory_space<vmem>>, vector<1x128xf32>
      tpu.vector_store %arg7[%125, %c0_37], %124 {strides = array<i32>} : memref<8x128xf32, #tpu.memory_space<vmem>>, vector<1x128xf32>,
      %c1_i32_38 = arith.constant 1 : i32
      %c8_i32_39 = arith.constant 8 : i32
      %127 = arith.muli %arg0, %c8_i32_39 : i32
      %128 = arith.addi %127, %c1_i32_38 : i32
      %c6_i32_40 = arith.constant 6 : i32
      %129 = arith.muli %128, %c6_i32_40 : i32
      %cst_41 = arith.constant 0.000000e+00 : f32
      %130 = vector.broadcast %cst_41 : f32 to vector<1x128xf32>
      %c0_i32_42 = arith.constant 0 : i32
      %131 = arith.addi %129, %c0_i32_42 : i32
      %132 = arith.index_cast %131 : i32 to index
      %133 = memref.load %arg2[%132] : memref<48xi32, #tpu.memory_space<smem>>
      %134 = arith.index_cast %133 : i32 to index
      %c0_43 = arith.constant 0 : index
      %135 = vector.load %arg3[%134, %c0_43] : memref<128x128xf32, #tpu.memory_space<vmem>>, vector<1x128xf32>
      %136 = arith.mulf %135, %135 : vector<1x128xf32>
      %137 = vector.shape_cast %136 : vector<1x128xf32> to vector<1x1x128xf32>
      %cst_44 = arith.constant dense<0.000000e+00> : vector<1xf32>
      %138 = vector.multi_reduction <add>, %137, %cst_44 [1, 2] : vector<1x1x128xf32> to vector<1xf32>
      %139 = vector.shape_cast %138 : vector<1xf32> to vector<1x1x1xf32>
      %140 = vector.extract %139[0, 0, 0] : f32 from vector<1x1x1xf32>
      %141 = math.sqrt %140 : f32
      %142 = arith.cmpf ogt, %141, %cst_8 : f32
      %cst_45 = arith.constant 1.000000e-07 : f32
      %143 = arith.addf %141, %cst_45 : f32
      %144 = arith.divf %cst_8, %143 : f32
      %cst_46 = arith.constant 1.000000e+00 : f32
      %145 = arith.select %142, %144, %cst_46 : f32
      %146 = vector.broadcast %145 : f32 to vector<1x128xf32>
      %147 = arith.mulf %135, %146 : vector<1x128xf32>
      %148 = arith.addf %130, %147 : vector<1x128xf32>
      %c1_i32_47 = arith.constant 1 : i32
      %149 = arith.addi %129, %c1_i32_47 : i32
      %150 = arith.index_cast %149 : i32 to index
      %151 = memref.load %arg2[%150] : memref<48xi32, #tpu.memory_space<smem>>
      %152 = arith.index_cast %151 : i32 to index
      %c0_48 = arith.constant 0 : index
      %153 = vector.load %arg3[%152, %c0_48] : memref<128x128xf32, #tpu.memory_space<vmem>>, vector<1x128xf32>
      %154 = arith.mulf %153, %153 : vector<1x128xf32>
      %155 = vector.shape_cast %154 : vector<1x128xf32> to vector<1x1x128xf32>
      %cst_49 = arith.constant dense<0.000000e+00> : vector<1xf32>
      %156 = vector.multi_reduction <add>, %155, %cst_49 [1, 2] : vector<1x1x128xf32> to vector<1xf32>
      %157 = vector.shape_cast %156 : vector<1xf32> to vector<1x1x1xf32>
      %158 = vector.extract %157[0, 0, 0] : f32 from vector<1x1x1xf32>
      %159 = math.sqrt %158 : f32
      %160 = arith.cmpf ogt, %159, %cst_8 : f32
      %cst_50 = arith.constant 1.000000e-07 : f32
      %161 = arith.addf %159, %cst_50 : f32
      %162 = arith.divf %cst_8, %161 : f32
      %cst_51 = arith.constant 1.000000e+00 : f32
      %163 = arith.select %160, %162, %cst_51 : f32
      %164 = vector.broadcast %163 : f32 to vector<1x128xf32>
      %165 = arith.mulf %153, %164 : vector<1x128xf32>
      %166 = arith.addf %148, %165 : vector<1x128xf32>
      %c2_i32_52 = arith.constant 2 : i32
      %167 = arith.addi %129, %c2_i32_52 : i32
      %168 = arith.index_cast %167 : i32 to index
      %169 = memref.load %arg2[%168] : memref<48xi32, #tpu.memory_space<smem>>
      %170 = arith.index_cast %169 : i32 to index
      %c0_53 = arith.constant 0 : index
      %171 = vector.load %arg3[%170, %c0_53] : memref<128x128xf32, #tpu.memory_space<vmem>>, vector<1x128xf32>
      %172 = arith.mulf %171, %171 : vector<1x128xf32>
      %173 = vector.shape_cast %172 : vector<1x128xf32> to vector<1x1x128xf32>
      %cst_54 = arith.constant dense<0.000000e+00> : vector<1xf32>
      %174 = vector.multi_reduction <add>, %173, %cst_54 [1, 2] : vector<1x1x128xf32> to vector<1xf32>
      %175 = vector.shape_cast %174 : vector<1xf32> to vector<1x1x1xf32>
      %176 = vector.extract %175[0, 0, 0] : f32 from vector<1x1x1xf32>
      %177 = math.sqrt %176 : f32
      %178 = arith.cmpf ogt, %177, %cst_8 : f32
      %cst_55 = arith.constant 1.000000e-07 : f32
      %179 = arith.addf %177, %cst_55 : f32
      %180 = arith.divf %cst_8, %179 : f32
      %cst_56 = arith.constant 1.000000e+00 : f32
      %181 = arith.select %178, %180, %cst_56 : f32
      %182 = vector.broadcast %181 : f32 to vector<1x128xf32>
      %183 = arith.mulf %171, %182 : vector<1x128xf32>
      %184 = arith.addf %166, %183 : vector<1x128xf32>
      %c3_i32_57 = arith.constant 3 : i32
      %185 = arith.addi %129, %c3_i32_57 : i32
      %186 = arith.index_cast %185 : i32 to index
      %187 = memref.load %arg2[%186] : memref<48xi32, #tpu.memory_space<smem>>
      %188 = arith.index_cast %187 : i32 to index
      %c0_58 = arith.constant 0 : index
      %189 = vector.load %arg3[%188, %c0_58] : memref<128x128xf32, #tpu.memory_space<vmem>>, vector<1x128xf32>
      %190 = arith.mulf %189, %189 : vector<1x128xf32>
      %191 = vector.shape_cast %190 : vector<1x128xf32> to vector<1x1x128xf32>
      %cst_59 = arith.constant dense<0.000000e+00> : vector<1xf32>
      %192 = vector.multi_reduction <add>, %191, %cst_59 [1, 2] : vector<1x1x128xf32> to vector<1xf32>
      %193 = vector.shape_cast %192 : vector<1xf32> to vector<1x1x1xf32>
      %194 = vector.extract %193[0, 0, 0] : f32 from vector<1x1x1xf32>
      %195 = math.sqrt %194 : f32
      %196 = arith.cmpf ogt, %195, %cst_8 : f32
      %cst_60 = arith.constant 1.000000e-07 : f32
      %197 = arith.addf %195, %cst_60 : f32
      %198 = arith.divf %cst_8, %197 : f32
      %cst_61 = arith.constant 1.000000e+00 : f32
      %199 = arith.select %196, %198, %cst_61 : f32
      %200 = vector.broadcast %199 : f32 to vector<1x128xf32>
      %201 = arith.mulf %189, %200 : vector<1x128xf32>
      %202 = arith.addf %184, %201 : vector<1x128xf32>
      %c4_i32_62 = arith.constant 4 : i32
      %203 = arith.addi %129, %c4_i32_62 : i32
      %204 = arith.index_cast %203 : i32 to index
      %205 = memref.load %arg2[%204] : memref<48xi32, #tpu.memory_space<smem>>
      %206 = arith.index_cast %205 : i32 to index
      %c0_63 = arith.constant 0 : index
      %207 = vector.load %arg3[%206, %c0_63] : memref<128x128xf32, #tpu.memory_space<vmem>>, vector<1x128xf32>
      %208 = arith.mulf %207, %207 : vector<1x128xf32>
      %209 = vector.shape_cast %208 : vector<1x128xf32> to vector<1x1x128xf32>
      %cst_64 = arith.constant dense<0.000000e+00> : vector<1xf32>
      %210 = vector.multi_reduction <add>, %209, %cst_64 [1, 2] : vector<1x1x128xf32> to vector<1xf32>
      %211 = vector.shape_cast %210 : vector<1xf32> to vector<1x1x1xf32>
      %212 = vector.extract %211[0, 0, 0] : f32 from vector<1x1x1xf32>
      %213 = math.sqrt %212 : f32
      %214 = arith.cmpf ogt, %213, %cst_8 : f32
      %cst_65 = arith.constant 1.000000e-07 : f32
      %215 = arith.addf %213, %cst_65 : f32
      %216 = arith.divf %cst_8, %215 : f32
      %cst_66 = arith.constant 1.000000e+00 : f32
      %217 = arith.select %214, %216, %cst_66 : f32
      %218 = vector.broadcast %217 : f32 to vector<1x128xf32>
      %219 = arith.mulf %207, %218 : vector<1x128xf32>
      %220 = arith.addf %202, %219 : vector<1x128xf32>
      %c5_i32_67 = arith.constant 5 : i32
      %221 = arith.addi %129, %c5_i32_67 : i32
      %222 = arith.index_cast %221 : i32 to index
      %223 = memref.load %arg2[%222] : memref<48xi32, #tpu.memory_space<smem>>
      %224 = arith.index_cast %223 : i32 to index
      %c0_68 = arith.constant 0 : index
      %225 = vector.load %arg3[%224, %c0_68] : memref<128x128xf32, #tpu.memory_space<vmem>>, vector<1x128xf32>
      %226 = arith.mulf %225, %225 : vector<1x128xf32>
      %227 = vector.shape_cast %226 : vector<1x128xf32> to vector<1x1x128xf32>
      %cst_69 = arith.constant dense<0.000000e+00> : vector<1xf32>
      %228 = vector.multi_reduction <add>, %227, %cst_69 [1, 2] : vector<1x1x128xf32> to vector<1xf32>
      %229 = vector.shape_cast %228 : vector<1xf32> to vector<1x1x1xf32>
      %230 = vector.extract %229[0, 0, 0] : f32 from vector<1x1x1xf32>
      %231 = math.sqrt %230 : f32
      %232 = arith.cmpf ogt, %231, %cst_8 : f32
      %cst_70 = arith.constant 1.000000e-07 : f32
      %233 = arith.addf %231, %cst_70 : f32
      %234 = arith.divf %cst_8, %233 : f32
      %cst_71 = arith.constant 1.000000e+00 : f32
      %235 = arith.select %232, %234, %cst_71 : f32
      %236 = vector.broadcast %235 : f32 to vector<1x128xf32>
      %237 = arith.mulf %225, %236 : vector<1x128xf32>
      %238 = arith.addf %220, %237 : vector<1x128xf32>
      %239 = vector.broadcast %cst_9 : f32 to vector<1x128xf32>
      %240 = arith.mulf %238, %239 : vector<1x128xf32>
      %241 = arith.index_cast %c1_i32_38 : i32 to index
      %c0_72 = arith.constant 0 : index
      %242 = vector.load %arg7[%241, %c0_72] : memref<8x128xf32, #tpu.memory_space<vmem>>, vector<1x128xf32>
      tpu.vector_store %arg7[%241, %c0_72], %240 {strides = array<i32>} : memref<8x128xf32, #tpu.memory_space<vmem>>, vector<1x128xf32>,
      %c2_i32_73 = arith.constant 2 : i32
      %c8_i32_74 = arith.constant 8 : i32
      %243 = arith.muli %arg0, %c8_i32_74 : i32
      %244 = arith.addi %243, %c2_i32_73 : i32
      %c6_i32_75 = arith.constant 6 : i32
      %245 = arith.muli %244, %c6_i32_75 : i32
      %cst_76 = arith.constant 0.000000e+00 : f32
      %246 = vector.broadcast %cst_76 : f32 to vector<1x128xf32>
      %c0_i32_77 = arith.constant 0 : i32
      %247 = arith.addi %245, %c0_i32_77 : i32
      %248 = arith.index_cast %247 : i32 to index
      %249 = memref.load %arg2[%248] : memref<48xi32, #tpu.memory_space<smem>>
      %250 = arith.index_cast %249 : i32 to index
      %c0_78 = arith.constant 0 : index
      %251 = vector.load %arg3[%250, %c0_78] : memref<128x128xf32, #tpu.memory_space<vmem>>, vector<1x128xf32>
      %252 = arith.mulf %251, %251 : vector<1x128xf32>
      %253 = vector.shape_cast %252 : vector<1x128xf32> to vector<1x1x128xf32>
      %cst_79 = arith.constant dense<0.000000e+00> : vector<1xf32>
      %254 = vector.multi_reduction <add>, %253, %cst_79 [1, 2] : vector<1x1x128xf32> to vector<1xf32>
      %255 = vector.shape_cast %254 : vector<1xf32> to vector<1x1x1xf32>
      %256 = vector.extract %255[0, 0, 0] : f32 from vector<1x1x1xf32>
      %257 = math.sqrt %256 : f32
      %258 = arith.cmpf ogt, %257, %cst_8 : f32
      %cst_80 = arith.constant 1.000000e-07 : f32
      %259 = arith.addf %257, %cst_80 : f32
      %260 = arith.divf %cst_8, %259 : f32
      %cst_81 = arith.constant 1.000000e+00 : f32
      %261 = arith.select %258, %260, %cst_81 : f32
      %262 = vector.broadcast %261 : f32 to vector<1x128xf32>
      %263 = arith.mulf %251, %262 : vector<1x128xf32>
      %264 = arith.addf %246, %263 : vector<1x128xf32>
      %c1_i32_82 = arith.constant 1 : i32
      %265 = arith.addi %245, %c1_i32_82 : i32
      %266 = arith.index_cast %265 : i32 to index
      %267 = memref.load %arg2[%266] : memref<48xi32, #tpu.memory_space<smem>>
      %268 = arith.index_cast %267 : i32 to index
      %c0_83 = arith.constant 0 : index
      %269 = vector.load %arg3[%268, %c0_83] : memref<128x128xf32, #tpu.memory_space<vmem>>, vector<1x128xf32>
      %270 = arith.mulf %269, %269 : vector<1x128xf32>
      %271 = vector.shape_cast %270 : vector<1x128xf32> to vector<1x1x128xf32>
      %cst_84 = arith.constant dense<0.000000e+00> : vector<1xf32>
      %272 = vector.multi_reduction <add>, %271, %cst_84 [1, 2] : vector<1x1x128xf32> to vector<1xf32>
      %273 = vector.shape_cast %272 : vector<1xf32> to vector<1x1x1xf32>
      %274 = vector.extract %273[0, 0, 0] : f32 from vector<1x1x1xf32>
      %275 = math.sqrt %274 : f32
      %276 = arith.cmpf ogt, %275, %cst_8 : f32
      %cst_85 = arith.constant 1.000000e-07 : f32
      %277 = arith.addf %275, %cst_85 : f32
      %278 = arith.divf %cst_8, %277 : f32
      %cst_86 = arith.constant 1.000000e+00 : f32
      %279 = arith.select %276, %278, %cst_86 : f32
      %280 = vector.broadcast %279 : f32 to vector<1x128xf32>
      %281 = arith.mulf %269, %280 : vector<1x128xf32>
      %282 = arith.addf %264, %281 : vector<1x128xf32>
      %c2_i32_87 = arith.constant 2 : i32
      %283 = arith.addi %245, %c2_i32_87 : i32
      %284 = arith.index_cast %283 : i32 to index
      %285 = memref.load %arg2[%284] : memref<48xi32, #tpu.memory_space<smem>>
      %286 = arith.index_cast %285 : i32 to index
      %c0_88 = arith.constant 0 : index
      %287 = vector.load %arg3[%286, %c0_88] : memref<128x128xf32, #tpu.memory_space<vmem>>, vector<1x128xf32>
      %288 = arith.mulf %287, %287 : vector<1x128xf32>
      %289 = vector.shape_cast %288 : vector<1x128xf32> to vector<1x1x128xf32>
      %cst_89 = arith.constant dense<0.000000e+00> : vector<1xf32>
      %290 = vector.multi_reduction <add>, %289, %cst_89 [1, 2] : vector<1x1x128xf32> to vector<1xf32>
      %291 = vector.shape_cast %290 : vector<1xf32> to vector<1x1x1xf32>
      %292 = vector.extract %291[0, 0, 0] : f32 from vector<1x1x1xf32>
      %293 = math.sqrt %292 : f32
      %294 = arith.cmpf ogt, %293, %cst_8 : f32
      %cst_90 = arith.constant 1.000000e-07 : f32
      %295 = arith.addf %293, %cst_90 : f32
      %296 = arith.divf %cst_8, %295 : f32
      %cst_91 = arith.constant 1.000000e+00 : f32
      %297 = arith.select %294, %296, %cst_91 : f32
      %298 = vector.broadcast %297 : f32 to vector<1x128xf32>
      %299 = arith.mulf %287, %298 : vector<1x128xf32>
      %300 = arith.addf %282, %299 : vector<1x128xf32>
      %c3_i32_92 = arith.constant 3 : i32
      %301 = arith.addi %245, %c3_i32_92 : i32
      %302 = arith.index_cast %301 : i32 to index
      %303 = memref.load %arg2[%302] : memref<48xi32, #tpu.memory_space<smem>>
      %304 = arith.index_cast %303 : i32 to index
      %c0_93 = arith.constant 0 : index
      %305 = vector.load %arg3[%304, %c0_93] : memref<128x128xf32, #tpu.memory_space<vmem>>, vector<1x128xf32>
      %306 = arith.mulf %305, %305 : vector<1x128xf32>
      %307 = vector.shape_cast %306 : vector<1x128xf32> to vector<1x1x128xf32>
      %cst_94 = arith.constant dense<0.000000e+00> : vector<1xf32>
      %308 = vector.multi_reduction <add>, %307, %cst_94 [1, 2] : vector<1x1x128xf32> to vector<1xf32>
      %309 = vector.shape_cast %308 : vector<1xf32> to vector<1x1x1xf32>
      %310 = vector.extract %309[0, 0, 0] : f32 from vector<1x1x1xf32>
      %311 = math.sqrt %310 : f32
      %312 = arith.cmpf ogt, %311, %cst_8 : f32
      %cst_95 = arith.constant 1.000000e-07 : f32
      %313 = arith.addf %311, %cst_95 : f32
      %314 = arith.divf %cst_8, %313 : f32
      %cst_96 = arith.constant 1.000000e+00 : f32
      %315 = arith.select %312, %314, %cst_96 : f32
      %316 = vector.broadcast %315 : f32 to vector<1x128xf32>
      %317 = arith.mulf %305, %316 : vector<1x128xf32>
      %318 = arith.addf %300, %317 : vector<1x128xf32>
      %c4_i32_97 = arith.constant 4 : i32
      %319 = arith.addi %245, %c4_i32_97 : i32
      %320 = arith.index_cast %319 : i32 to index
      %321 = memref.load %arg2[%320] : memref<48xi32, #tpu.memory_space<smem>>
      %322 = arith.index_cast %321 : i32 to index
      %c0_98 = arith.constant 0 : index
      %323 = vector.load %arg3[%322, %c0_98] : memref<128x128xf32, #tpu.memory_space<vmem>>, vector<1x128xf32>
      %324 = arith.mulf %323, %323 : vector<1x128xf32>
      %325 = vector.shape_cast %324 : vector<1x128xf32> to vector<1x1x128xf32>
      %cst_99 = arith.constant dense<0.000000e+00> : vector<1xf32>
      %326 = vector.multi_reduction <add>, %325, %cst_99 [1, 2] : vector<1x1x128xf32> to vector<1xf32>
      %327 = vector.shape_cast %326 : vector<1xf32> to vector<1x1x1xf32>
      %328 = vector.extract %327[0, 0, 0] : f32 from vector<1x1x1xf32>
      %329 = math.sqrt %328 : f32
      %330 = arith.cmpf ogt, %329, %cst_8 : f32
      %cst_100 = arith.constant 1.000000e-07 : f32
      %331 = arith.addf %329, %cst_100 : f32
      %332 = arith.divf %cst_8, %331 : f32
      %cst_101 = arith.constant 1.000000e+00 : f32
      %333 = arith.select %330, %332, %cst_101 : f32
      %334 = vector.broadcast %333 : f32 to vector<1x128xf32>
      %335 = arith.mulf %323, %334 : vector<1x128xf32>
      %336 = arith.addf %318, %335 : vector<1x128xf32>
      %c5_i32_102 = arith.constant 5 : i32
      %337 = arith.addi %245, %c5_i32_102 : i32
      %338 = arith.index_cast %337 : i32 to index
      %339 = memref.load %arg2[%338] : memref<48xi32, #tpu.memory_space<smem>>
      %340 = arith.index_cast %339 : i32 to index
      %c0_103 = arith.constant 0 : index
      %341 = vector.load %arg3[%340, %c0_103] : memref<128x128xf32, #tpu.memory_space<vmem>>, vector<1x128xf32>
      %342 = arith.mulf %341, %341 : vector<1x128xf32>
      %343 = vector.shape_cast %342 : vector<1x128xf32> to vector<1x1x128xf32>
      %cst_104 = arith.constant dense<0.000000e+00> : vector<1xf32>
      %344 = vector.multi_reduction <add>, %343, %cst_104 [1, 2] : vector<1x1x128xf32> to vector<1xf32>
      %345 = vector.shape_cast %344 : vector<1xf32> to vector<1x1x1xf32>
      %346 = vector.extract %345[0, 0, 0] : f32 from vector<1x1x1xf32>
      %347 = math.sqrt %346 : f32
      %348 = arith.cmpf ogt, %347, %cst_8 : f32
      %cst_105 = arith.constant 1.000000e-07 : f32
      %349 = arith.addf %347, %cst_105 : f32
      %350 = arith.divf %cst_8, %349 : f32
      %cst_106 = arith.constant 1.000000e+00 : f32
      %351 = arith.select %348, %350, %cst_106 : f32
      %352 = vector.broadcast %351 : f32 to vector<1x128xf32>
      %353 = arith.mulf %341, %352 : vector<1x128xf32>
      %354 = arith.addf %336, %353 : vector<1x128xf32>
      %355 = vector.broadcast %cst_9 : f32 to vector<1x128xf32>
      %356 = arith.mulf %354, %355 : vector<1x128xf32>
      %357 = arith.index_cast %c2_i32_73 : i32 to index
      %c0_107 = arith.constant 0 : index
      %358 = vector.load %arg7[%357, %c0_107] : memref<8x128xf32, #tpu.memory_space<vmem>>, vector<1x128xf32>
      tpu.vector_store %arg7[%357, %c0_107], %356 {strides = array<i32>} : memref<8x128xf32, #tpu.memory_space<vmem>>, vector<1x128xf32>,
      %c3_i32_108 = arith.constant 3 : i32
      %c8_i32_109 = arith.constant 8 : i32
      %359 = arith.muli %arg0, %c8_i32_109 : i32
      %360 = arith.addi %359, %c3_i32_108 : i32
      %c6_i32_110 = arith.constant 6 : i32
      %361 = arith.muli %360, %c6_i32_110 : i32
      %cst_111 = arith.constant 0.000000e+00 : f32
      %362 = vector.broadcast %cst_111 : f32 to vector<1x128xf32>
      %c0_i32_112 = arith.constant 0 : i32
      %363 = arith.addi %361, %c0_i32_112 : i32
      %364 = arith.index_cast %363 : i32 to index
      %365 = memref.load %arg2[%364] : memref<48xi32, #tpu.memory_space<smem>>
      %366 = arith.index_cast %365 : i32 to index
      %c0_113 = arith.constant 0 : index
      %367 = vector.load %arg3[%366, %c0_113] : memref<128x128xf32, #tpu.memory_space<vmem>>, vector<1x128xf32>
      %368 = arith.mulf %367, %367 : vector<1x128xf32>
      %369 = vector.shape_cast %368 : vector<1x128xf32> to vector<1x1x128xf32>
      %cst_114 = arith.constant dense<0.000000e+00> : vector<1xf32>
      %370 = vector.multi_reduction <add>, %369, %cst_114 [1, 2] : vector<1x1x128xf32> to vector<1xf32>
      %371 = vector.shape_cast %370 : vector<1xf32> to vector<1x1x1xf32>
      %372 = vector.extract %371[0, 0, 0] : f32 from vector<1x1x1xf32>
      %373 = math.sqrt %372 : f32
      %374 = arith.cmpf ogt, %373, %cst_8 : f32
      %cst_115 = arith.constant 1.000000e-07 : f32
      %375 = arith.addf %373, %cst_115 : f32
      %376 = arith.divf %cst_8, %375 : f32
      %cst_116 = arith.constant 1.000000e+00 : f32
      %377 = arith.select %374, %376, %cst_116 : f32
      %378 = vector.broadcast %377 : f32 to vector<1x128xf32>
      %379 = arith.mulf %367, %378 : vector<1x128xf32>
      %380 = arith.addf %362, %379 : vector<1x128xf32>
      %c1_i32_117 = arith.constant 1 : i32
      %381 = arith.addi %361, %c1_i32_117 : i32
      %382 = arith.index_cast %381 : i32 to index
      %383 = memref.load %arg2[%382] : memref<48xi32, #tpu.memory_space<smem>>
      %384 = arith.index_cast %383 : i32 to index
      %c0_118 = arith.constant 0 : index
      %385 = vector.load %arg3[%384, %c0_118] : memref<128x128xf32, #tpu.memory_space<vmem>>, vector<1x128xf32>
      %386 = arith.mulf %385, %385 : vector<1x128xf32>
      %387 = vector.shape_cast %386 : vector<1x128xf32> to vector<1x1x128xf32>
      %cst_119 = arith.constant dense<0.000000e+00> : vector<1xf32>
      %388 = vector.multi_reduction <add>, %387, %cst_119 [1, 2] : vector<1x1x128xf32> to vector<1xf32>
      %389 = vector.shape_cast %388 : vector<1xf32> to vector<1x1x1xf32>
      %390 = vector.extract %389[0, 0, 0] : f32 from vector<1x1x1xf32>
      %391 = math.sqrt %390 : f32
      %392 = arith.cmpf ogt, %391, %cst_8 : f32
      %cst_120 = arith.constant 1.000000e-07 : f32
      %393 = arith.addf %391, %cst_120 : f32
      %394 = arith.divf %cst_8, %393 : f32
      %cst_121 = arith.constant 1.000000e+00 : f32
      %395 = arith.select %392, %394, %cst_121 : f32
      %396 = vector.broadcast %395 : f32 to vector<1x128xf32>
      %397 = arith.mulf %385, %396 : vector<1x128xf32>
      %398 = arith.addf %380, %397 : vector<1x128xf32>
      %c2_i32_122 = arith.constant 2 : i32
      %399 = arith.addi %361, %c2_i32_122 : i32
      %400 = arith.index_cast %399 : i32 to index
      %401 = memref.load %arg2[%400] : memref<48xi32, #tpu.memory_space<smem>>
      %402 = arith.index_cast %401 : i32 to index
      %c0_123 = arith.constant 0 : index
      %403 = vector.load %arg3[%402, %c0_123] : memref<128x128xf32, #tpu.memory_space<vmem>>, vector<1x128xf32>
      %404 = arith.mulf %403, %403 : vector<1x128xf32>
      %405 = vector.shape_cast %404 : vector<1x128xf32> to vector<1x1x128xf32>
      %cst_124 = arith.constant dense<0.000000e+00> : vector<1xf32>
      %406 = vector.multi_reduction <add>, %405, %cst_124 [1, 2] : vector<1x1x128xf32> to vector<1xf32>
      %407 = vector.shape_cast %406 : vector<1xf32> to vector<1x1x1xf32>
      %408 = vector.extract %407[0, 0, 0] : f32 from vector<1x1x1xf32>
      %409 = math.sqrt %408 : f32
      %410 = arith.cmpf ogt, %409, %cst_8 : f32
      %cst_125 = arith.constant 1.000000e-07 : f32
      %411 = arith.addf %409, %cst_125 : f32
      %412 = arith.divf %cst_8, %411 : f32
      %cst_126 = arith.constant 1.000000e+00 : f32
      %413 = arith.select %410, %412, %cst_126 : f32
      %414 = vector.broadcast %413 : f32 to vector<1x128xf32>
      %415 = arith.mulf %403, %414 : vector<1x128xf32>
      %416 = arith.addf %398, %415 : vector<1x128xf32>
      %c3_i32_127 = arith.constant 3 : i32
      %417 = arith.addi %361, %c3_i32_127 : i32
      %418 = arith.index_cast %417 : i32 to index
      %419 = memref.load %arg2[%418] : memref<48xi32, #tpu.memory_space<smem>>
      %420 = arith.index_cast %419 : i32 to index
      %c0_128 = arith.constant 0 : index
      %421 = vector.load %arg3[%420, %c0_128] : memref<128x128xf32, #tpu.memory_space<vmem>>, vector<1x128xf32>
      %422 = arith.mulf %421, %421 : vector<1x128xf32>
      %423 = vector.shape_cast %422 : vector<1x128xf32> to vector<1x1x128xf32>
      %cst_129 = arith.constant dense<0.000000e+00> : vector<1xf32>
      %424 = vector.multi_reduction <add>, %423, %cst_129 [1, 2] : vector<1x1x128xf32> to vector<1xf32>
      %425 = vector.shape_cast %424 : vector<1xf32> to vector<1x1x1xf32>
      %426 = vector.extract %425[0, 0, 0] : f32 from vector<1x1x1xf32>
      %427 = math.sqrt %426 : f32
      %428 = arith.cmpf ogt, %427, %cst_8 : f32
      %cst_130 = arith.constant 1.000000e-07 : f32
      %429 = arith.addf %427, %cst_130 : f32
      %430 = arith.divf %cst_8, %429 : f32
      %cst_131 = arith.constant 1.000000e+00 : f32
      %431 = arith.select %428, %430, %cst_131 : f32
      %432 = vector.broadcast %431 : f32 to vector<1x128xf32>
      %433 = arith.mulf %421, %432 : vector<1x128xf32>
      %434 = arith.addf %416, %433 : vector<1x128xf32>
      %c4_i32_132 = arith.constant 4 : i32
      %435 = arith.addi %361, %c4_i32_132 : i32
      %436 = arith.index_cast %435 : i32 to index
      %437 = memref.load %arg2[%436] : memref<48xi32, #tpu.memory_space<smem>>
      %438 = arith.index_cast %437 : i32 to index
      %c0_133 = arith.constant 0 : index
      %439 = vector.load %arg3[%438, %c0_133] : memref<128x128xf32, #tpu.memory_space<vmem>>, vector<1x128xf32>
      %440 = arith.mulf %439, %439 : vector<1x128xf32>
      %441 = vector.shape_cast %440 : vector<1x128xf32> to vector<1x1x128xf32>
      %cst_134 = arith.constant dense<0.000000e+00> : vector<1xf32>
      %442 = vector.multi_reduction <add>, %441, %cst_134 [1, 2] : vector<1x1x128xf32> to vector<1xf32>
      %443 = vector.shape_cast %442 : vector<1xf32> to vector<1x1x1xf32>
      %444 = vector.extract %443[0, 0, 0] : f32 from vector<1x1x1xf32>
      %445 = math.sqrt %444 : f32
      %446 = arith.cmpf ogt, %445, %cst_8 : f32
      %cst_135 = arith.constant 1.000000e-07 : f32
      %447 = arith.addf %445, %cst_135 : f32
      %448 = arith.divf %cst_8, %447 : f32
      %cst_136 = arith.constant 1.000000e+00 : f32
      %449 = arith.select %446, %448, %cst_136 : f32
      %450 = vector.broadcast %449 : f32 to vector<1x128xf32>
      %451 = arith.mulf %439, %450 : vector<1x128xf32>
      %452 = arith.addf %434, %451 : vector<1x128xf32>
      %c5_i32_137 = arith.constant 5 : i32
      %453 = arith.addi %361, %c5_i32_137 : i32
      %454 = arith.index_cast %453 : i32 to index
      %455 = memref.load %arg2[%454] : memref<48xi32, #tpu.memory_space<smem>>
      %456 = arith.index_cast %455 : i32 to index
      %c0_138 = arith.constant 0 : index
      %457 = vector.load %arg3[%456, %c0_138] : memref<128x128xf32, #tpu.memory_space<vmem>>, vector<1x128xf32>
      %458 = arith.mulf %457, %457 : vector<1x128xf32>
      %459 = vector.shape_cast %458 : vector<1x128xf32> to vector<1x1x128xf32>
      %cst_139 = arith.constant dense<0.000000e+00> : vector<1xf32>
      %460 = vector.multi_reduction <add>, %459, %cst_139 [1, 2] : vector<1x1x128xf32> to vector<1xf32>
      %461 = vector.shape_cast %460 : vector<1xf32> to vector<1x1x1xf32>
      %462 = vector.extract %461[0, 0, 0] : f32 from vector<1x1x1xf32>
      %463 = math.sqrt %462 : f32
      %464 = arith.cmpf ogt, %463, %cst_8 : f32
      %cst_140 = arith.constant 1.000000e-07 : f32
      %465 = arith.addf %463, %cst_140 : f32
      %466 = arith.divf %cst_8, %465 : f32
      %cst_141 = arith.constant 1.000000e+00 : f32
      %467 = arith.select %464, %466, %cst_141 : f32
      %468 = vector.broadcast %467 : f32 to vector<1x128xf32>
      %469 = arith.mulf %457, %468 : vector<1x128xf32>
      %470 = arith.addf %452, %469 : vector<1x128xf32>
      %471 = vector.broadcast %cst_9 : f32 to vector<1x128xf32>
      %472 = arith.mulf %470, %471 : vector<1x128xf32>
      %473 = arith.index_cast %c3_i32_108 : i32 to index
      %c0_142 = arith.constant 0 : index
      %474 = vector.load %arg7[%473, %c0_142] : memref<8x128xf32, #tpu.memory_space<vmem>>, vector<1x128xf32>
      tpu.vector_store %arg7[%473, %c0_142], %472 {strides = array<i32>} : memref<8x128xf32, #tpu.memory_space<vmem>>, vector<1x128xf32>,
      %c4_i32_143 = arith.constant 4 : i32
      %c8_i32_144 = arith.constant 8 : i32
      %475 = arith.muli %arg0, %c8_i32_144 : i32
      %476 = arith.addi %475, %c4_i32_143 : i32
      %c6_i32_145 = arith.constant 6 : i32
      %477 = arith.muli %476, %c6_i32_145 : i32
      %cst_146 = arith.constant 0.000000e+00 : f32
      %478 = vector.broadcast %cst_146 : f32 to vector<1x128xf32>
      %c0_i32_147 = arith.constant 0 : i32
      %479 = arith.addi %477, %c0_i32_147 : i32
      %480 = arith.index_cast %479 : i32 to index
      %481 = memref.load %arg2[%480] : memref<48xi32, #tpu.memory_space<smem>>
      %482 = arith.index_cast %481 : i32 to index
      %c0_148 = arith.constant 0 : index
      %483 = vector.load %arg3[%482, %c0_148] : memref<128x128xf32, #tpu.memory_space<vmem>>, vector<1x128xf32>
      %484 = arith.mulf %483, %483 : vector<1x128xf32>
      %485 = vector.shape_cast %484 : vector<1x128xf32> to vector<1x1x128xf32>
      %cst_149 = arith.constant dense<0.000000e+00> : vector<1xf32>
      %486 = vector.multi_reduction <add>, %485, %cst_149 [1, 2] : vector<1x1x128xf32> to vector<1xf32>
      %487 = vector.shape_cast %486 : vector<1xf32> to vector<1x1x1xf32>
      %488 = vector.extract %487[0, 0, 0] : f32 from vector<1x1x1xf32>
      %489 = math.sqrt %488 : f32
      %490 = arith.cmpf ogt, %489, %cst_8 : f32
      %cst_150 = arith.constant 1.000000e-07 : f32
      %491 = arith.addf %489, %cst_150 : f32
      %492 = arith.divf %cst_8, %491 : f32
      %cst_151 = arith.constant 1.000000e+00 : f32
      %493 = arith.select %490, %492, %cst_151 : f32
      %494 = vector.broadcast %493 : f32 to vector<1x128xf32>
      %495 = arith.mulf %483, %494 : vector<1x128xf32>
      %496 = arith.addf %478, %495 : vector<1x128xf32>
      %c1_i32_152 = arith.constant 1 : i32
      %497 = arith.addi %477, %c1_i32_152 : i32
      %498 = arith.index_cast %497 : i32 to index
      %499 = memref.load %arg2[%498] : memref<48xi32, #tpu.memory_space<smem>>
      %500 = arith.index_cast %499 : i32 to index
      %c0_153 = arith.constant 0 : index
      %501 = vector.load %arg3[%500, %c0_153] : memref<128x128xf32, #tpu.memory_space<vmem>>, vector<1x128xf32>
      %502 = arith.mulf %501, %501 : vector<1x128xf32>
      %503 = vector.shape_cast %502 : vector<1x128xf32> to vector<1x1x128xf32>
      %cst_154 = arith.constant dense<0.000000e+00> : vector<1xf32>
      %504 = vector.multi_reduction <add>, %503, %cst_154 [1, 2] : vector<1x1x128xf32> to vector<1xf32>
      %505 = vector.shape_cast %504 : vector<1xf32> to vector<1x1x1xf32>
      %506 = vector.extract %505[0, 0, 0] : f32 from vector<1x1x1xf32>
      %507 = math.sqrt %506 : f32
      %508 = arith.cmpf ogt, %507, %cst_8 : f32
      %cst_155 = arith.constant 1.000000e-07 : f32
      %509 = arith.addf %507, %cst_155 : f32
      %510 = arith.divf %cst_8, %509 : f32
      %cst_156 = arith.constant 1.000000e+00 : f32
      %511 = arith.select %508, %510, %cst_156 : f32
      %512 = vector.broadcast %511 : f32 to vector<1x128xf32>
      %513 = arith.mulf %501, %512 : vector<1x128xf32>
      %514 = arith.addf %496, %513 : vector<1x128xf32>
      %c2_i32_157 = arith.constant 2 : i32
      %515 = arith.addi %477, %c2_i32_157 : i32
      %516 = arith.index_cast %515 : i32 to index
      %517 = memref.load %arg2[%516] : memref<48xi32, #tpu.memory_space<smem>>
      %518 = arith.index_cast %517 : i32 to index
      %c0_158 = arith.constant 0 : index
      %519 = vector.load %arg3[%518, %c0_158] : memref<128x128xf32, #tpu.memory_space<vmem>>, vector<1x128xf32>
      %520 = arith.mulf %519, %519 : vector<1x128xf32>
      %521 = vector.shape_cast %520 : vector<1x128xf32> to vector<1x1x128xf32>
      %cst_159 = arith.constant dense<0.000000e+00> : vector<1xf32>
      %522 = vector.multi_reduction <add>, %521, %cst_159 [1, 2] : vector<1x1x128xf32> to vector<1xf32>
      %523 = vector.shape_cast %522 : vector<1xf32> to vector<1x1x1xf32>
      %524 = vector.extract %523[0, 0, 0] : f32 from vector<1x1x1xf32>
      %525 = math.sqrt %524 : f32
      %526 = arith.cmpf ogt, %525, %cst_8 : f32
      %cst_160 = arith.constant 1.000000e-07 : f32
      %527 = arith.addf %525, %cst_160 : f32
      %528 = arith.divf %cst_8, %527 : f32
      %cst_161 = arith.constant 1.000000e+00 : f32
      %529 = arith.select %526, %528, %cst_161 : f32
      %530 = vector.broadcast %529 : f32 to vector<1x128xf32>
      %531 = arith.mulf %519, %530 : vector<1x128xf32>
      %532 = arith.addf %514, %531 : vector<1x128xf32>
      %c3_i32_162 = arith.constant 3 : i32
      %533 = arith.addi %477, %c3_i32_162 : i32
      %534 = arith.index_cast %533 : i32 to index
      %535 = memref.load %arg2[%534] : memref<48xi32, #tpu.memory_space<smem>>
      %536 = arith.index_cast %535 : i32 to index
      %c0_163 = arith.constant 0 : index
      %537 = vector.load %arg3[%536, %c0_163] : memref<128x128xf32, #tpu.memory_space<vmem>>, vector<1x128xf32>
      %538 = arith.mulf %537, %537 : vector<1x128xf32>
      %539 = vector.shape_cast %538 : vector<1x128xf32> to vector<1x1x128xf32>
      %cst_164 = arith.constant dense<0.000000e+00> : vector<1xf32>
      %540 = vector.multi_reduction <add>, %539, %cst_164 [1, 2] : vector<1x1x128xf32> to vector<1xf32>
      %541 = vector.shape_cast %540 : vector<1xf32> to vector<1x1x1xf32>
      %542 = vector.extract %541[0, 0, 0] : f32 from vector<1x1x1xf32>
      %543 = math.sqrt %542 : f32
      %544 = arith.cmpf ogt, %543, %cst_8 : f32
      %cst_165 = arith.constant 1.000000e-07 : f32
      %545 = arith.addf %543, %cst_165 : f32
      %546 = arith.divf %cst_8, %545 : f32
      %cst_166 = arith.constant 1.000000e+00 : f32
      %547 = arith.select %544, %546, %cst_166 : f32
      %548 = vector.broadcast %547 : f32 to vector<1x128xf32>
      %549 = arith.mulf %537, %548 : vector<1x128xf32>
      %550 = arith.addf %532, %549 : vector<1x128xf32>
      %c4_i32_167 = arith.constant 4 : i32
      %551 = arith.addi %477, %c4_i32_167 : i32
      %552 = arith.index_cast %551 : i32 to index
      %553 = memref.load %arg2[%552] : memref<48xi32, #tpu.memory_space<smem>>
      %554 = arith.index_cast %553 : i32 to index
      %c0_168 = arith.constant 0 : index
      %555 = vector.load %arg3[%554, %c0_168] : memref<128x128xf32, #tpu.memory_space<vmem>>, vector<1x128xf32>
      %556 = arith.mulf %555, %555 : vector<1x128xf32>
      %557 = vector.shape_cast %556 : vector<1x128xf32> to vector<1x1x128xf32>
      %cst_169 = arith.constant dense<0.000000e+00> : vector<1xf32>
      %558 = vector.multi_reduction <add>, %557, %cst_169 [1, 2] : vector<1x1x128xf32> to vector<1xf32>
      %559 = vector.shape_cast %558 : vector<1xf32> to vector<1x1x1xf32>
      %560 = vector.extract %559[0, 0, 0] : f32 from vector<1x1x1xf32>
      %561 = math.sqrt %560 : f32
      %562 = arith.cmpf ogt, %561, %cst_8 : f32
      %cst_170 = arith.constant 1.000000e-07 : f32
      %563 = arith.addf %561, %cst_170 : f32
      %564 = arith.divf %cst_8, %563 : f32
      %cst_171 = arith.constant 1.000000e+00 : f32
      %565 = arith.select %562, %564, %cst_171 : f32
      %566 = vector.broadcast %565 : f32 to vector<1x128xf32>
      %567 = arith.mulf %555, %566 : vector<1x128xf32>
      %568 = arith.addf %550, %567 : vector<1x128xf32>
      %c5_i32_172 = arith.constant 5 : i32
      %569 = arith.addi %477, %c5_i32_172 : i32
      %570 = arith.index_cast %569 : i32 to index
      %571 = memref.load %arg2[%570] : memref<48xi32, #tpu.memory_space<smem>>
      %572 = arith.index_cast %571 : i32 to index
      %c0_173 = arith.constant 0 : index
      %573 = vector.load %arg3[%572, %c0_173] : memref<128x128xf32, #tpu.memory_space<vmem>>, vector<1x128xf32>
      %574 = arith.mulf %573, %573 : vector<1x128xf32>
      %575 = vector.shape_cast %574 : vector<1x128xf32> to vector<1x1x128xf32>
      %cst_174 = arith.constant dense<0.000000e+00> : vector<1xf32>
      %576 = vector.multi_reduction <add>, %575, %cst_174 [1, 2] : vector<1x1x128xf32> to vector<1xf32>
      %577 = vector.shape_cast %576 : vector<1xf32> to vector<1x1x1xf32>
      %578 = vector.extract %577[0, 0, 0] : f32 from vector<1x1x1xf32>
      %579 = math.sqrt %578 : f32
      %580 = arith.cmpf ogt, %579, %cst_8 : f32
      %cst_175 = arith.constant 1.000000e-07 : f32
      %581 = arith.addf %579, %cst_175 : f32
      %582 = arith.divf %cst_8, %581 : f32
      %cst_176 = arith.constant 1.000000e+00 : f32
      %583 = arith.select %580, %582, %cst_176 : f32
      %584 = vector.broadcast %583 : f32 to vector<1x128xf32>
      %585 = arith.mulf %573, %584 : vector<1x128xf32>
      %586 = arith.addf %568, %585 : vector<1x128xf32>
      %587 = vector.broadcast %cst_9 : f32 to vector<1x128xf32>
      %588 = arith.mulf %586, %587 : vector<1x128xf32>
      %589 = arith.index_cast %c4_i32_143 : i32 to index
      %c0_177 = arith.constant 0 : index
      %590 = vector.load %arg7[%589, %c0_177] : memref<8x128xf32, #tpu.memory_space<vmem>>, vector<1x128xf32>
      tpu.vector_store %arg7[%589, %c0_177], %588 {strides = array<i32>} : memref<8x128xf32, #tpu.memory_space<vmem>>, vector<1x128xf32>,
      %c5_i32_178 = arith.constant 5 : i32
      %c8_i32_179 = arith.constant 8 : i32
      %591 = arith.muli %arg0, %c8_i32_179 : i32
      %592 = arith.addi %591, %c5_i32_178 : i32
      %c6_i32_180 = arith.constant 6 : i32
      %593 = arith.muli %592, %c6_i32_180 : i32
      %cst_181 = arith.constant 0.000000e+00 : f32
      %594 = vector.broadcast %cst_181 : f32 to vector<1x128xf32>
      %c0_i32_182 = arith.constant 0 : i32
      %595 = arith.addi %593, %c0_i32_182 : i32
      %596 = arith.index_cast %595 : i32 to index
      %597 = memref.load %arg2[%596] : memref<48xi32, #tpu.memory_space<smem>>
      %598 = arith.index_cast %597 : i32 to index
      %c0_183 = arith.constant 0 : index
      %599 = vector.load %arg3[%598, %c0_183] : memref<128x128xf32, #tpu.memory_space<vmem>>, vector<1x128xf32>
      %600 = arith.mulf %599, %599 : vector<1x128xf32>
      %601 = vector.shape_cast %600 : vector<1x128xf32> to vector<1x1x128xf32>
      %cst_184 = arith.constant dense<0.000000e+00> : vector<1xf32>
      %602 = vector.multi_reduction <add>, %601, %cst_184 [1, 2] : vector<1x1x128xf32> to vector<1xf32>
      %603 = vector.shape_cast %602 : vector<1xf32> to vector<1x1x1xf32>
      %604 = vector.extract %603[0, 0, 0] : f32 from vector<1x1x1xf32>
      %605 = math.sqrt %604 : f32
      %606 = arith.cmpf ogt, %605, %cst_8 : f32
      %cst_185 = arith.constant 1.000000e-07 : f32
      %607 = arith.addf %605, %cst_185 : f32
      %608 = arith.divf %cst_8, %607 : f32
      %cst_186 = arith.constant 1.000000e+00 : f32
      %609 = arith.select %606, %608, %cst_186 : f32
      %610 = vector.broadcast %609 : f32 to vector<1x128xf32>
      %611 = arith.mulf %599, %610 : vector<1x128xf32>
      %612 = arith.addf %594, %611 : vector<1x128xf32>
      %c1_i32_187 = arith.constant 1 : i32
      %613 = arith.addi %593, %c1_i32_187 : i32
      %614 = arith.index_cast %613 : i32 to index
      %615 = memref.load %arg2[%614] : memref<48xi32, #tpu.memory_space<smem>>
      %616 = arith.index_cast %615 : i32 to index
      %c0_188 = arith.constant 0 : index
      %617 = vector.load %arg3[%616, %c0_188] : memref<128x128xf32, #tpu.memory_space<vmem>>, vector<1x128xf32>
      %618 = arith.mulf %617, %617 : vector<1x128xf32>
      %619 = vector.shape_cast %618 : vector<1x128xf32> to vector<1x1x128xf32>
      %cst_189 = arith.constant dense<0.000000e+00> : vector<1xf32>
      %620 = vector.multi_reduction <add>, %619, %cst_189 [1, 2] : vector<1x1x128xf32> to vector<1xf32>
      %621 = vector.shape_cast %620 : vector<1xf32> to vector<1x1x1xf32>
      %622 = vector.extract %621[0, 0, 0] : f32 from vector<1x1x1xf32>
      %623 = math.sqrt %622 : f32
      %624 = arith.cmpf ogt, %623, %cst_8 : f32
      %cst_190 = arith.constant 1.000000e-07 : f32
      %625 = arith.addf %623, %cst_190 : f32
      %626 = arith.divf %cst_8, %625 : f32
      %cst_191 = arith.constant 1.000000e+00 : f32
      %627 = arith.select %624, %626, %cst_191 : f32
      %628 = vector.broadcast %627 : f32 to vector<1x128xf32>
      %629 = arith.mulf %617, %628 : vector<1x128xf32>
      %630 = arith.addf %612, %629 : vector<1x128xf32>
      %c2_i32_192 = arith.constant 2 : i32
      %631 = arith.addi %593, %c2_i32_192 : i32
      %632 = arith.index_cast %631 : i32 to index
      %633 = memref.load %arg2[%632] : memref<48xi32, #tpu.memory_space<smem>>
      %634 = arith.index_cast %633 : i32 to index
      %c0_193 = arith.constant 0 : index
      %635 = vector.load %arg3[%634, %c0_193] : memref<128x128xf32, #tpu.memory_space<vmem>>, vector<1x128xf32>
      %636 = arith.mulf %635, %635 : vector<1x128xf32>
      %637 = vector.shape_cast %636 : vector<1x128xf32> to vector<1x1x128xf32>
      %cst_194 = arith.constant dense<0.000000e+00> : vector<1xf32>
      %638 = vector.multi_reduction <add>, %637, %cst_194 [1, 2] : vector<1x1x128xf32> to vector<1xf32>
      %639 = vector.shape_cast %638 : vector<1xf32> to vector<1x1x1xf32>
      %640 = vector.extract %639[0, 0, 0] : f32 from vector<1x1x1xf32>
      %641 = math.sqrt %640 : f32
      %642 = arith.cmpf ogt, %641, %cst_8 : f32
      %cst_195 = arith.constant 1.000000e-07 : f32
      %643 = arith.addf %641, %cst_195 : f32
      %644 = arith.divf %cst_8, %643 : f32
      %cst_196 = arith.constant 1.000000e+00 : f32
      %645 = arith.select %642, %644, %cst_196 : f32
      %646 = vector.broadcast %645 : f32 to vector<1x128xf32>
      %647 = arith.mulf %635, %646 : vector<1x128xf32>
      %648 = arith.addf %630, %647 : vector<1x128xf32>
      %c3_i32_197 = arith.constant 3 : i32
      %649 = arith.addi %593, %c3_i32_197 : i32
      %650 = arith.index_cast %649 : i32 to index
      %651 = memref.load %arg2[%650] : memref<48xi32, #tpu.memory_space<smem>>
      %652 = arith.index_cast %651 : i32 to index
      %c0_198 = arith.constant 0 : index
      %653 = vector.load %arg3[%652, %c0_198] : memref<128x128xf32, #tpu.memory_space<vmem>>, vector<1x128xf32>
      %654 = arith.mulf %653, %653 : vector<1x128xf32>
      %655 = vector.shape_cast %654 : vector<1x128xf32> to vector<1x1x128xf32>
      %cst_199 = arith.constant dense<0.000000e+00> : vector<1xf32>
      %656 = vector.multi_reduction <add>, %655, %cst_199 [1, 2] : vector<1x1x128xf32> to vector<1xf32>
      %657 = vector.shape_cast %656 : vector<1xf32> to vector<1x1x1xf32>
      %658 = vector.extract %657[0, 0, 0] : f32 from vector<1x1x1xf32>
      %659 = math.sqrt %658 : f32
      %660 = arith.cmpf ogt, %659, %cst_8 : f32
      %cst_200 = arith.constant 1.000000e-07 : f32
      %661 = arith.addf %659, %cst_200 : f32
      %662 = arith.divf %cst_8, %661 : f32
      %cst_201 = arith.constant 1.000000e+00 : f32
      %663 = arith.select %660, %662, %cst_201 : f32
      %664 = vector.broadcast %663 : f32 to vector<1x128xf32>
      %665 = arith.mulf %653, %664 : vector<1x128xf32>
      %666 = arith.addf %648, %665 : vector<1x128xf32>
      %c4_i32_202 = arith.constant 4 : i32
      %667 = arith.addi %593, %c4_i32_202 : i32
      %668 = arith.index_cast %667 : i32 to index
      %669 = memref.load %arg2[%668] : memref<48xi32, #tpu.memory_space<smem>>
      %670 = arith.index_cast %669 : i32 to index
      %c0_203 = arith.constant 0 : index
      %671 = vector.load %arg3[%670, %c0_203] : memref<128x128xf32, #tpu.memory_space<vmem>>, vector<1x128xf32>
      %672 = arith.mulf %671, %671 : vector<1x128xf32>
      %673 = vector.shape_cast %672 : vector<1x128xf32> to vector<1x1x128xf32>
      %cst_204 = arith.constant dense<0.000000e+00> : vector<1xf32>
      %674 = vector.multi_reduction <add>, %673, %cst_204 [1, 2] : vector<1x1x128xf32> to vector<1xf32>
      %675 = vector.shape_cast %674 : vector<1xf32> to vector<1x1x1xf32>
      %676 = vector.extract %675[0, 0, 0] : f32 from vector<1x1x1xf32>
      %677 = math.sqrt %676 : f32
      %678 = arith.cmpf ogt, %677, %cst_8 : f32
      %cst_205 = arith.constant 1.000000e-07 : f32
      %679 = arith.addf %677, %cst_205 : f32
      %680 = arith.divf %cst_8, %679 : f32
      %cst_206 = arith.constant 1.000000e+00 : f32
      %681 = arith.select %678, %680, %cst_206 : f32
      %682 = vector.broadcast %681 : f32 to vector<1x128xf32>
      %683 = arith.mulf %671, %682 : vector<1x128xf32>
      %684 = arith.addf %666, %683 : vector<1x128xf32>
      %c5_i32_207 = arith.constant 5 : i32
      %685 = arith.addi %593, %c5_i32_207 : i32
      %686 = arith.index_cast %685 : i32 to index
      %687 = memref.load %arg2[%686] : memref<48xi32, #tpu.memory_space<smem>>
      %688 = arith.index_cast %687 : i32 to index
      %c0_208 = arith.constant 0 : index
      %689 = vector.load %arg3[%688, %c0_208] : memref<128x128xf32, #tpu.memory_space<vmem>>, vector<1x128xf32>
      %690 = arith.mulf %689, %689 : vector<1x128xf32>
      %691 = vector.shape_cast %690 : vector<1x128xf32> to vector<1x1x128xf32>
      %cst_209 = arith.constant dense<0.000000e+00> : vector<1xf32>
      %692 = vector.multi_reduction <add>, %691, %cst_209 [1, 2] : vector<1x1x128xf32> to vector<1xf32>
      %693 = vector.shape_cast %692 : vector<1xf32> to vector<1x1x1xf32>
      %694 = vector.extract %693[0, 0, 0] : f32 from vector<1x1x1xf32>
      %695 = math.sqrt %694 : f32
      %696 = arith.cmpf ogt, %695, %cst_8 : f32
      %cst_210 = arith.constant 1.000000e-07 : f32
      %697 = arith.addf %695, %cst_210 : f32
      %698 = arith.divf %cst_8, %697 : f32
      %cst_211 = arith.constant 1.000000e+00 : f32
      %699 = arith.select %696, %698, %cst_211 : f32
      %700 = vector.broadcast %699 : f32 to vector<1x128xf32>
      %701 = arith.mulf %689, %700 : vector<1x128xf32>
      %702 = arith.addf %684, %701 : vector<1x128xf32>
      %703 = vector.broadcast %cst_9 : f32 to vector<1x128xf32>
      %704 = arith.mulf %702, %703 : vector<1x128xf32>
      %705 = arith.index_cast %c5_i32_178 : i32 to index
      %c0_212 = arith.constant 0 : index
      %706 = vector.load %arg7[%705, %c0_212] : memref<8x128xf32, #tpu.memory_space<vmem>>, vector<1x128xf32>
      tpu.vector_store %arg7[%705, %c0_212], %704 {strides = array<i32>} : memref<8x128xf32, #tpu.memory_space<vmem>>, vector<1x128xf32>,
      %c6_i32_213 = arith.constant 6 : i32
      %c8_i32_214 = arith.constant 8 : i32
      %707 = arith.muli %arg0, %c8_i32_214 : i32
      %708 = arith.addi %707, %c6_i32_213 : i32
      %c6_i32_215 = arith.constant 6 : i32
      %709 = arith.muli %708, %c6_i32_215 : i32
      %cst_216 = arith.constant 0.000000e+00 : f32
      %710 = vector.broadcast %cst_216 : f32 to vector<1x128xf32>
      %c0_i32_217 = arith.constant 0 : i32
      %711 = arith.addi %709, %c0_i32_217 : i32
      %712 = arith.index_cast %711 : i32 to index
      %713 = memref.load %arg2[%712] : memref<48xi32, #tpu.memory_space<smem>>
      %714 = arith.index_cast %713 : i32 to index
      %c0_218 = arith.constant 0 : index
      %715 = vector.load %arg3[%714, %c0_218] : memref<128x128xf32, #tpu.memory_space<vmem>>, vector<1x128xf32>
      %716 = arith.mulf %715, %715 : vector<1x128xf32>
      %717 = vector.shape_cast %716 : vector<1x128xf32> to vector<1x1x128xf32>
      %cst_219 = arith.constant dense<0.000000e+00> : vector<1xf32>
      %718 = vector.multi_reduction <add>, %717, %cst_219 [1, 2] : vector<1x1x128xf32> to vector<1xf32>
      %719 = vector.shape_cast %718 : vector<1xf32> to vector<1x1x1xf32>
      %720 = vector.extract %719[0, 0, 0] : f32 from vector<1x1x1xf32>
      %721 = math.sqrt %720 : f32
      %722 = arith.cmpf ogt, %721, %cst_8 : f32
      %cst_220 = arith.constant 1.000000e-07 : f32
      %723 = arith.addf %721, %cst_220 : f32
      %724 = arith.divf %cst_8, %723 : f32
      %cst_221 = arith.constant 1.000000e+00 : f32
      %725 = arith.select %722, %724, %cst_221 : f32
      %726 = vector.broadcast %725 : f32 to vector<1x128xf32>
      %727 = arith.mulf %715, %726 : vector<1x128xf32>
      %728 = arith.addf %710, %727 : vector<1x128xf32>
      %c1_i32_222 = arith.constant 1 : i32
      %729 = arith.addi %709, %c1_i32_222 : i32
      %730 = arith.index_cast %729 : i32 to index
      %731 = memref.load %arg2[%730] : memref<48xi32, #tpu.memory_space<smem>>
      %732 = arith.index_cast %731 : i32 to index
      %c0_223 = arith.constant 0 : index
      %733 = vector.load %arg3[%732, %c0_223] : memref<128x128xf32, #tpu.memory_space<vmem>>, vector<1x128xf32>
      %734 = arith.mulf %733, %733 : vector<1x128xf32>
      %735 = vector.shape_cast %734 : vector<1x128xf32> to vector<1x1x128xf32>
      %cst_224 = arith.constant dense<0.000000e+00> : vector<1xf32>
      %736 = vector.multi_reduction <add>, %735, %cst_224 [1, 2] : vector<1x1x128xf32> to vector<1xf32>
      %737 = vector.shape_cast %736 : vector<1xf32> to vector<1x1x1xf32>
      %738 = vector.extract %737[0, 0, 0] : f32 from vector<1x1x1xf32>
      %739 = math.sqrt %738 : f32
      %740 = arith.cmpf ogt, %739, %cst_8 : f32
      %cst_225 = arith.constant 1.000000e-07 : f32
      %741 = arith.addf %739, %cst_225 : f32
      %742 = arith.divf %cst_8, %741 : f32
      %cst_226 = arith.constant 1.000000e+00 : f32
      %743 = arith.select %740, %742, %cst_226 : f32
      %744 = vector.broadcast %743 : f32 to vector<1x128xf32>
      %745 = arith.mulf %733, %744 : vector<1x128xf32>
      %746 = arith.addf %728, %745 : vector<1x128xf32>
      %c2_i32_227 = arith.constant 2 : i32
      %747 = arith.addi %709, %c2_i32_227 : i32
      %748 = arith.index_cast %747 : i32 to index
      %749 = memref.load %arg2[%748] : memref<48xi32, #tpu.memory_space<smem>>
      %750 = arith.index_cast %749 : i32 to index
      %c0_228 = arith.constant 0 : index
      %751 = vector.load %arg3[%750, %c0_228] : memref<128x128xf32, #tpu.memory_space<vmem>>, vector<1x128xf32>
      %752 = arith.mulf %751, %751 : vector<1x128xf32>
      %753 = vector.shape_cast %752 : vector<1x128xf32> to vector<1x1x128xf32>
      %cst_229 = arith.constant dense<0.000000e+00> : vector<1xf32>
      %754 = vector.multi_reduction <add>, %753, %cst_229 [1, 2] : vector<1x1x128xf32> to vector<1xf32>
      %755 = vector.shape_cast %754 : vector<1xf32> to vector<1x1x1xf32>
      %756 = vector.extract %755[0, 0, 0] : f32 from vector<1x1x1xf32>
      %757 = math.sqrt %756 : f32
      %758 = arith.cmpf ogt, %757, %cst_8 : f32
      %cst_230 = arith.constant 1.000000e-07 : f32
      %759 = arith.addf %757, %cst_230 : f32
      %760 = arith.divf %cst_8, %759 : f32
      %cst_231 = arith.constant 1.000000e+00 : f32
      %761 = arith.select %758, %760, %cst_231 : f32
      %762 = vector.broadcast %761 : f32 to vector<1x128xf32>
      %763 = arith.mulf %751, %762 : vector<1x128xf32>
      %764 = arith.addf %746, %763 : vector<1x128xf32>
      %c3_i32_232 = arith.constant 3 : i32
      %765 = arith.addi %709, %c3_i32_232 : i32
      %766 = arith.index_cast %765 : i32 to index
      %767 = memref.load %arg2[%766] : memref<48xi32, #tpu.memory_space<smem>>
      %768 = arith.index_cast %767 : i32 to index
      %c0_233 = arith.constant 0 : index
      %769 = vector.load %arg3[%768, %c0_233] : memref<128x128xf32, #tpu.memory_space<vmem>>, vector<1x128xf32>
      %770 = arith.mulf %769, %769 : vector<1x128xf32>
      %771 = vector.shape_cast %770 : vector<1x128xf32> to vector<1x1x128xf32>
      %cst_234 = arith.constant dense<0.000000e+00> : vector<1xf32>
      %772 = vector.multi_reduction <add>, %771, %cst_234 [1, 2] : vector<1x1x128xf32> to vector<1xf32>
      %773 = vector.shape_cast %772 : vector<1xf32> to vector<1x1x1xf32>
      %774 = vector.extract %773[0, 0, 0] : f32 from vector<1x1x1xf32>
      %775 = math.sqrt %774 : f32
      %776 = arith.cmpf ogt, %775, %cst_8 : f32
      %cst_235 = arith.constant 1.000000e-07 : f32
      %777 = arith.addf %775, %cst_235 : f32
      %778 = arith.divf %cst_8, %777 : f32
      %cst_236 = arith.constant 1.000000e+00 : f32
      %779 = arith.select %776, %778, %cst_236 : f32
      %780 = vector.broadcast %779 : f32 to vector<1x128xf32>
      %781 = arith.mulf %769, %780 : vector<1x128xf32>
      %782 = arith.addf %764, %781 : vector<1x128xf32>
      %c4_i32_237 = arith.constant 4 : i32
      %783 = arith.addi %709, %c4_i32_237 : i32
      %784 = arith.index_cast %783 : i32 to index
      %785 = memref.load %arg2[%784] : memref<48xi32, #tpu.memory_space<smem>>
      %786 = arith.index_cast %785 : i32 to index
      %c0_238 = arith.constant 0 : index
      %787 = vector.load %arg3[%786, %c0_238] : memref<128x128xf32, #tpu.memory_space<vmem>>, vector<1x128xf32>
      %788 = arith.mulf %787, %787 : vector<1x128xf32>
      %789 = vector.shape_cast %788 : vector<1x128xf32> to vector<1x1x128xf32>
      %cst_239 = arith.constant dense<0.000000e+00> : vector<1xf32>
      %790 = vector.multi_reduction <add>, %789, %cst_239 [1, 2] : vector<1x1x128xf32> to vector<1xf32>
      %791 = vector.shape_cast %790 : vector<1xf32> to vector<1x1x1xf32>
      %792 = vector.extract %791[0, 0, 0] : f32 from vector<1x1x1xf32>
      %793 = math.sqrt %792 : f32
      %794 = arith.cmpf ogt, %793, %cst_8 : f32
      %cst_240 = arith.constant 1.000000e-07 : f32
      %795 = arith.addf %793, %cst_240 : f32
      %796 = arith.divf %cst_8, %795 : f32
      %cst_241 = arith.constant 1.000000e+00 : f32
      %797 = arith.select %794, %796, %cst_241 : f32
      %798 = vector.broadcast %797 : f32 to vector<1x128xf32>
      %799 = arith.mulf %787, %798 : vector<1x128xf32>
      %800 = arith.addf %782, %799 : vector<1x128xf32>
      %c5_i32_242 = arith.constant 5 : i32
      %801 = arith.addi %709, %c5_i32_242 : i32
      %802 = arith.index_cast %801 : i32 to index
      %803 = memref.load %arg2[%802] : memref<48xi32, #tpu.memory_space<smem>>
      %804 = arith.index_cast %803 : i32 to index
      %c0_243 = arith.constant 0 : index
      %805 = vector.load %arg3[%804, %c0_243] : memref<128x128xf32, #tpu.memory_space<vmem>>, vector<1x128xf32>
      %806 = arith.mulf %805, %805 : vector<1x128xf32>
      %807 = vector.shape_cast %806 : vector<1x128xf32> to vector<1x1x128xf32>
      %cst_244 = arith.constant dense<0.000000e+00> : vector<1xf32>
      %808 = vector.multi_reduction <add>, %807, %cst_244 [1, 2] : vector<1x1x128xf32> to vector<1xf32>
      %809 = vector.shape_cast %808 : vector<1xf32> to vector<1x1x1xf32>
      %810 = vector.extract %809[0, 0, 0] : f32 from vector<1x1x1xf32>
      %811 = math.sqrt %810 : f32
      %812 = arith.cmpf ogt, %811, %cst_8 : f32
      %cst_245 = arith.constant 1.000000e-07 : f32
      %813 = arith.addf %811, %cst_245 : f32
      %814 = arith.divf %cst_8, %813 : f32
      %cst_246 = arith.constant 1.000000e+00 : f32
      %815 = arith.select %812, %814, %cst_246 : f32
      %816 = vector.broadcast %815 : f32 to vector<1x128xf32>
      %817 = arith.mulf %805, %816 : vector<1x128xf32>
      %818 = arith.addf %800, %817 : vector<1x128xf32>
      %819 = vector.broadcast %cst_9 : f32 to vector<1x128xf32>
      %820 = arith.mulf %818, %819 : vector<1x128xf32>
      %821 = arith.index_cast %c6_i32_213 : i32 to index
      %c0_247 = arith.constant 0 : index
      %822 = vector.load %arg7[%821, %c0_247] : memref<8x128xf32, #tpu.memory_space<vmem>>, vector<1x128xf32>
      tpu.vector_store %arg7[%821, %c0_247], %820 {strides = array<i32>} : memref<8x128xf32, #tpu.memory_space<vmem>>, vector<1x128xf32>,
      %c7_i32 = arith.constant 7 : i32
      %c8_i32_248 = arith.constant 8 : i32
      %823 = arith.muli %arg0, %c8_i32_248 : i32
      %824 = arith.addi %823, %c7_i32 : i32
      %c6_i32_249 = arith.constant 6 : i32
      %825 = arith.muli %824, %c6_i32_249 : i32
      %cst_250 = arith.constant 0.000000e+00 : f32
      %826 = vector.broadcast %cst_250 : f32 to vector<1x128xf32>
      %c0_i32_251 = arith.constant 0 : i32
      %827 = arith.addi %825, %c0_i32_251 : i32
      %828 = arith.index_cast %827 : i32 to index
      %829 = memref.load %arg2[%828] : memref<48xi32, #tpu.memory_space<smem>>
      %830 = arith.index_cast %829 : i32 to index
      %c0_252 = arith.constant 0 : index
      %831 = vector.load %arg3[%830, %c0_252] : memref<128x128xf32, #tpu.memory_space<vmem>>, vector<1x128xf32>
      %832 = arith.mulf %831, %831 : vector<1x128xf32>
      %833 = vector.shape_cast %832 : vector<1x128xf32> to vector<1x1x128xf32>
      %cst_253 = arith.constant dense<0.000000e+00> : vector<1xf32>
      %834 = vector.multi_reduction <add>, %833, %cst_253 [1, 2] : vector<1x1x128xf32> to vector<1xf32>
      %835 = vector.shape_cast %834 : vector<1xf32> to vector<1x1x1xf32>
      %836 = vector.extract %835[0, 0, 0] : f32 from vector<1x1x1xf32>
      %837 = math.sqrt %836 : f32
      %838 = arith.cmpf ogt, %837, %cst_8 : f32
      %cst_254 = arith.constant 1.000000e-07 : f32
      %839 = arith.addf %837, %cst_254 : f32
      %840 = arith.divf %cst_8, %839 : f32
      %cst_255 = arith.constant 1.000000e+00 : f32
      %841 = arith.select %838, %840, %cst_255 : f32
      %842 = vector.broadcast %841 : f32 to vector<1x128xf32>
      %843 = arith.mulf %831, %842 : vector<1x128xf32>
      %844 = arith.addf %826, %843 : vector<1x128xf32>
      %c1_i32_256 = arith.constant 1 : i32
      %845 = arith.addi %825, %c1_i32_256 : i32
      %846 = arith.index_cast %845 : i32 to index
      %847 = memref.load %arg2[%846] : memref<48xi32, #tpu.memory_space<smem>>
      %848 = arith.index_cast %847 : i32 to index
      %c0_257 = arith.constant 0 : index
      %849 = vector.load %arg3[%848, %c0_257] : memref<128x128xf32, #tpu.memory_space<vmem>>, vector<1x128xf32>
      %850 = arith.mulf %849, %849 : vector<1x128xf32>
      %851 = vector.shape_cast %850 : vector<1x128xf32> to vector<1x1x128xf32>
      %cst_258 = arith.constant dense<0.000000e+00> : vector<1xf32>
      %852 = vector.multi_reduction <add>, %851, %cst_258 [1, 2] : vector<1x1x128xf32> to vector<1xf32>
      %853 = vector.shape_cast %852 : vector<1xf32> to vector<1x1x1xf32>
      %854 = vector.extract %853[0, 0, 0] : f32 from vector<1x1x1xf32>
      %855 = math.sqrt %854 : f32
      %856 = arith.cmpf ogt, %855, %cst_8 : f32
      %cst_259 = arith.constant 1.000000e-07 : f32
      %857 = arith.addf %855, %cst_259 : f32
      %858 = arith.divf %cst_8, %857 : f32
      %cst_260 = arith.constant 1.000000e+00 : f32
      %859 = arith.select %856, %858, %cst_260 : f32
      %860 = vector.broadcast %859 : f32 to vector<1x128xf32>
      %861 = arith.mulf %849, %860 : vector<1x128xf32>
      %862 = arith.addf %844, %861 : vector<1x128xf32>
      %c2_i32_261 = arith.constant 2 : i32
      %863 = arith.addi %825, %c2_i32_261 : i32
      %864 = arith.index_cast %863 : i32 to index
      %865 = memref.load %arg2[%864] : memref<48xi32, #tpu.memory_space<smem>>
      %866 = arith.index_cast %865 : i32 to index
      %c0_262 = arith.constant 0 : index
      %867 = vector.load %arg3[%866, %c0_262] : memref<128x128xf32, #tpu.memory_space<vmem>>, vector<1x128xf32>
      %868 = arith.mulf %867, %867 : vector<1x128xf32>
      %869 = vector.shape_cast %868 : vector<1x128xf32> to vector<1x1x128xf32>
      %cst_263 = arith.constant dense<0.000000e+00> : vector<1xf32>
      %870 = vector.multi_reduction <add>, %869, %cst_263 [1, 2] : vector<1x1x128xf32> to vector<1xf32>
      %871 = vector.shape_cast %870 : vector<1xf32> to vector<1x1x1xf32>
      %872 = vector.extract %871[0, 0, 0] : f32 from vector<1x1x1xf32>
      %873 = math.sqrt %872 : f32
      %874 = arith.cmpf ogt, %873, %cst_8 : f32
      %cst_264 = arith.constant 1.000000e-07 : f32
      %875 = arith.addf %873, %cst_264 : f32
      %876 = arith.divf %cst_8, %875 : f32
      %cst_265 = arith.constant 1.000000e+00 : f32
      %877 = arith.select %874, %876, %cst_265 : f32
      %878 = vector.broadcast %877 : f32 to vector<1x128xf32>
      %879 = arith.mulf %867, %878 : vector<1x128xf32>
      %880 = arith.addf %862, %879 : vector<1x128xf32>
      %c3_i32_266 = arith.constant 3 : i32
      %881 = arith.addi %825, %c3_i32_266 : i32
      %882 = arith.index_cast %881 : i32 to index
      %883 = memref.load %arg2[%882] : memref<48xi32, #tpu.memory_space<smem>>
      %884 = arith.index_cast %883 : i32 to index
      %c0_267 = arith.constant 0 : index
      %885 = vector.load %arg3[%884, %c0_267] : memref<128x128xf32, #tpu.memory_space<vmem>>, vector<1x128xf32>
      %886 = arith.mulf %885, %885 : vector<1x128xf32>
      %887 = vector.shape_cast %886 : vector<1x128xf32> to vector<1x1x128xf32>
      %cst_268 = arith.constant dense<0.000000e+00> : vector<1xf32>
      %888 = vector.multi_reduction <add>, %887, %cst_268 [1, 2] : vector<1x1x128xf32> to vector<1xf32>
      %889 = vector.shape_cast %888 : vector<1xf32> to vector<1x1x1xf32>
      %890 = vector.extract %889[0, 0, 0] : f32 from vector<1x1x1xf32>
      %891 = math.sqrt %890 : f32
      %892 = arith.cmpf ogt, %891, %cst_8 : f32
      %cst_269 = arith.constant 1.000000e-07 : f32
      %893 = arith.addf %891, %cst_269 : f32
      %894 = arith.divf %cst_8, %893 : f32
      %cst_270 = arith.constant 1.000000e+00 : f32
      %895 = arith.select %892, %894, %cst_270 : f32
      %896 = vector.broadcast %895 : f32 to vector<1x128xf32>
      %897 = arith.mulf %885, %896 : vector<1x128xf32>
      %898 = arith.addf %880, %897 : vector<1x128xf32>
      %c4_i32_271 = arith.constant 4 : i32
      %899 = arith.addi %825, %c4_i32_271 : i32
      %900 = arith.index_cast %899 : i32 to index
      %901 = memref.load %arg2[%900] : memref<48xi32, #tpu.memory_space<smem>>
      %902 = arith.index_cast %901 : i32 to index
      %c0_272 = arith.constant 0 : index
      %903 = vector.load %arg3[%902, %c0_272] : memref<128x128xf32, #tpu.memory_space<vmem>>, vector<1x128xf32>
      %904 = arith.mulf %903, %903 : vector<1x128xf32>
      %905 = vector.shape_cast %904 : vector<1x128xf32> to vector<1x1x128xf32>
      %cst_273 = arith.constant dense<0.000000e+00> : vector<1xf32>
      %906 = vector.multi_reduction <add>, %905, %cst_273 [1, 2] : vector<1x1x128xf32> to vector<1xf32>
      %907 = vector.shape_cast %906 : vector<1xf32> to vector<1x1x1xf32>
      %908 = vector.extract %907[0, 0, 0] : f32 from vector<1x1x1xf32>
      %909 = math.sqrt %908 : f32
      %910 = arith.cmpf ogt, %909, %cst_8 : f32
      %cst_274 = arith.constant 1.000000e-07 : f32
      %911 = arith.addf %909, %cst_274 : f32
      %912 = arith.divf %cst_8, %911 : f32
      %cst_275 = arith.constant 1.000000e+00 : f32
      %913 = arith.select %910, %912, %cst_275 : f32
      %914 = vector.broadcast %913 : f32 to vector<1x128xf32>
      %915 = arith.mulf %903, %914 : vector<1x128xf32>
      %916 = arith.addf %898, %915 : vector<1x128xf32>
      %c5_i32_276 = arith.constant 5 : i32
      %917 = arith.addi %825, %c5_i32_276 : i32
      %918 = arith.index_cast %917 : i32 to index
      %919 = memref.load %arg2[%918] : memref<48xi32, #tpu.memory_space<smem>>
      %920 = arith.index_cast %919 : i32 to index
      %c0_277 = arith.constant 0 : index
      %921 = vector.load %arg3[%920, %c0_277] : memref<128x128xf32, #tpu.memory_space<vmem>>, vector<1x128xf32>
      %922 = arith.mulf %921, %921 : vector<1x128xf32>
      %923 = vector.shape_cast %922 : vector<1x128xf32> to vector<1x1x128xf32>
      %cst_278 = arith.constant dense<0.000000e+00> : vector<1xf32>
      %924 = vector.multi_reduction <add>, %923, %cst_278 [1, 2] : vector<1x1x128xf32> to vector<1xf32>
      %925 = vector.shape_cast %924 : vector<1xf32> to vector<1x1x1xf32>
      %926 = vector.extract %925[0, 0, 0] : f32 from vector<1x1x1xf32>
      %927 = math.sqrt %926 : f32
      %928 = arith.cmpf ogt, %927, %cst_8 : f32
      %cst_279 = arith.constant 1.000000e-07 : f32
      %929 = arith.addf %927, %cst_279 : f32
      %930 = arith.divf %cst_8, %929 : f32
      %cst_280 = arith.constant 1.000000e+00 : f32
      %931 = arith.select %928, %930, %cst_280 : f32
      %932 = vector.broadcast %931 : f32 to vector<1x128xf32>
      %933 = arith.mulf %921, %932 : vector<1x128xf32>
      %934 = arith.addf %916, %933 : vector<1x128xf32>
      %935 = vector.broadcast %cst_9 : f32 to vector<1x128xf32>
      %936 = arith.mulf %934, %935 : vector<1x128xf32>
      %937 = arith.index_cast %c7_i32 : i32 to index
      %c0_281 = arith.constant 0 : index
      %938 = vector.load %arg7[%937, %c0_281] : memref<8x128xf32, #tpu.memory_space<vmem>>, vector<1x128xf32>
      tpu.vector_store %arg7[%937, %c0_281], %936 {strides = array<i32>} : memref<8x128xf32, #tpu.memory_space<vmem>>, vector<1x128xf32>,
      %c8_i32_282 = arith.constant 8 : i32
    } else {
    }
    %c0 = arith.constant 0 : index
    %c0_1 = arith.constant 0 : index
    %3 = vector.load %arg7[%c0, %c0_1] : memref<8x128xf32, #tpu.memory_space<vmem>>, vector<8x128xf32>
    %4 = arith.truncf %3 : vector<8x128xf32> to vector<8x128xbf16>
    %c0_2 = arith.constant 0 : index
    %c0_3 = arith.constant 0 : index
    %5 = vector.load %arg4[%c0_2, %c0_3] : memref<256x128xbf16, #tpu.memory_space<vmem>>, vector<256x128xbf16>
    %cst = arith.constant dense<0.000000e+00> : vector<8x256xf32>
    %6 = tpu.matmul %4, %5, %cst {dimension_numbers = #tpu.dot_dimension_numbers<[1], [1], [0], [0], [0, 0, 1, 0], [], []>} : vector<8x128xbf16>, vector<256x128xbf16>, vector<8x256xf32> -> vector<8x256xf32>
    %c0_4 = arith.constant 0 : index
    %c0_5 = arith.constant 0 : index
    %7 = vector.load %arg5[%c0_4, %c0_5] : memref<1x256xf32, #tpu.memory_space<vmem>>, vector<1x256xf32>
    %8 = vector.broadcast %7 : vector<1x256xf32> to vector<8x256xf32>
    %9 = arith.addf %6, %8 : vector<8x256xf32>
    %c0_6 = arith.constant 0 : index
    %c0_7 = arith.constant 0 : index
    %10 = vector.load %arg6[%c0_6, %c0_7] : memref<8x256xf32, #tpu.memory_space<vmem>>, vector<8x256xf32>
    tpu.vector_store %arg6[%c0_6, %c0_7], %9 {strides = array<i32>} : memref<8x256xf32, #tpu.memory_space<vmem>>, vector<8x256xf32>,
    return
  }
  func.func @transform_0(%arg0: i32, %arg1: i32, %arg2: memref<48xi32, #tpu.memory_space<smem>>) -> (i32, i32) {
    %c0_i32 = arith.constant 0 : i32
    %c0_i32_0 = arith.constant 0 : i32
    %c0_i32_1 = arith.constant 0 : i32
    return %c0_i32, %c0_i32_0 : i32, i32
  }
  func.func @transform_1(%arg0: i32, %arg1: i32, %arg2: memref<48xi32, #tpu.memory_space<smem>>) -> (i32, i32) {
    %c0_i32 = arith.constant 0 : i32
    %c0_i32_0 = arith.constant 0 : i32
    return %arg1, %c0_i32 : i32, i32
  }
  func.func @transform_2(%arg0: i32, %arg1: i32, %arg2: memref<48xi32, #tpu.memory_space<smem>>) -> (i32, i32) {
    %c0_i32 = arith.constant 0 : i32
    %c0_i32_0 = arith.constant 0 : i32
    return %c0_i32, %arg1 : i32, i32
  }
  func.func @transform_3(%arg0: i32, %arg1: i32, %arg2: memref<48xi32, #tpu.memory_space<smem>>) -> (i32, i32) {
    %c0_i32 = arith.constant 0 : i32
    return %arg0, %arg1 : i32, i32
  }
}

</mosaic_0001>

<llo_original>
// kernel: tpu_custom_call.1
$region0: #{tpu_custom_call.1}
  #allocation0 [shape = 'u32[]', space=smem, size = 0x4, offset = 0x4, fixed_abs, tag = 'smem constant byte address 0x4 - core index']
  #allocation1 [shape = 'u32[144,128]{1,0:T(1,128)}', space=vmem, size = 0x12000, scoped, tag = 'internal scratch']
  #allocation2 [shape = 'f32[8,128]{1,0:T(8,128)}', space=vmem, size = 0x1000, scoped, tag = 'scratch operand']
  #allocation3 [shape = 's32[1]{0}', space=sflag, size = 0x4, scoped, tag = 'scoped memory for tpu_custom_call.1']
  #allocation4 [shape = 'u8[512]{0}', space=smem, size = 0x200, scoped, tag = 'prefetched SMEM operand 0']
  %s0 = inlined_call_operand.hbm [shape: s32[48], index: 0, kind: input, shape index: {}]
  %s1 = inlined_call_operand.hbm [shape: f32[128,128], index: 1, kind: input, shape index: {}]
  %s2 = inlined_call_operand.hbm [shape: bf16[256,128], index: 2, kind: input, shape index: {}]
  %s3 = inlined_call_operand.vmem [shape: f32[1,256], index: 3, kind: input, shape index: {}]
  %s4 = inlined_call_operand.hbm [shape: f32[8,256], index: 4, kind: output, shape index: {}]
  %s5 = sld [smem:[#allocation0]]
  $region34: #{tpu_custom_call.1} parent=0
    _
  %s7 = ssub.s32 1, %s5
  %s8 = scalar_select 0, %s7, %s5
  %10 = dma.hbm_to_smem %s0, 16, [#allocation4], [#allocation3]
  %11 = dma.done [#allocation3], 16
  %12 = sfence
  $region1: #{tpu_custom_call.1} parent=0
    #allocation5 [shape = 'u8[65536]{0}', space=vmem, size = 0x10000, scoped, tag = 'input window, operand 1, single buffered']
    #allocation6 [shape = 's32[1]{0}', space=sflag, size = 0x4, scoped, tag = 'scoped memory for tpu_custom_call.1']
    #allocation7 [shape = 's32[1]{0}', space=sflag, size = 0x4, scoped, tag = 'scoped memory for tpu_custom_call.1']
    #allocation8 [shape = 'u8[65536]{0}', space=vmem, size = 0x10000, scoped, tag = 'input window, operand 2, single buffered']
    #allocation9 [shape = 's32[1]{0}', space=sflag, size = 0x4, scoped, tag = 'scoped memory for tpu_custom_call.1']
    #allocation10 [shape = 'u8[8192]{0}', space=vmem, size = 0x2000, scoped, tag = 'output window, operand 0, single buffered']
    %13 = vsyncpa [#allocation6], 0
    %14 = vsyncpa [#allocation9], 0
    %15 = vsyncpa [#allocation7], 0
    // Predicated region
    $region2: #{tpu_custom_call.1} parent=1 // pred_check
      _
    $region3: #{tpu_custom_call.1} parent=1 // pred_check_branch
      %17 = sbr.rel (0) target = $region5
    $region4: #{tpu_custom_call.1} parent=1 // pred_region
      %s19 = ssub.s32 2048, 2048
      %20 = vsyncadd [#allocation6], %s19
      %s21 = sshll.u32 [#allocation5], 4
      %s22 = int_to_ptr.vmem [resolvable:$true] %s21
      %27 = dma.hbm_to_vmem [thread:$0]  %s1, 2048, %s22, [#allocation6], 128, 128, 8
    $region5: #{tpu_custom_call.1} parent=1 // pred_fallthru
      _
    // Predicated region
    $region6: #{tpu_custom_call.1} parent=1 // pred_check
      _
    $region7: #{tpu_custom_call.1} parent=1 // pred_check_branch
      %29 = sbr.rel (0) target = $region9
    $region8: #{tpu_custom_call.1} parent=1 // pred_region
      %s31 = ssub.s32 2048, 2048
      %32 = vsyncadd [#allocation9], %s31
      %s33 = sshll.u32 [#allocation8], 4
      %s34 = int_to_ptr.vmem [resolvable:$true] %s33
      %39 = dma.hbm_to_vmem [thread:$0]  %s2, 2048, %s34, [#allocation9], 64, 64, 4
    $region9: #{tpu_custom_call.1} parent=1 // pred_fallthru
      _
    // Predicated region
    $region10: #{tpu_custom_call.1} parent=1 // pred_check
      _
    $region11: #{tpu_custom_call.1} parent=1 // pred_check_branch
      %41 = sbr.rel (0) target = $region13
    $region12: #{tpu_custom_call.1} parent=1 // pred_region
      _
    $region13: #{tpu_custom_call.1} parent=1 // pred_fallthru
      _
    // Predicated region
    $region14: #{tpu_custom_call.1} parent=1 // pred_check
      _
    $region15: #{tpu_custom_call.1} parent=1 // pred_check_branch
      %43 = sbr.rel (0) target = $region17
    $region16: #{tpu_custom_call.1} parent=1 // pred_region
      %44 = dma.done [#allocation6], 2048
    $region17: #{tpu_custom_call.1} parent=1 // pred_fallthru
      _
    // Predicated region
    $region18: #{tpu_custom_call.1} parent=1 // pred_check
      _
    $region19: #{tpu_custom_call.1} parent=1 // pred_check_branch
      %46 = sbr.rel (0) target = $region21
    $region20: #{tpu_custom_call.1} parent=1 // pred_region
      %47 = dma.done [#allocation9], 2048
    $region21: #{tpu_custom_call.1} parent=1 // pred_fallthru
      _
    %p49 = scmp.eq.s32.totalorder 0, 0
    // Predicated region
    $region22: #{tpu_custom_call.1} parent=1 // pred_check
      %p50 = pneg %p49
    $region23: #{tpu_custom_call.1} parent=1 // pred_check_branch
      %52 = sbr.rel (%p50) target = $region25
    $region24: #{tpu_custom_call.1} parent=1 // pred_region
      %s53 = smul.u32 0, 48
      %s54 = sld [smem:[#allocation4 + %s53]]
      %s55 = scalar_lea.vmem [#allocation5], %s54
      %v56 = vld [vmem:[%s55] sm:$0x1]
      %v57 = vmul.f32 %v56, %v56
      %vm58 = vcmask 1040384
      %v59 = vsel %vm58, %v57, 0.0
      %60 = vadd.xlane.f32.xlu0 %v59
      %v61 = vpop.xlane.xlu0 %60
      %v62 = vrot.slane %v61, 4
      %v63 = vadd.f32 %v61, %v62
      %v64 = vrot.slane %v63, 2
      %v65 = vadd.f32 %v63, %v64
      %v66 = vrot.slane %v65, 1
      %v67 = vadd.f32 %v65, %v66
      %s68 = vtos %v67
      %v69 = vstv %s68
      %v70 = vrsqrt.pop %v69
      %v71 = vmul.f32 %v69, %v70
      %vm72 = vcmp.eq.f32.partialorder %v69, inf
      %v73 = vsel %vm72, %v69, %v71
      %vm74 = vcmp.eq.f32.partialorder %v69, 0.0
      %v75 = vand.u32 %v69, 2147483648
      %v76 = vsel %vm74, %v75, %v73
      %s77 = vtos %v76
      %p78 = scmp.gt.f32.partialorder %s77, 1.0
      %s79 = sadd.f32 %s77, 1e-07
      %v80 = vstv %s79
      %v81 = vrcp.pop %v80
      %s82 = vtos %v81
      %s83 = scalar_select %p78, %s82, 1.0
      %v84 = vstv %s83
      %v85 = vmul.f32 %v56, %v84
      %v86 = vadd.f32 %v85, 0.0
      %s87 = sadd.s32 %s53, 1
      %s88 = sld [smem:[#allocation4 + %s87]]
      %s89 = scalar_lea.vmem [#allocation5], %s88
      %v90 = vld [vmem:[%s89] sm:$0x1]
      %v91 = vmul.f32 %v90, %v90
      %v92 = vsel %vm58, %v91, 0.0
      %93 = vadd.xlane.f32.xlu0 %v92
      %v94 = vpop.xlane.xlu0 %93
      %v95 = vrot.slane %v94, 4
      %v96 = vadd.f32 %v94, %v95
      %v97 = vrot.slane %v96, 2
      %v98 = vadd.f32 %v96, %v97
      %v99 = vrot.slane %v98, 1
      %v100 = vadd.f32 %v98, %v99
      %s101 = vtos %v100
      %v102 = vstv %s101
      %v103 = vrsqrt.pop %v102
      %v104 = vmul.f32 %v102, %v103
      %vm105 = vcmp.eq.f32.partialorder %v102, inf
      %v106 = vsel %vm105, %v102, %v104
      %vm107 = vcmp.eq.f32.partialorder %v102, 0.0
      %v108 = vand.u32 %v102, 2147483648
      %v109 = vsel %vm107, %v108, %v106
      %s110 = vtos %v109
      %p111 = scmp.gt.f32.partialorder %s110, 1.0
      %s112 = sadd.f32 %s110, 1e-07
      %v113 = vstv %s112
      %v114 = vrcp.pop %v113
      %s115 = vtos %v114
      %s116 = scalar_select %p111, %s115, 1.0
      %v117 = vstv %s116
      %v118 = vmul.f32 %v90, %v117
      %v119 = vadd.f32 %v86, %v118
      %s120 = sadd.s32 %s53, 2
      %s121 = sld [smem:[#allocation4 + %s120]]
      %s122 = scalar_lea.vmem [#allocation5], %s121
      %v123 = vld [vmem:[%s122] sm:$0x1]
      %v124 = vmul.f32 %v123, %v123
      %v125 = vsel %vm58, %v124, 0.0
      %126 = vadd.xlane.f32.xlu0 %v125
      %v127 = vpop.xlane.xlu0 %126
      %v128 = vrot.slane %v127, 4
      %v129 = vadd.f32 %v127, %v128
      %v130 = vrot.slane %v129, 2
      %v131 = vadd.f32 %v129, %v130
      %v132 = vrot.slane %v131, 1
      %v133 = vadd.f32 %v131, %v132
      %s134 = vtos %v133
      %v135 = vstv %s134
      %v136 = vrsqrt.pop %v135
      %v137 = vmul.f32 %v135, %v136
      %vm138 = vcmp.eq.f32.partialorder %v135, inf
      %v139 = vsel %vm138, %v135, %v137
      %vm140 = vcmp.eq.f32.partialorder %v135, 0.0
      %v141 = vand.u32 %v135, 2147483648
      %v142 = vsel %vm140, %v141, %v139
      %s143 = vtos %v142
      %p144 = scmp.gt.f32.partialorder %s143, 1.0
      %s145 = sadd.f32 %s143, 1e-07
      %v146 = vstv %s145
      %v147 = vrcp.pop %v146
      %s148 = vtos %v147
      %s149 = scalar_select %p144, %s148, 1.0
      %v150 = vstv %s149
      %v151 = vmul.f32 %v123, %v150
      %v152 = vadd.f32 %v119, %v151
      %s153 = sadd.s32 %s53, 3
      %s154 = sld [smem:[#allocation4 + %s153]]
      %s155 = scalar_lea.vmem [#allocation5], %s154
      %v156 = vld [vmem:[%s155] sm:$0x1]
      %v157 = vmul.f32 %v156, %v156
      %v158 = vsel %vm58, %v157, 0.0
      %159 = vadd.xlane.f32.xlu0 %v158
      %v160 = vpop.xlane.xlu0 %159
      %v161 = vrot.slane %v160, 4
      %v162 = vadd.f32 %v160, %v161
      %v163 = vrot.slane %v162, 2
      %v164 = vadd.f32 %v162, %v163
      %v165 = vrot.slane %v164, 1
      %v166 = vadd.f32 %v164, %v165
      %s167 = vtos %v166
      %v168 = vstv %s167
      %v169 = vrsqrt.pop %v168
      %v170 = vmul.f32 %v168, %v169
      %vm171 = vcmp.eq.f32.partialorder %v168, inf
      %v172 = vsel %vm171, %v168, %v170
      %vm173 = vcmp.eq.f32.partialorder %v168, 0.0
      %v174 = vand.u32 %v168, 2147483648
      %v175 = vsel %vm173, %v174, %v172
      %s176 = vtos %v175
      %p177 = scmp.gt.f32.partialorder %s176, 1.0
      %s178 = sadd.f32 %s176, 1e-07
      %v179 = vstv %s178
      %v180 = vrcp.pop %v179
      %s181 = vtos %v180
      %s182 = scalar_select %p177, %s181, 1.0
      %v183 = vstv %s182
      %v184 = vmul.f32 %v156, %v183
      %v185 = vadd.f32 %v152, %v184
      %s186 = sadd.s32 %s53, 4
      %s187 = sld [smem:[#allocation4 + %s186]]
      %s188 = scalar_lea.vmem [#allocation5], %s187
      %v189 = vld [vmem:[%s188] sm:$0x1]
      %v190 = vmul.f32 %v189, %v189
      %v191 = vsel %vm58, %v190, 0.0
      %192 = vadd.xlane.f32.xlu0 %v191
      %v193 = vpop.xlane.xlu0 %192
      %v194 = vrot.slane %v193, 4
      %v195 = vadd.f32 %v193, %v194
      %v196 = vrot.slane %v195, 2
      %v197 = vadd.f32 %v195, %v196
      %v198 = vrot.slane %v197, 1
      %v199 = vadd.f32 %v197, %v198
      %s200 = vtos %v199
      %v201 = vstv %s200
      %v202 = vrsqrt.pop %v201
      %v203 = vmul.f32 %v201, %v202
      %vm204 = vcmp.eq.f32.partialorder %v201, inf
      %v205 = vsel %vm204, %v201, %v203
      %vm206 = vcmp.eq.f32.partialorder %v201, 0.0
      %v207 = vand.u32 %v201, 2147483648
      %v208 = vsel %vm206, %v207, %v205
      %s209 = vtos %v208
      %p210 = scmp.gt.f32.partialorder %s209, 1.0
      %s211 = sadd.f32 %s209, 1e-07
      %v212 = vstv %s211
      %v213 = vrcp.pop %v212
      %s214 = vtos %v213
      %s215 = scalar_select %p210, %s214, 1.0
      %v216 = vstv %s215
      %v217 = vmul.f32 %v189, %v216
      %v218 = vadd.f32 %v185, %v217
      %s219 = sadd.s32 %s53, 5
      %s220 = sld [smem:[#allocation4 + %s219]]
      %s221 = scalar_lea.vmem [#allocation5], %s220
      %v222 = vld [vmem:[%s221] sm:$0x1]
      %v223 = vmul.f32 %v222, %v222
      %v224 = vsel %vm58, %v223, 0.0
      %225 = vadd.xlane.f32.xlu0 %v224
      %v226 = vpop.xlane.xlu0 %225
      %v227 = vrot.slane %v226, 4
      %v228 = vadd.f32 %v226, %v227
      %v229 = vrot.slane %v228, 2
      %v230 = vadd.f32 %v228, %v229
      %v231 = vrot.slane %v230, 1
      %v232 = vadd.f32 %v230, %v231
      %s233 = vtos %v232
      %v234 = vstv %s233
      %v235 = vrsqrt.pop %v234
      %v236 = vmul.f32 %v234, %v235
      %vm237 = vcmp.eq.f32.partialorder %v234, inf
      %v238 = vsel %vm237, %v234, %v236
      %vm239 = vcmp.eq.f32.partialorder %v234, 0.0
      %v240 = vand.u32 %v234, 2147483648
      %v241 = vsel %vm239, %v240, %v238
      %s242 = vtos %v241
      %p243 = scmp.gt.f32.partialorder %s242, 1.0
      %s244 = sadd.f32 %s242, 1e-07
      %v245 = vstv %s244
      %v246 = vrcp.pop %v245
      %s247 = vtos %v246
      %s248 = scalar_select %p243, %s247, 1.0
      %v249 = vstv %s248
      %v250 = vmul.f32 %v222, %v249
      %v251 = vadd.f32 %v218, %v250
      %v252 = vmul.f32 %v251, 0.16666667
      %253 = vst [vmem:[#allocation2] sm:$0x1] %v252
      %s254 = smul.u32 0, 8
      %s255 = sadd.s32 %s254, 1
      %s256 = smul.u32 %s255, 6
      %s257 = sld [smem:[#allocation4 + %s256]]
      %s258 = scalar_lea.vmem [#allocation5], %s257
      %v259 = vld [vmem:[%s258] sm:$0x1]
      %v260 = vmul.f32 %v259, %v259
      %v261 = vsel %vm58, %v260, 0.0
      %262 = vadd.xlane.f32.xlu0 %v261
      %v263 = vpop.xlane.xlu0 %262
      %v264 = vrot.slane %v263, 4
      %v265 = vadd.f32 %v263, %v264
      %v266 = vrot.slane %v265, 2
      %v267 = vadd.f32 %v265, %v266
      %v268 = vrot.slane %v267, 1
      %v269 = vadd.f32 %v267, %v268
      %s270 = vtos %v269
      %v271 = vstv %s270
      %v272 = vrsqrt.pop %v271
      %v273 = vmul.f32 %v271, %v272
      %vm274 = vcmp.eq.f32.partialorder %v271, inf
      %v275 = vsel %vm274, %v271, %v273
      %vm276 = vcmp.eq.f32.partialorder %v271, 0.0
      %v277 = vand.u32 %v271, 2147483648
      %v278 = vsel %vm276, %v277, %v275
      %s279 = vtos %v278
      %p280 = scmp.gt.f32.partialorder %s279, 1.0
      %s281 = sadd.f32 %s279, 1e-07
      %v282 = vstv %s281
      %v283 = vrcp.pop %v282
      %s284 = vtos %v283
      %s285 = scalar_select %p280, %s284, 1.0
      %v286 = vstv %s285
      %v287 = vmul.f32 %v259, %v286
      %v288 = vadd.f32 %v287, 0.0
      %s289 = sadd.s32 %s256, 1
      %s290 = sld [smem:[#allocation4 + %s289]]
      %s291 = scalar_lea.vmem [#allocation5], %s290
      %v292 = vld [vmem:[%s291] sm:$0x1]
      %v293 = vmul.f32 %v292, %v292
      %v294 = vsel %vm58, %v293, 0.0
      %295 = vadd.xlane.f32.xlu0 %v294
      %v296 = vpop.xlane.xlu0 %295
      %v297 = vrot.slane %v296, 4
      %v298 = vadd.f32 %v296, %v297
      %v299 = vrot.slane %v298, 2
      %v300 = vadd.f32 %v298, %v299
      %v301 = vrot.slane %v300, 1
      %v302 = vadd.f32 %v300, %v301
      %s303 = vtos %v302
      %v304 = vstv %s303
      %v305 = vrsqrt.pop %v304
      %v306 = vmul.f32 %v304, %v305
      %vm307 = vcmp.eq.f32.partialorder %v304, inf
      %v308 = vsel %vm307, %v304, %v306
      %vm309 = vcmp.eq.f32.partialorder %v304, 0.0
      %v310 = vand.u32 %v304, 2147483648
      %v311 = vsel %vm309, %v310, %v308
      %s312 = vtos %v311
      %p313 = scmp.gt.f32.partialorder %s312, 1.0
      %s314 = sadd.f32 %s312, 1e-07
      %v315 = vstv %s314
      %v316 = vrcp.pop %v315
      %s317 = vtos %v316
      %s318 = scalar_select %p313, %s317, 1.0
      %v319 = vstv %s318
      %v320 = vmul.f32 %v292, %v319
      %v321 = vadd.f32 %v288, %v320
      %s322 = sadd.s32 %s256, 2
      %s323 = sld [smem:[#allocation4 + %s322]]
      %s324 = scalar_lea.vmem [#allocation5], %s323
      %v325 = vld [vmem:[%s324] sm:$0x1]
      %v326 = vmul.f32 %v325, %v325
      %v327 = vsel %vm58, %v326, 0.0
      %328 = vadd.xlane.f32.xlu0 %v327
      %v329 = vpop.xlane.xlu0 %328
      %v330 = vrot.slane %v329, 4
      %v331 = vadd.f32 %v329, %v330
      %v332 = vrot.slane %v331, 2
      %v333 = vadd.f32 %v331, %v332
      %v334 = vrot.slane %v333, 1
      %v335 = vadd.f32 %v333, %v334
      %s336 = vtos %v335
      %v337 = vstv %s336
      %v338 = vrsqrt.pop %v337
      %v339 = vmul.f32 %v337, %v338
      %vm340 = vcmp.eq.f32.partialorder %v337, inf
      %v341 = vsel %vm340, %v337, %v339
      %vm342 = vcmp.eq.f32.partialorder %v337, 0.0
      %v343 = vand.u32 %v337, 2147483648
      %v344 = vsel %vm342, %v343, %v341
      %s345 = vtos %v344
      %p346 = scmp.gt.f32.partialorder %s345, 1.0
      %s347 = sadd.f32 %s345, 1e-07
      %v348 = vstv %s347
      %v349 = vrcp.pop %v348
      %s350 = vtos %v349
      %s351 = scalar_select %p346, %s350, 1.0
      %v352 = vstv %s351
      %v353 = vmul.f32 %v325, %v352
      %v354 = vadd.f32 %v321, %v353
      %s355 = sadd.s32 %s256, 3
      %s356 = sld [smem:[#allocation4 + %s355]]
      %s357 = scalar_lea.vmem [#allocation5], %s356
      %v358 = vld [vmem:[%s357] sm:$0x1]
      %v359 = vmul.f32 %v358, %v358
      %v360 = vsel %vm58, %v359, 0.0
      %361 = vadd.xlane.f32.xlu0 %v360
      %v362 = vpop.xlane.xlu0 %361
      %v363 = vrot.slane %v362, 4
      %v364 = vadd.f32 %v362, %v363
      %v365 = vrot.slane %v364, 2
      %v366 = vadd.f32 %v364, %v365
      %v367 = vrot.slane %v366, 1
      %v368 = vadd.f32 %v366, %v367
      %s369 = vtos %v368
      %v370 = vstv %s369
      %v371 = vrsqrt.pop %v370
      %v372 = vmul.f32 %v370, %v371
      %vm373 = vcmp.eq.f32.partialorder %v370, inf
      %v374 = vsel %vm373, %v370, %v372
      %vm375 = vcmp.eq.f32.partialorder %v370, 0.0
      %v376 = vand.u32 %v370, 2147483648
      %v377 = vsel %vm375, %v376, %v374
      %s378 = vtos %v377
      %p379 = scmp.gt.f32.partialorder %s378, 1.0
      %s380 = sadd.f32 %s378, 1e-07
      %v381 = vstv %s380
      %v382 = vrcp.pop %v381
      %s383 = vtos %v382
      %s384 = scalar_select %p379, %s383, 1.0
      %v385 = vstv %s384
      %v386 = vmul.f32 %v358, %v385
      %v387 = vadd.f32 %v354, %v386
      %s388 = sadd.s32 %s256, 4
      %s389 = sld [smem:[#allocation4 + %s388]]
      %s390 = scalar_lea.vmem [#allocation5], %s389
      %v391 = vld [vmem:[%s390] sm:$0x1]
      %v392 = vmul.f32 %v391, %v391
      %v393 = vsel %vm58, %v392, 0.0
      %394 = vadd.xlane.f32.xlu0 %v393
      %v395 = vpop.xlane.xlu0 %394
      %v396 = vrot.slane %v395, 4
      %v397 = vadd.f32 %v395, %v396
      %v398 = vrot.slane %v397, 2
      %v399 = vadd.f32 %v397, %v398
      %v400 = vrot.slane %v399, 1
      %v401 = vadd.f32 %v399, %v400
      %s402 = vtos %v401
      %v403 = vstv %s402
      %v404 = vrsqrt.pop %v403
      %v405 = vmul.f32 %v403, %v404
      %vm406 = vcmp.eq.f32.partialorder %v403, inf
      %v407 = vsel %vm406, %v403, %v405
      %vm408 = vcmp.eq.f32.partialorder %v403, 0.0
      %v409 = vand.u32 %v403, 2147483648
      %v410 = vsel %vm408, %v409, %v407
      %s411 = vtos %v410
      %p412 = scmp.gt.f32.partialorder %s411, 1.0
      %s413 = sadd.f32 %s411, 1e-07
      %v414 = vstv %s413
      %v415 = vrcp.pop %v414
      %s416 = vtos %v415
      %s417 = scalar_select %p412, %s416, 1.0
      %v418 = vstv %s417
      %v419 = vmul.f32 %v391, %v418
      %v420 = vadd.f32 %v387, %v419
      %s421 = sadd.s32 %s256, 5
      %s422 = sld [smem:[#allocation4 + %s421]]
      %s423 = scalar_lea.vmem [#allocation5], %s422
      %v424 = vld [vmem:[%s423] sm:$0x1]
      %v425 = vmul.f32 %v424, %v424
      %v426 = vsel %vm58, %v425, 0.0
      %427 = vadd.xlane.f32.xlu0 %v426
      %v428 = vpop.xlane.xlu0 %427
      %v429 = vrot.slane %v428, 4
      %v430 = vadd.f32 %v428, %v429
      %v431 = vrot.slane %v430, 2
      %v432 = vadd.f32 %v430, %v431
      %v433 = vrot.slane %v432, 1
      %v434 = vadd.f32 %v432, %v433
      %s435 = vtos %v434
      %v436 = vstv %s435
      %v437 = vrsqrt.pop %v436
      %v438 = vmul.f32 %v436, %v437
      %vm439 = vcmp.eq.f32.partialorder %v436, inf
      %v440 = vsel %vm439, %v436, %v438
      %vm441 = vcmp.eq.f32.partialorder %v436, 0.0
      %v442 = vand.u32 %v436, 2147483648
      %v443 = vsel %vm441, %v442, %v440
      %s444 = vtos %v443
      %p445 = scmp.gt.f32.partialorder %s444, 1.0
      %s446 = sadd.f32 %s444, 1e-07
      %v447 = vstv %s446
      %v448 = vrcp.pop %v447
      %s449 = vtos %v448
      %s450 = scalar_select %p445, %s449, 1.0
      %v451 = vstv %s450
      %v452 = vmul.f32 %v424, %v451
      %v453 = vadd.f32 %v420, %v452
      %v454 = vmul.f32 %v453, 0.16666667
      %455 = vst [vmem:[#allocation2 + $0x1] sm:$0x1] %v454
      %s456 = sadd.s32 %s254, 2
      %s457 = smul.u32 %s456, 6
      %s458 = sld [smem:[#allocation4 + %s457]]
      %s459 = scalar_lea.vmem [#allocation5], %s458
      %v460 = vld [vmem:[%s459] sm:$0x1]
      %v461 = vmul.f32 %v460, %v460
      %v462 = vsel %vm58, %v461, 0.0
      %463 = vadd.xlane.f32.xlu0 %v462
      %v464 = vpop.xlane.xlu0 %463
      %v465 = vrot.slane %v464, 4
      %v466 = vadd.f32 %v464, %v465
      %v467 = vrot.slane %v466, 2
      %v468 = vadd.f32 %v466, %v467
      %v469 = vrot.slane %v468, 1
      %v470 = vadd.f32 %v468, %v469
      %s471 = vtos %v470
      %v472 = vstv %s471
      %v473 = vrsqrt.pop %v472
      %v474 = vmul.f32 %v472, %v473
      %vm475 = vcmp.eq.f32.partialorder %v472, inf
      %v476 = vsel %vm475, %v472, %v474
      %vm477 = vcmp.eq.f32.partialorder %v472, 0.0
      %v478 = vand.u32 %v472, 2147483648
      %v479 = vsel %vm477, %v478, %v476
      %s480 = vtos %v479
      %p481 = scmp.gt.f32.partialorder %s480, 1.0
      %s482 = sadd.f32 %s480, 1e-07
      %v483 = vstv %s482
      %v484 = vrcp.pop %v483
      %s485 = vtos %v484
      %s486 = scalar_select %p481, %s485, 1.0
      %v487 = vstv %s486
      %v488 = vmul.f32 %v460, %v487
      %v489 = vadd.f32 %v488, 0.0
      %s490 = sadd.s32 %s457, 1
      %s491 = sld [smem:[#allocation4 + %s490]]
      %s492 = scalar_lea.vmem [#allocation5], %s491
      %v493 = vld [vmem:[%s492] sm:$0x1]
      %v494 = vmul.f32 %v493, %v493
      %v495 = vsel %vm58, %v494, 0.0
      %496 = vadd.xlane.f32.xlu0 %v495
      %v497 = vpop.xlane.xlu0 %496
      %v498 = vrot.slane %v497, 4
      %v499 = vadd.f32 %v497, %v498
      %v500 = vrot.slane %v499, 2
      %v501 = vadd.f32 %v499, %v500
      %v502 = vrot.slane %v501, 1
      %v503 = vadd.f32 %v501, %v502
      %s504 = vtos %v503
      %v505 = vstv %s504
      %v506 = vrsqrt.pop %v505
      %v507 = vmul.f32 %v505, %v506
      %vm508 = vcmp.eq.f32.partialorder %v505, inf
      %v509 = vsel %vm508, %v505, %v507
      %vm510 = vcmp.eq.f32.partialorder %v505, 0.0
      %v511 = vand.u32 %v505, 2147483648
      %v512 = vsel %vm510, %v511, %v509
      %s513 = vtos %v512
      %p514 = scmp.gt.f32.partialorder %s513, 1.0
      %s515 = sadd.f32 %s513, 1e-07
      %v516 = vstv %s515
      %v517 = vrcp.pop %v516
      %s518 = vtos %v517
      %s519 = scalar_select %p514, %s518, 1.0
      %v520 = vstv %s519
      %v521 = vmul.f32 %v493, %v520
      %v522 = vadd.f32 %v489, %v521
      %s523 = sadd.s32 %s457, 2
      %s524 = sld [smem:[#allocation4 + %s523]]
      %s525 = scalar_lea.vmem [#allocation5], %s524
      %v526 = vld [vmem:[%s525] sm:$0x1]
      %v527 = vmul.f32 %v526, %v526
      %v528 = vsel %vm58, %v527, 0.0
      %529 = vadd.xlane.f32.xlu0 %v528
      %v530 = vpop.xlane.xlu0 %529
      %v531 = vrot.slane %v530, 4
      %v532 = vadd.f32 %v530, %v531
      %v533 = vrot.slane %v532, 2
      %v534 = vadd.f32 %v532, %v533
      %v535 = vrot.slane %v534, 1
      %v536 = vadd.f32 %v534, %v535
      %s537 = vtos %v536
      %v538 = vstv %s537
      %v539 = vrsqrt.pop %v538
      %v540 = vmul.f32 %v538, %v539
      %vm541 = vcmp.eq.f32.partialorder %v538, inf
      %v542 = vsel %vm541, %v538, %v540
      %vm543 = vcmp.eq.f32.partialorder %v538, 0.0
      %v544 = vand.u32 %v538, 2147483648
      %v545 = vsel %vm543, %v544, %v542
      %s546 = vtos %v545
      %p547 = scmp.gt.f32.partialorder %s546, 1.0
      %s548 = sadd.f32 %s546, 1e-07
      %v549 = vstv %s548
      %v550 = vrcp.pop %v549
      %s551 = vtos %v550
      %s552 = scalar_select %p547, %s551, 1.0
      %v553 = vstv %s552
      %v554 = vmul.f32 %v526, %v553
      %v555 = vadd.f32 %v522, %v554
      %s556 = sadd.s32 %s457, 3
      %s557 = sld [smem:[#allocation4 + %s556]]
      %s558 = scalar_lea.vmem [#allocation5], %s557
      %v559 = vld [vmem:[%s558] sm:$0x1]
      %v560 = vmul.f32 %v559, %v559
      %v561 = vsel %vm58, %v560, 0.0
      %562 = vadd.xlane.f32.xlu0 %v561
      %v563 = vpop.xlane.xlu0 %562
      %v564 = vrot.slane %v563, 4
      %v565 = vadd.f32 %v563, %v564
      %v566 = vrot.slane %v565, 2
      %v567 = vadd.f32 %v565, %v566
      %v568 = vrot.slane %v567, 1
      %v569 = vadd.f32 %v567, %v568
      %s570 = vtos %v569
      %v571 = vstv %s570
      %v572 = vrsqrt.pop %v571
      %v573 = vmul.f32 %v571, %v572
      %vm574 = vcmp.eq.f32.partialorder %v571, inf
      %v575 = vsel %vm574, %v571, %v573
      %vm576 = vcmp.eq.f32.partialorder %v571, 0.0
      %v577 = vand.u32 %v571, 2147483648
      %v578 = vsel %vm576, %v577, %v575
      %s579 = vtos %v578
      %p580 = scmp.gt.f32.partialorder %s579, 1.0
      %s581 = sadd.f32 %s579, 1e-07
      %v582 = vstv %s581
      %v583 = vrcp.pop %v582
      %s584 = vtos %v583
      %s585 = scalar_select %p580, %s584, 1.0
      %v586 = vstv %s585
      %v587 = vmul.f32 %v559, %v586
      %v588 = vadd.f32 %v555, %v587
      %s589 = sadd.s32 %s457, 4
      %s590 = sld [smem:[#allocation4 + %s589]]
      %s591 = scalar_lea.vmem [#allocation5], %s590
      %v592 = vld [vmem:[%s591] sm:$0x1]
      %v593 = vmul.f32 %v592, %v592
      %v594 = vsel %vm58, %v593, 0.0
      %595 = vadd.xlane.f32.xlu0 %v594
      %v596 = vpop.xlane.xlu0 %595
      %v597 = vrot.slane %v596, 4
      %v598 = vadd.f32 %v596, %v597
      %v599 = vrot.slane %v598, 2
      %v600 = vadd.f32 %v598, %v599
      %v601 = vrot.slane %v600, 1
      %v602 = vadd.f32 %v600, %v601
      %s603 = vtos %v602
      %v604 = vstv %s603
      %v605 = vrsqrt.pop %v604
      %v606 = vmul.f32 %v604, %v605
      %vm607 = vcmp.eq.f32.partialorder %v604, inf
      %v608 = vsel %vm607, %v604, %v606
      %vm609 = vcmp.eq.f32.partialorder %v604, 0.0
      %v610 = vand.u32 %v604, 2147483648
      %v611 = vsel %vm609, %v610, %v608
      %s612 = vtos %v611
      %p613 = scmp.gt.f32.partialorder %s612, 1.0
      %s614 = sadd.f32 %s612, 1e-07
      %v615 = vstv %s614
      %v616 = vrcp.pop %v615
      %s617 = vtos %v616
      %s618 = scalar_select %p613, %s617, 1.0
      %v619 = vstv %s618
      %v620 = vmul.f32 %v592, %v619
      %v621 = vadd.f32 %v588, %v620
      %s622 = sadd.s32 %s457, 5
      %s623 = sld [smem:[#allocation4 + %s622]]
      %s624 = scalar_lea.vmem [#allocation5], %s623
      %v625 = vld [vmem:[%s624] sm:$0x1]
      %v626 = vmul.f32 %v625, %v625
      %v627 = vsel %vm58, %v626, 0.0
      %628 = vadd.xlane.f32.xlu0 %v627
      %v629 = vpop.xlane.xlu0 %628
      %v630 = vrot.slane %v629, 4
      %v631 = vadd.f32 %v629, %v630
      %v632 = vrot.slane %v631, 2
      %v633 = vadd.f32 %v631, %v632
      %v634 = vrot.slane %v633, 1
      %v635 = vadd.f32 %v633, %v634
      %s636 = vtos %v635
      %v637 = vstv %s636
      %v638 = vrsqrt.pop %v637
      %v639 = vmul.f32 %v637, %v638
      %vm640 = vcmp.eq.f32.partialorder %v637, inf
      %v641 = vsel %vm640, %v637, %v639
      %vm642 = vcmp.eq.f32.partialorder %v637, 0.0
      %v643 = vand.u32 %v637, 2147483648
      %v644 = vsel %vm642, %v643, %v641
      %s645 = vtos %v644
      %p646 = scmp.gt.f32.partialorder %s645, 1.0
      %s647 = sadd.f32 %s645, 1e-07
      %v648 = vstv %s647
      %v649 = vrcp.pop %v648
      %s650 = vtos %v649
      %s651 = scalar_select %p646, %s650, 1.0
      %v652 = vstv %s651
      %v653 = vmul.f32 %v625, %v652
      %v654 = vadd.f32 %v621, %v653
      %v655 = vmul.f32 %v654, 0.16666667
      %656 = vst [vmem:[#allocation2 + $0x2] sm:$0x1] %v655
      %s657 = sadd.s32 %s254, 3
      %s658 = smul.u32 %s657, 6
      %s659 = sld [smem:[#allocation4 + %s658]]
      %s660 = scalar_lea.vmem [#allocation5], %s659
      %v661 = vld [vmem:[%s660] sm:$0x1]
      %v662 = vmul.f32 %v661, %v661
      %v663 = vsel %vm58, %v662, 0.0
      %664 = vadd.xlane.f32.xlu0 %v663
      %v665 = vpop.xlane.xlu0 %664
      %v666 = vrot.slane %v665, 4
      %v667 = vadd.f32 %v665, %v666
      %v668 = vrot.slane %v667, 2
      %v669 = vadd.f32 %v667, %v668
      %v670 = vrot.slane %v669, 1
      %v671 = vadd.f32 %v669, %v670
      %s672 = vtos %v671
      %v673 = vstv %s672
      %v674 = vrsqrt.pop %v673
      %v675 = vmul.f32 %v673, %v674
      %vm676 = vcmp.eq.f32.partialorder %v673, inf
      %v677 = vsel %vm676, %v673, %v675
      %vm678 = vcmp.eq.f32.partialorder %v673, 0.0
      %v679 = vand.u32 %v673, 2147483648
      %v680 = vsel %vm678, %v679, %v677
      %s681 = vtos %v680
      %p682 = scmp.gt.f32.partialorder %s681, 1.0
      %s683 = sadd.f32 %s681, 1e-07
      %v684 = vstv %s683
      %v685 = vrcp.pop %v684
      %s686 = vtos %v685
      %s687 = scalar_select %p682, %s686, 1.0
      %v688 = vstv %s687
      %v689 = vmul.f32 %v661, %v688
      %v690 = vadd.f32 %v689, 0.0
      %s691 = sadd.s32 %s658, 1
      %s692 = sld [smem:[#allocation4 + %s691]]
      %s693 = scalar_lea.vmem [#allocation5], %s692
      %v694 = vld [vmem:[%s693] sm:$0x1]
      %v695 = vmul.f32 %v694, %v694
      %v696 = vsel %vm58, %v695, 0.0
      %697 = vadd.xlane.f32.xlu0 %v696
      %v698 = vpop.xlane.xlu0 %697
      %v699 = vrot.slane %v698, 4
      %v700 = vadd.f32 %v698, %v699
      %v701 = vrot.slane %v700, 2
      %v702 = vadd.f32 %v700, %v701
      %v703 = vrot.slane %v702, 1
      %v704 = vadd.f32 %v702, %v703
      %s705 = vtos %v704
      %v706 = vstv %s705
      %v707 = vrsqrt.pop %v706
      %v708 = vmul.f32 %v706, %v707
      %vm709 = vcmp.eq.f32.partialorder %v706, inf
      %v710 = vsel %vm709, %v706, %v708
      %vm711 = vcmp.eq.f32.partialorder %v706, 0.0
      %v712 = vand.u32 %v706, 2147483648
      %v713 = vsel %vm711, %v712, %v710
      %s714 = vtos %v713
      %p715 = scmp.gt.f32.partialorder %s714, 1.0
      %s716 = sadd.f32 %s714, 1e-07
      %v717 = vstv %s716
      %v718 = vrcp.pop %v717
      %s719 = vtos %v718
      %s720 = scalar_select %p715, %s719, 1.0
      %v721 = vstv %s720
      %v722 = vmul.f32 %v694, %v721
      %v723 = vadd.f32 %v690, %v722
      %s724 = sadd.s32 %s658, 2
      %s725 = sld [smem:[#allocation4 + %s724]]
      %s726 = scalar_lea.vmem [#allocation5], %s725
      %v727 = vld [vmem:[%s726] sm:$0x1]
      %v728 = vmul.f32 %v727, %v727
      %v729 = vsel %vm58, %v728, 0.0
      %730 = vadd.xlane.f32.xlu0 %v729
      %v731 = vpop.xlane.xlu0 %730
      %v732 = vrot.slane %v731, 4
      %v733 = vadd.f32 %v731, %v732
      %v734 = vrot.slane %v733, 2
      %v735 = vadd.f32 %v733, %v734
      %v736 = vrot.slane %v735, 1
      %v737 = vadd.f32 %v735, %v736
      %s738 = vtos %v737
      %v739 = vstv %s738
      %v740 = vrsqrt.pop %v739
      %v741 = vmul.f32 %v739, %v740
      %vm742 = vcmp.eq.f32.partialorder %v739, inf
      %v743 = vsel %vm742, %v739, %v741
      %vm744 = vcmp.eq.f32.partialorder %v739, 0.0
      %v745 = vand.u32 %v739, 2147483648
      %v746 = vsel %vm744, %v745, %v743
      %s747 = vtos %v746
      %p748 = scmp.gt.f32.partialorder %s747, 1.0
      %s749 = sadd.f32 %s747, 1e-07
      %v750 = vstv %s749
      %v751 = vrcp.pop %v750
      %s752 = vtos %v751
      %s753 = scalar_select %p748, %s752, 1.0
      %v754 = vstv %s753
      %v755 = vmul.f32 %v727, %v754
      %v756 = vadd.f32 %v723, %v755
      %s757 = sadd.s32 %s658, 3
      %s758 = sld [smem:[#allocation4 + %s757]]
      %s759 = scalar_lea.vmem [#allocation5], %s758
      %v760 = vld [vmem:[%s759] sm:$0x1]
      %v761 = vmul.f32 %v760, %v760
      %v762 = vsel %vm58, %v761, 0.0
      %763 = vadd.xlane.f32.xlu0 %v762
      %v764 = vpop.xlane.xlu0 %763
      %v765 = vrot.slane %v764, 4
      %v766 = vadd.f32 %v764, %v765
      %v767 = vrot.slane %v766, 2
      %v768 = vadd.f32 %v766, %v767
      %v769 = vrot.slane %v768, 1
      %v770 = vadd.f32 %v768, %v769
      %s771 = vtos %v770
      %v772 = vstv %s771
      %v773 = vrsqrt.pop %v772
      %v774 = vmul.f32 %v772, %v773
      %vm775 = vcmp.eq.f32.partialorder %v772, inf
      %v776 = vsel %vm775, %v772, %v774
      %vm777 = vcmp.eq.f32.partialorder %v772, 0.0
      %v778 = vand.u32 %v772, 2147483648
      %v779 = vsel %vm777, %v778, %v776
      %s780 = vtos %v779
      %p781 = scmp.gt.f32.partialorder %s780, 1.0
      %s782 = sadd.f32 %s780, 1e-07
      %v783 = vstv %s782
      %v784 = vrcp.pop %v783
      %s785 = vtos %v784
      %s786 = scalar_select %p781, %s785, 1.0
      %v787 = vstv %s786
      %v788 = vmul.f32 %v760, %v787
      %v789 = vadd.f32 %v756, %v788
      %s790 = sadd.s32 %s658, 4
      %s791 = sld [smem:[#allocation4 + %s790]]
      %s792 = scalar_lea.vmem [#allocation5], %s791
      %v793 = vld [vmem:[%s792] sm:$0x1]
      %v794 = vmul.f32 %v793, %v793
      %v795 = vsel %vm58, %v794, 0.0
      %796 = vadd.xlane.f32.xlu0 %v795
      %v797 = vpop.xlane.xlu0 %796
      %v798 = vrot.slane %v797, 4
      %v799 = vadd.f32 %v797, %v798
      %v800 = vrot.slane %v799, 2
      %v801 = vadd.f32 %v799, %v800
      %v802 = vrot.slane %v801, 1
      %v803 = vadd.f32 %v801, %v802
      %s804 = vtos %v803
      %v805 = vstv %s804
      %v806 = vrsqrt.pop %v805
      %v807 = vmul.f32 %v805, %v806
      %vm808 = vcmp.eq.f32.partialorder %v805, inf
      %v809 = vsel %vm808, %v805, %v807
      %vm810 = vcmp.eq.f32.partialorder %v805, 0.0
      %v811 = vand.u32 %v805, 2147483648
      %v812 = vsel %vm810, %v811, %v809
      %s813 = vtos %v812
      %p814 = scmp.gt.f32.partialorder %s813, 1.0
      %s815 = sadd.f32 %s813, 1e-07
      %v816 = vstv %s815
      %v817 = vrcp.pop %v816
      %s818 = vtos %v817
      %s819 = scalar_select %p814, %s818, 1.0
      %v820 = vstv %s819
      %v821 = vmul.f32 %v793, %v820
      %v822 = vadd.f32 %v789, %v821
      %s823 = sadd.s32 %s658, 5
      %s824 = sld [smem:[#allocation4 + %s823]]
      %s825 = scalar_lea.vmem [#allocation5], %s824
      %v826 = vld [vmem:[%s825] sm:$0x1]
      %v827 = vmul.f32 %v826, %v826
      %v828 = vsel %vm58, %v827, 0.0
      %829 = vadd.xlane.f32.xlu0 %v828
      %v830 = vpop.xlane.xlu0 %829
      %v831 = vrot.slane %v830, 4
      %v832 = vadd.f32 %v830, %v831
      %v833 = vrot.slane %v832, 2
      %v834 = vadd.f32 %v832, %v833
      %v835 = vrot.slane %v834, 1
      %v836 = vadd.f32 %v834, %v835
      %s837 = vtos %v836
      %v838 = vstv %s837
      %v839 = vrsqrt.pop %v838
      %v840 = vmul.f32 %v838, %v839
      %vm841 = vcmp.eq.f32.partialorder %v838, inf
      %v842 = vsel %vm841, %v838, %v840
      %vm843 = vcmp.eq.f32.partialorder %v838, 0.0
      %v844 = vand.u32 %v838, 2147483648
      %v845 = vsel %vm843, %v844, %v842
      %s846 = vtos %v845
      %p847 = scmp.gt.f32.partialorder %s846, 1.0
      %s848 = sadd.f32 %s846, 1e-07
      %v849 = vstv %s848
      %v850 = vrcp.pop %v849
      %s851 = vtos %v850
      %s852 = scalar_select %p847, %s851, 1.0
      %v853 = vstv %s852
      %v854 = vmul.f32 %v826, %v853
      %v855 = vadd.f32 %v822, %v854
      %v856 = vmul.f32 %v855, 0.16666667
      %857 = vst [vmem:[#allocation2 + $0x3] sm:$0x1] %v856
      %s858 = sadd.s32 %s254, 4
      %s859 = smul.u32 %s858, 6
      %s860 = sld [smem:[#allocation4 + %s859]]
      %s861 = scalar_lea.vmem [#allocation5], %s860
      %v862 = vld [vmem:[%s861] sm:$0x1]
      %v863 = vmul.f32 %v862, %v862
      %v864 = vsel %vm58, %v863, 0.0
      %865 = vadd.xlane.f32.xlu0 %v864
      %v866 = vpop.xlane.xlu0 %865
      %v867 = vrot.slane %v866, 4
      %v868 = vadd.f32 %v866, %v867
      %v869 = vrot.slane %v868, 2
      %v870 = vadd.f32 %v868, %v869
      %v871 = vrot.slane %v870, 1
      %v872 = vadd.f32 %v870, %v871
      %s873 = vtos %v872
      %v874 = vstv %s873
      %v875 = vrsqrt.pop %v874
      %v876 = vmul.f32 %v874, %v875
      %vm877 = vcmp.eq.f32.partialorder %v874, inf
      %v878 = vsel %vm877, %v874, %v876
      %vm879 = vcmp.eq.f32.partialorder %v874, 0.0
      %v880 = vand.u32 %v874, 2147483648
      %v881 = vsel %vm879, %v880, %v878
      %s882 = vtos %v881
      %p883 = scmp.gt.f32.partialorder %s882, 1.0
      %s884 = sadd.f32 %s882, 1e-07
      %v885 = vstv %s884
      %v886 = vrcp.pop %v885
      %s887 = vtos %v886
      %s888 = scalar_select %p883, %s887, 1.0
      %v889 = vstv %s888
      %v890 = vmul.f32 %v862, %v889
      %v891 = vadd.f32 %v890, 0.0
      %s892 = sadd.s32 %s859, 1
      %s893 = sld [smem:[#allocation4 + %s892]]
      %s894 = scalar_lea.vmem [#allocation5], %s893
      %v895 = vld [vmem:[%s894] sm:$0x1]
      %v896 = vmul.f32 %v895, %v895
      %v897 = vsel %vm58, %v896, 0.0
      %898 = vadd.xlane.f32.xlu0 %v897
      %v899 = vpop.xlane.xlu0 %898
      %v900 = vrot.slane %v899, 4
      %v901 = vadd.f32 %v899, %v900
      %v902 = vrot.slane %v901, 2
      %v903 = vadd.f32 %v901, %v902
      %v904 = vrot.slane %v903, 1
      %v905 = vadd.f32 %v903, %v904
      %s906 = vtos %v905
      %v907 = vstv %s906
      %v908 = vrsqrt.pop %v907
      %v909 = vmul.f32 %v907, %v908
      %vm910 = vcmp.eq.f32.partialorder %v907, inf
      %v911 = vsel %vm910, %v907, %v909
      %vm912 = vcmp.eq.f32.partialorder %v907, 0.0
      %v913 = vand.u32 %v907, 2147483648
      %v914 = vsel %vm912, %v913, %v911
      %s915 = vtos %v914
      %p916 = scmp.gt.f32.partialorder %s915, 1.0
      %s917 = sadd.f32 %s915, 1e-07
      %v918 = vstv %s917
      %v919 = vrcp.pop %v918
      %s920 = vtos %v919
      %s921 = scalar_select %p916, %s920, 1.0
      %v922 = vstv %s921
      %v923 = vmul.f32 %v895, %v922
      %v924 = vadd.f32 %v891, %v923
      %s925 = sadd.s32 %s859, 2
      %s926 = sld [smem:[#allocation4 + %s925]]
      %s927 = scalar_lea.vmem [#allocation5], %s926
      %v928 = vld [vmem:[%s927] sm:$0x1]
      %v929 = vmul.f32 %v928, %v928
      %v930 = vsel %vm58, %v929, 0.0
      %931 = vadd.xlane.f32.xlu0 %v930
      %v932 = vpop.xlane.xlu0 %931
      %v933 = vrot.slane %v932, 4
      %v934 = vadd.f32 %v932, %v933
      %v935 = vrot.slane %v934, 2
      %v936 = vadd.f32 %v934, %v935
      %v937 = vrot.slane %v936, 1
      %v938 = vadd.f32 %v936, %v937
      %s939 = vtos %v938
      %v940 = vstv %s939
      %v941 = vrsqrt.pop %v940
      %v942 = vmul.f32 %v940, %v941
      %vm943 = vcmp.eq.f32.partialorder %v940, inf
      %v944 = vsel %vm943, %v940, %v942
      %vm945 = vcmp.eq.f32.partialorder %v940, 0.0
      %v946 = vand.u32 %v940, 2147483648
      %v947 = vsel %vm945, %v946, %v944
      %s948 = vtos %v947
      %p949 = scmp.gt.f32.partialorder %s948, 1.0
      %s950 = sadd.f32 %s948, 1e-07
      %v951 = vstv %s950
      %v952 = vrcp.pop %v951
      %s953 = vtos %v952
      %s954 = scalar_select %p949, %s953, 1.0
      %v955 = vstv %s954
      %v956 = vmul.f32 %v928, %v955
      %v957 = vadd.f32 %v924, %v956
      %s958 = sadd.s32 %s859, 3
      %s959 = sld [smem:[#allocation4 + %s958]]
      %s960 = scalar_lea.vmem [#allocation5], %s959
      %v961 = vld [vmem:[%s960] sm:$0x1]
      %v962 = vmul.f32 %v961, %v961
      %v963 = vsel %vm58, %v962, 0.0
      %964 = vadd.xlane.f32.xlu0 %v963
      %v965 = vpop.xlane.xlu0 %964
      %v966 = vrot.slane %v965, 4
      %v967 = vadd.f32 %v965, %v966
      %v968 = vrot.slane %v967, 2
      %v969 = vadd.f32 %v967, %v968
      %v970 = vrot.slane %v969, 1
      %v971 = vadd.f32 %v969, %v970
      %s972 = vtos %v971
      %v973 = vstv %s972
      %v974 = vrsqrt.pop %v973
      %v975 = vmul.f32 %v973, %v974
      %vm976 = vcmp.eq.f32.partialorder %v973, inf
      %v977 = vsel %vm976, %v973, %v975
      %vm978 = vcmp.eq.f32.partialorder %v973, 0.0
      %v979 = vand.u32 %v973, 2147483648
      %v980 = vsel %vm978, %v979, %v977
      %s981 = vtos %v980
      %p982 = scmp.gt.f32.partialorder %s981, 1.0
      %s983 = sadd.f32 %s981, 1e-07
      %v984 = vstv %s983
      %v985 = vrcp.pop %v984
      %s986 = vtos %v985
      %s987 = scalar_select %p982, %s986, 1.0
      %v988 = vstv %s987
      %v989 = vmul.f32 %v961, %v988
      %v990 = vadd.f32 %v957, %v989
      %s991 = sadd.s32 %s859, 4
      %s992 = sld [smem:[#allocation4 + %s991]]
      %s993 = scalar_lea.vmem [#allocation5], %s992
      %v994 = vld [vmem:[%s993] sm:$0x1]
      %v995 = vmul.f32 %v994, %v994
      %v996 = vsel %vm58, %v995, 0.0
      %997 = vadd.xlane.f32.xlu0 %v996
      %v998 = vpop.xlane.xlu0 %997
      %v999 = vrot.slane %v998, 4
      %v1000 = vadd.f32 %v998, %v999
      %v1001 = vrot.slane %v1000, 2
      %v1002 = vadd.f32 %v1000, %v1001
      %v1003 = vrot.slane %v1002, 1
      %v1004 = vadd.f32 %v1002, %v1003
      %s1005 = vtos %v1004
      %v1006 = vstv %s1005
      %v1007 = vrsqrt.pop %v1006
      %v1008 = vmul.f32 %v1006, %v1007
      %vm1009 = vcmp.eq.f32.partialorder %v1006, inf
      %v1010 = vsel %vm1009, %v1006, %v1008
      %vm1011 = vcmp.eq.f32.partialorder %v1006, 0.0
      %v1012 = vand.u32 %v1006, 2147483648
      %v1013 = vsel %vm1011, %v1012, %v1010
      %s1014 = vtos %v1013
      %p1015 = scmp.gt.f32.partialorder %s1014, 1.0
      %s1016 = sadd.f32 %s1014, 1e-07
      %v1017 = vstv %s1016
      %v1018 = vrcp.pop %v1017
      %s1019 = vtos %v1018
      %s1020 = scalar_select %p1015, %s1019, 1.0
      %v1021 = vstv %s1020
      %v1022 = vmul.f32 %v994, %v1021
      %v1023 = vadd.f32 %v990, %v1022
      %s1024 = sadd.s32 %s859, 5
      %s1025 = sld [smem:[#allocation4 + %s1024]]
      %s1026 = scalar_lea.vmem [#allocation5], %s1025
      %v1027 = vld [vmem:[%s1026] sm:$0x1]
      %v1028 = vmul.f32 %v1027, %v1027
      %v1029 = vsel %vm58, %v1028, 0.0
      %1030 = vadd.xlane.f32.xlu0 %v1029
      %v1031 = vpop.xlane.xlu0 %1030
      %v1032 = vrot.slane %v1031, 4
      %v1033 = vadd.f32 %v1031, %v1032
      %v1034 = vrot.slane %v1033, 2
      %v1035 = vadd.f32 %v1033, %v1034
      %v1036 = vrot.slane %v1035, 1
      %v1037 = vadd.f32 %v1035, %v1036
      %s1038 = vtos %v1037
      %v1039 = vstv %s1038
      %v1040 = vrsqrt.pop %v1039
      %v1041 = vmul.f32 %v1039, %v1040
      %vm1042 = vcmp.eq.f32.partialorder %v1039, inf
      %v1043 = vsel %vm1042, %v1039, %v1041
      %vm1044 = vcmp.eq.f32.partialorder %v1039, 0.0
      %v1045 = vand.u32 %v1039, 2147483648
      %v1046 = vsel %vm1044, %v1045, %v1043
      %s1047 = vtos %v1046
      %p1048 = scmp.gt.f32.partialorder %s1047, 1.0
      %s1049 = sadd.f32 %s1047, 1e-07
      %v1050 = vstv %s1049
      %v1051 = vrcp.pop %v1050
      %s1052 = vtos %v1051
      %s1053 = scalar_select %p1048, %s1052, 1.0
      %v1054 = vstv %s1053
      %v1055 = vmul.f32 %v1027, %v1054
      %v1056 = vadd.f32 %v1023, %v1055
      %v1057 = vmul.f32 %v1056, 0.16666667
      %1058 = vst [vmem:[#allocation2 + $0x4] sm:$0x1] %v1057
      %s1059 = sadd.s32 %s254, 5
      %s1060 = smul.u32 %s1059, 6
      %s1061 = sld [smem:[#allocation4 + %s1060]]
      %s1062 = scalar_lea.vmem [#allocation5], %s1061
      %v1063 = vld [vmem:[%s1062] sm:$0x1]
      %v1064 = vmul.f32 %v1063, %v1063
      %v1065 = vsel %vm58, %v1064, 0.0
      %1066 = vadd.xlane.f32.xlu0 %v1065
      %v1067 = vpop.xlane.xlu0 %1066
      %v1068 = vrot.slane %v1067, 4
      %v1069 = vadd.f32 %v1067, %v1068
      %v1070 = vrot.slane %v1069, 2
      %v1071 = vadd.f32 %v1069, %v1070
      %v1072 = vrot.slane %v1071, 1
      %v1073 = vadd.f32 %v1071, %v1072
      %s1074 = vtos %v1073
      %v1075 = vstv %s1074
      %v1076 = vrsqrt.pop %v1075
      %v1077 = vmul.f32 %v1075, %v1076
      %vm1078 = vcmp.eq.f32.partialorder %v1075, inf
      %v1079 = vsel %vm1078, %v1075, %v1077
      %vm1080 = vcmp.eq.f32.partialorder %v1075, 0.0
      %v1081 = vand.u32 %v1075, 2147483648
      %v1082 = vsel %vm1080, %v1081, %v1079
      %s1083 = vtos %v1082
      %p1084 = scmp.gt.f32.partialorder %s1083, 1.0
      %s1085 = sadd.f32 %s1083, 1e-07
      %v1086 = vstv %s1085
      %v1087 = vrcp.pop %v1086
      %s1088 = vtos %v1087
      %s1089 = scalar_select %p1084, %s1088, 1.0
      %v1090 = vstv %s1089
      %v1091 = vmul.f32 %v1063, %v1090
      %v1092 = vadd.f32 %v1091, 0.0
      %s1093 = sadd.s32 %s1060, 1
      %s1094 = sld [smem:[#allocation4 + %s1093]]
      %s1095 = scalar_lea.vmem [#allocation5], %s1094
      %v1096 = vld [vmem:[%s1095] sm:$0x1]
      %v1097 = vmul.f32 %v1096, %v1096
      %v1098 = vsel %vm58, %v1097, 0.0
      %1099 = vadd.xlane.f32.xlu0 %v1098
      %v1100 = vpop.xlane.xlu0 %1099
      %v1101 = vrot.slane %v1100, 4
      %v1102 = vadd.f32 %v1100, %v1101
      %v1103 = vrot.slane %v1102, 2
      %v1104 = vadd.f32 %v1102, %v1103
      %v1105 = vrot.slane %v1104, 1
      %v1106 = vadd.f32 %v1104, %v1105
      %s1107 = vtos %v1106
      %v1108 = vstv %s1107
      %v1109 = vrsqrt.pop %v1108
      %v1110 = vmul.f32 %v1108, %v1109
      %vm1111 = vcmp.eq.f32.partialorder %v1108, inf
      %v1112 = vsel %vm1111, %v1108, %v1110
      %vm1113 = vcmp.eq.f32.partialorder %v1108, 0.0
      %v1114 = vand.u32 %v1108, 2147483648
      %v1115 = vsel %vm1113, %v1114, %v1112
      %s1116 = vtos %v1115
      %p1117 = scmp.gt.f32.partialorder %s1116, 1.0
      %s1118 = sadd.f32 %s1116, 1e-07
      %v1119 = vstv %s1118
      %v1120 = vrcp.pop %v1119
      %s1121 = vtos %v1120
      %s1122 = scalar_select %p1117, %s1121, 1.0
      %v1123 = vstv %s1122
      %v1124 = vmul.f32 %v1096, %v1123
      %v1125 = vadd.f32 %v1092, %v1124
      %s1126 = sadd.s32 %s1060, 2
      %s1127 = sld [smem:[#allocation4 + %s1126]]
      %s1128 = scalar_lea.vmem [#allocation5], %s1127
      %v1129 = vld [vmem:[%s1128] sm:$0x1]
      %v1130 = vmul.f32 %v1129, %v1129
      %v1131 = vsel %vm58, %v1130, 0.0
      %1132 = vadd.xlane.f32.xlu0 %v1131
      %v1133 = vpop.xlane.xlu0 %1132
      %v1134 = vrot.slane %v1133, 4
      %v1135 = vadd.f32 %v1133, %v1134
      %v1136 = vrot.slane %v1135, 2
      %v1137 = vadd.f32 %v1135, %v1136
      %v1138 = vrot.slane %v1137, 1
      %v1139 = vadd.f32 %v1137, %v1138
      %s1140 = vtos %v1139
      %v1141 = vstv %s1140
      %v1142 = vrsqrt.pop %v1141
      %v1143 = vmul.f32 %v1141, %v1142
      %vm1144 = vcmp.eq.f32.partialorder %v1141, inf
      %v1145 = vsel %vm1144, %v1141, %v1143
      %vm1146 = vcmp.eq.f32.partialorder %v1141, 0.0
      %v1147 = vand.u32 %v1141, 2147483648
      %v1148 = vsel %vm1146, %v1147, %v1145
      %s1149 = vtos %v1148
      %p1150 = scmp.gt.f32.partialorder %s1149, 1.0
      %s1151 = sadd.f32 %s1149, 1e-07
      %v1152 = vstv %s1151
      %v1153 = vrcp.pop %v1152
      %s1154 = vtos %v1153
      %s1155 = scalar_select %p1150, %s1154, 1.0
      %v1156 = vstv %s1155
      %v1157 = vmul.f32 %v1129, %v1156
      %v1158 = vadd.f32 %v1125, %v1157
      %s1159 = sadd.s32 %s1060, 3
      %s1160 = sld [smem:[#allocation4 + %s1159]]
      %s1161 = scalar_lea.vmem [#allocation5], %s1160
      %v1162 = vld [vmem:[%s1161] sm:$0x1]
      %v1163 = vmul.f32 %v1162, %v1162
      %v1164 = vsel %vm58, %v1163, 0.0
      %1165 = vadd.xlane.f32.xlu0 %v1164
      %v1166 = vpop.xlane.xlu0 %1165
      %v1167 = vrot.slane %v1166, 4
      %v1168 = vadd.f32 %v1166, %v1167
      %v1169 = vrot.slane %v1168, 2
      %v1170 = vadd.f32 %v1168, %v1169
      %v1171 = vrot.slane %v1170, 1
      %v1172 = vadd.f32 %v1170, %v1171
      %s1173 = vtos %v1172
      %v1174 = vstv %s1173
      %v1175 = vrsqrt.pop %v1174
      %v1176 = vmul.f32 %v1174, %v1175
      %vm1177 = vcmp.eq.f32.partialorder %v1174, inf
      %v1178 = vsel %vm1177, %v1174, %v1176
      %vm1179 = vcmp.eq.f32.partialorder %v1174, 0.0
      %v1180 = vand.u32 %v1174, 2147483648
      %v1181 = vsel %vm1179, %v1180, %v1178
      %s1182 = vtos %v1181
      %p1183 = scmp.gt.f32.partialorder %s1182, 1.0
      %s1184 = sadd.f32 %s1182, 1e-07
      %v1185 = vstv %s1184
      %v1186 = vrcp.pop %v1185
      %s1187 = vtos %v1186
      %s1188 = scalar_select %p1183, %s1187, 1.0
      %v1189 = vstv %s1188
      %v1190 = vmul.f32 %v1162, %v1189
      %v1191 = vadd.f32 %v1158, %v1190
      %s1192 = sadd.s32 %s1060, 4
      %s1193 = sld [smem:[#allocation4 + %s1192]]
      %s1194 = scalar_lea.vmem [#allocation5], %s1193
      %v1195 = vld [vmem:[%s1194] sm:$0x1]
      %v1196 = vmul.f32 %v1195, %v1195
      %v1197 = vsel %vm58, %v1196, 0.0
      %1198 = vadd.xlane.f32.xlu0 %v1197
      %v1199 = vpop.xlane.xlu0 %1198
      %v1200 = vrot.slane %v1199, 4
      %v1201 = vadd.f32 %v1199, %v1200
      %v1202 = vrot.slane %v1201, 2
      %v1203 = vadd.f32 %v1201, %v1202
      %v1204 = vrot.slane %v1203, 1
      %v1205 = vadd.f32 %v1203, %v1204
      %s1206 = vtos %v1205
      %v1207 = vstv %s1206
      %v1208 = vrsqrt.pop %v1207
      %v1209 = vmul.f32 %v1207, %v1208
      %vm1210 = vcmp.eq.f32.partialorder %v1207, inf
      %v1211 = vsel %vm1210, %v1207, %v1209
      %vm1212 = vcmp.eq.f32.partialorder %v1207, 0.0
      %v1213 = vand.u32 %v1207, 2147483648
      %v1214 = vsel %vm1212, %v1213, %v1211
      %s1215 = vtos %v1214
      %p1216 = scmp.gt.f32.partialorder %s1215, 1.0
      %s1217 = sadd.f32 %s1215, 1e-07
      %v1218 = vstv %s1217
      %v1219 = vrcp.pop %v1218
      %s1220 = vtos %v1219
      %s1221 = scalar_select %p1216, %s1220, 1.0
      %v1222 = vstv %s1221
      %v1223 = vmul.f32 %v1195, %v1222
      %v1224 = vadd.f32 %v1191, %v1223
      %s1225 = sadd.s32 %s1060, 5
      %s1226 = sld [smem:[#allocation4 + %s1225]]
      %s1227 = scalar_lea.vmem [#allocation5], %s1226
      %v1228 = vld [vmem:[%s1227] sm:$0x1]
      %v1229 = vmul.f32 %v1228, %v1228
      %v1230 = vsel %vm58, %v1229, 0.0
      %1231 = vadd.xlane.f32.xlu0 %v1230
      %v1232 = vpop.xlane.xlu0 %1231
      %v1233 = vrot.slane %v1232, 4
      %v1234 = vadd.f32 %v1232, %v1233
      %v1235 = vrot.slane %v1234, 2
      %v1236 = vadd.f32 %v1234, %v1235
      %v1237 = vrot.slane %v1236, 1
      %v1238 = vadd.f32 %v1236, %v1237
      %s1239 = vtos %v1238
      %v1240 = vstv %s1239
      %v1241 = vrsqrt.pop %v1240
      %v1242 = vmul.f32 %v1240, %v1241
      %vm1243 = vcmp.eq.f32.partialorder %v1240, inf
      %v1244 = vsel %vm1243, %v1240, %v1242
      %vm1245 = vcmp.eq.f32.partialorder %v1240, 0.0
      %v1246 = vand.u32 %v1240, 2147483648
      %v1247 = vsel %vm1245, %v1246, %v1244
      %s1248 = vtos %v1247
      %p1249 = scmp.gt.f32.partialorder %s1248, 1.0
      %s1250 = sadd.f32 %s1248, 1e-07
      %v1251 = vstv %s1250
      %v1252 = vrcp.pop %v1251
      %s1253 = vtos %v1252
      %s1254 = scalar_select %p1249, %s1253, 1.0
      %v1255 = vstv %s1254
      %v1256 = vmul.f32 %v1228, %v1255
      %v1257 = vadd.f32 %v1224, %v1256
      %v1258 = vmul.f32 %v1257, 0.16666667
      %1259 = vst [vmem:[#allocation2 + $0x5] sm:$0x1] %v1258
      %s1260 = sadd.s32 %s254, 6
      %s1261 = smul.u32 %s1260, 6
      %s1262 = sld [smem:[#allocation4 + %s1261]]
      %s1263 = scalar_lea.vmem [#allocation5], %s1262
      %v1264 = vld [vmem:[%s1263] sm:$0x1]
      %v1265 = vmul.f32 %v1264, %v1264
      %v1266 = vsel %vm58, %v1265, 0.0
      %1267 = vadd.xlane.f32.xlu0 %v1266
      %v1268 = vpop.xlane.xlu0 %1267
      %v1269 = vrot.slane %v1268, 4
      %v1270 = vadd.f32 %v1268, %v1269
      %v1271 = vrot.slane %v1270, 2
      %v1272 = vadd.f32 %v1270, %v1271
      %v1273 = vrot.slane %v1272, 1
      %v1274 = vadd.f32 %v1272, %v1273
      %s1275 = vtos %v1274
      %v1276 = vstv %s1275
      %v1277 = vrsqrt.pop %v1276
      %v1278 = vmul.f32 %v1276, %v1277
      %vm1279 = vcmp.eq.f32.partialorder %v1276, inf
      %v1280 = vsel %vm1279, %v1276, %v1278
      %vm1281 = vcmp.eq.f32.partialorder %v1276, 0.0
      %v1282 = vand.u32 %v1276, 2147483648
      %v1283 = vsel %vm1281, %v1282, %v1280
      %s1284 = vtos %v1283
      %p1285 = scmp.gt.f32.partialorder %s1284, 1.0
      %s1286 = sadd.f32 %s1284, 1e-07
      %v1287 = vstv %s1286
      %v1288 = vrcp.pop %v1287
      %s1289 = vtos %v1288
      %s1290 = scalar_select %p1285, %s1289, 1.0
      %v1291 = vstv %s1290
      %v1292 = vmul.f32 %v1264, %v1291
      %v1293 = vadd.f32 %v1292, 0.0
      %s1294 = sadd.s32 %s1261, 1
      %s1295 = sld [smem:[#allocation4 + %s1294]]
      %s1296 = scalar_lea.vmem [#allocation5], %s1295
      %v1297 = vld [vmem:[%s1296] sm:$0x1]
      %v1298 = vmul.f32 %v1297, %v1297
      %v1299 = vsel %vm58, %v1298, 0.0
      %1300 = vadd.xlane.f32.xlu0 %v1299
      %v1301 = vpop.xlane.xlu0 %1300
      %v1302 = vrot.slane %v1301, 4
      %v1303 = vadd.f32 %v1301, %v1302
      %v1304 = vrot.slane %v1303, 2
      %v1305 = vadd.f32 %v1303, %v1304
      %v1306 = vrot.slane %v1305, 1
      %v1307 = vadd.f32 %v1305, %v1306
      %s1308 = vtos %v1307
      %v1309 = vstv %s1308
      %v1310 = vrsqrt.pop %v1309
      %v1311 = vmul.f32 %v1309, %v1310
      %vm1312 = vcmp.eq.f32.partialorder %v1309, inf
      %v1313 = vsel %vm1312, %v1309, %v1311
      %vm1314 = vcmp.eq.f32.partialorder %v1309, 0.0
      %v1315 = vand.u32 %v1309, 2147483648
      %v1316 = vsel %vm1314, %v1315, %v1313
      %s1317 = vtos %v1316
      %p1318 = scmp.gt.f32.partialorder %s1317, 1.0
      %s1319 = sadd.f32 %s1317, 1e-07
      %v1320 = vstv %s1319
      %v1321 = vrcp.pop %v1320
      %s1322 = vtos %v1321
      %s1323 = scalar_select %p1318, %s1322, 1.0
      %v1324 = vstv %s1323
      %v1325 = vmul.f32 %v1297, %v1324
      %v1326 = vadd.f32 %v1293, %v1325
      %s1327 = sadd.s32 %s1261, 2
      %s1328 = sld [smem:[#allocation4 + %s1327]]
      %s1329 = scalar_lea.vmem [#allocation5], %s1328
      %v1330 = vld [vmem:[%s1329] sm:$0x1]
      %v1331 = vmul.f32 %v1330, %v1330
      %v1332 = vsel %vm58, %v1331, 0.0
      %1333 = vadd.xlane.f32.xlu0 %v1332
      %v1334 = vpop.xlane.xlu0 %1333
      %v1335 = vrot.slane %v1334, 4
      %v1336 = vadd.f32 %v1334, %v1335
      %v1337 = vrot.slane %v1336, 2
      %v1338 = vadd.f32 %v1336, %v1337
      %v1339 = vrot.slane %v1338, 1
      %v1340 = vadd.f32 %v1338, %v1339
      %s1341 = vtos %v1340
      %v1342 = vstv %s1341
      %v1343 = vrsqrt.pop %v1342
      %v1344 = vmul.f32 %v1342, %v1343
      %vm1345 = vcmp.eq.f32.partialorder %v1342, inf
      %v1346 = vsel %vm1345, %v1342, %v1344
      %vm1347 = vcmp.eq.f32.partialorder %v1342, 0.0
      %v1348 = vand.u32 %v1342, 2147483648
      %v1349 = vsel %vm1347, %v1348, %v1346
      %s1350 = vtos %v1349
      %p1351 = scmp.gt.f32.partialorder %s1350, 1.0
      %s1352 = sadd.f32 %s1350, 1e-07
      %v1353 = vstv %s1352
      %v1354 = vrcp.pop %v1353
      %s1355 = vtos %v1354
      %s1356 = scalar_select %p1351, %s1355, 1.0
      %v1357 = vstv %s1356
      %v1358 = vmul.f32 %v1330, %v1357
      %v1359 = vadd.f32 %v1326, %v1358
      %s1360 = sadd.s32 %s1261, 3
      %s1361 = sld [smem:[#allocation4 + %s1360]]
      %s1362 = scalar_lea.vmem [#allocation5], %s1361
      %v1363 = vld [vmem:[%s1362] sm:$0x1]
      %v1364 = vmul.f32 %v1363, %v1363
      %v1365 = vsel %vm58, %v1364, 0.0
      %1366 = vadd.xlane.f32.xlu0 %v1365
      %v1367 = vpop.xlane.xlu0 %1366
      %v1368 = vrot.slane %v1367, 4
      %v1369 = vadd.f32 %v1367, %v1368
      %v1370 = vrot.slane %v1369, 2
      %v1371 = vadd.f32 %v1369, %v1370
      %v1372 = vrot.slane %v1371, 1
      %v1373 = vadd.f32 %v1371, %v1372
      %s1374 = vtos %v1373
      %v1375 = vstv %s1374
      %v1376 = vrsqrt.pop %v1375
      %v1377 = vmul.f32 %v1375, %v1376
      %vm1378 = vcmp.eq.f32.partialorder %v1375, inf
      %v1379 = vsel %vm1378, %v1375, %v1377
      %vm1380 = vcmp.eq.f32.partialorder %v1375, 0.0
      %v1381 = vand.u32 %v1375, 2147483648
      %v1382 = vsel %vm1380, %v1381, %v1379
      %s1383 = vtos %v1382
      %p1384 = scmp.gt.f32.partialorder %s1383, 1.0
      %s1385 = sadd.f32 %s1383, 1e-07
      %v1386 = vstv %s1385
      %v1387 = vrcp.pop %v1386
      %s1388 = vtos %v1387
      %s1389 = scalar_select %p1384, %s1388, 1.0
      %v1390 = vstv %s1389
      %v1391 = vmul.f32 %v1363, %v1390
      %v1392 = vadd.f32 %v1359, %v1391
      %s1393 = sadd.s32 %s1261, 4
      %s1394 = sld [smem:[#allocation4 + %s1393]]
      %s1395 = scalar_lea.vmem [#allocation5], %s1394
      %v1396 = vld [vmem:[%s1395] sm:$0x1]
      %v1397 = vmul.f32 %v1396, %v1396
      %v1398 = vsel %vm58, %v1397, 0.0
      %1399 = vadd.xlane.f32.xlu0 %v1398
      %v1400 = vpop.xlane.xlu0 %1399
      %v1401 = vrot.slane %v1400, 4
      %v1402 = vadd.f32 %v1400, %v1401
      %v1403 = vrot.slane %v1402, 2
      %v1404 = vadd.f32 %v1402, %v1403
      %v1405 = vrot.slane %v1404, 1
      %v1406 = vadd.f32 %v1404, %v1405
      %s1407 = vtos %v1406
      %v1408 = vstv %s1407
      %v1409 = vrsqrt.pop %v1408
      %v1410 = vmul.f32 %v1408, %v1409
      %vm1411 = vcmp.eq.f32.partialorder %v1408, inf
      %v1412 = vsel %vm1411, %v1408, %v1410
      %vm1413 = vcmp.eq.f32.partialorder %v1408, 0.0
      %v1414 = vand.u32 %v1408, 2147483648
      %v1415 = vsel %vm1413, %v1414, %v1412
      %s1416 = vtos %v1415
      %p1417 = scmp.gt.f32.partialorder %s1416, 1.0
      %s1418 = sadd.f32 %s1416, 1e-07
      %v1419 = vstv %s1418
      %v1420 = vrcp.pop %v1419
      %s1421 = vtos %v1420
      %s1422 = scalar_select %p1417, %s1421, 1.0
      %v1423 = vstv %s1422
      %v1424 = vmul.f32 %v1396, %v1423
      %v1425 = vadd.f32 %v1392, %v1424
      %s1426 = sadd.s32 %s1261, 5
      %s1427 = sld [smem:[#allocation4 + %s1426]]
      %s1428 = scalar_lea.vmem [#allocation5], %s1427
      %v1429 = vld [vmem:[%s1428] sm:$0x1]
      %v1430 = vmul.f32 %v1429, %v1429
      %v1431 = vsel %vm58, %v1430, 0.0
      %1432 = vadd.xlane.f32.xlu0 %v1431
      %v1433 = vpop.xlane.xlu0 %1432
      %v1434 = vrot.slane %v1433, 4
      %v1435 = vadd.f32 %v1433, %v1434
      %v1436 = vrot.slane %v1435, 2
      %v1437 = vadd.f32 %v1435, %v1436
      %v1438 = vrot.slane %v1437, 1
      %v1439 = vadd.f32 %v1437, %v1438
      %s1440 = vtos %v1439
      %v1441 = vstv %s1440
      %v1442 = vrsqrt.pop %v1441
      %v1443 = vmul.f32 %v1441, %v1442
      %vm1444 = vcmp.eq.f32.partialorder %v1441, inf
      %v1445 = vsel %vm1444, %v1441, %v1443
      %vm1446 = vcmp.eq.f32.partialorder %v1441, 0.0
      %v1447 = vand.u32 %v1441, 2147483648
      %v1448 = vsel %vm1446, %v1447, %v1445
      %s1449 = vtos %v1448
      %p1450 = scmp.gt.f32.partialorder %s1449, 1.0
      %s1451 = sadd.f32 %s1449, 1e-07
      %v1452 = vstv %s1451
      %v1453 = vrcp.pop %v1452
      %s1454 = vtos %v1453
      %s1455 = scalar_select %p1450, %s1454, 1.0
      %v1456 = vstv %s1455
      %v1457 = vmul.f32 %v1429, %v1456
      %v1458 = vadd.f32 %v1425, %v1457
      %v1459 = vmul.f32 %v1458, 0.16666667
      %1460 = vst [vmem:[#allocation2 + $0x6] sm:$0x1] %v1459
      %s1461 = sadd.s32 %s254, 7
      %s1462 = smul.u32 %s1461, 6
      %s1463 = sld [smem:[#allocation4 + %s1462]]
      %s1464 = scalar_lea.vmem [#allocation5], %s1463
      %v1465 = vld [vmem:[%s1464] sm:$0x1]
      %v1466 = vmul.f32 %v1465, %v1465
      %v1467 = vsel %vm58, %v1466, 0.0
      %1468 = vadd.xlane.f32.xlu0 %v1467
      %v1469 = vpop.xlane.xlu0 %1468
      %v1470 = vrot.slane %v1469, 4
      %v1471 = vadd.f32 %v1469, %v1470
      %v1472 = vrot.slane %v1471, 2
      %v1473 = vadd.f32 %v1471, %v1472
      %v1474 = vrot.slane %v1473, 1
      %v1475 = vadd.f32 %v1473, %v1474
      %s1476 = vtos %v1475
      %v1477 = vstv %s1476
      %v1478 = vrsqrt.pop %v1477
      %v1479 = vmul.f32 %v1477, %v1478
      %vm1480 = vcmp.eq.f32.partialorder %v1477, inf
      %v1481 = vsel %vm1480, %v1477, %v1479
      %vm1482 = vcmp.eq.f32.partialorder %v1477, 0.0
      %v1483 = vand.u32 %v1477, 2147483648
      %v1484 = vsel %vm1482, %v1483, %v1481
      %s1485 = vtos %v1484
      %p1486 = scmp.gt.f32.partialorder %s1485, 1.0
      %s1487 = sadd.f32 %s1485, 1e-07
      %v1488 = vstv %s1487
      %v1489 = vrcp.pop %v1488
      %s1490 = vtos %v1489
      %s1491 = scalar_select %p1486, %s1490, 1.0
      %v1492 = vstv %s1491
      %v1493 = vmul.f32 %v1465, %v1492
      %v1494 = vadd.f32 %v1493, 0.0
      %s1495 = sadd.s32 %s1462, 1
      %s1496 = sld [smem:[#allocation4 + %s1495]]
      %s1497 = scalar_lea.vmem [#allocation5], %s1496
      %v1498 = vld [vmem:[%s1497] sm:$0x1]
      %v1499 = vmul.f32 %v1498, %v1498
      %v1500 = vsel %vm58, %v1499, 0.0
      %1501 = vadd.xlane.f32.xlu0 %v1500
      %v1502 = vpop.xlane.xlu0 %1501
      %v1503 = vrot.slane %v1502, 4
      %v1504 = vadd.f32 %v1502, %v1503
      %v1505 = vrot.slane %v1504, 2
      %v1506 = vadd.f32 %v1504, %v1505
      %v1507 = vrot.slane %v1506, 1
      %v1508 = vadd.f32 %v1506, %v1507
      %s1509 = vtos %v1508
      %v1510 = vstv %s1509
      %v1511 = vrsqrt.pop %v1510
      %v1512 = vmul.f32 %v1510, %v1511
      %vm1513 = vcmp.eq.f32.partialorder %v1510, inf
      %v1514 = vsel %vm1513, %v1510, %v1512
      %vm1515 = vcmp.eq.f32.partialorder %v1510, 0.0
      %v1516 = vand.u32 %v1510, 2147483648
      %v1517 = vsel %vm1515, %v1516, %v1514
      %s1518 = vtos %v1517
      %p1519 = scmp.gt.f32.partialorder %s1518, 1.0
      %s1520 = sadd.f32 %s1518, 1e-07
      %v1521 = vstv %s1520
      %v1522 = vrcp.pop %v1521
      %s1523 = vtos %v1522
      %s1524 = scalar_select %p1519, %s1523, 1.0
      %v1525 = vstv %s1524
      %v1526 = vmul.f32 %v1498, %v1525
      %v1527 = vadd.f32 %v1494, %v1526
      %s1528 = sadd.s32 %s1462, 2
      %s1529 = sld [smem:[#allocation4 + %s1528]]
      %s1530 = scalar_lea.vmem [#allocation5], %s1529
      %v1531 = vld [vmem:[%s1530] sm:$0x1]
      %v1532 = vmul.f32 %v1531, %v1531
      %v1533 = vsel %vm58, %v1532, 0.0
      %1534 = vadd.xlane.f32.xlu0 %v1533
      %v1535 = vpop.xlane.xlu0 %1534
      %v1536 = vrot.slane %v1535, 4
      %v1537 = vadd.f32 %v1535, %v1536
      %v1538 = vrot.slane %v1537, 2
      %v1539 = vadd.f32 %v1537, %v1538
      %v1540 = vrot.slane %v1539, 1
      %v1541 = vadd.f32 %v1539, %v1540
      %s1542 = vtos %v1541
      %v1543 = vstv %s1542
      %v1544 = vrsqrt.pop %v1543
      %v1545 = vmul.f32 %v1543, %v1544
      %vm1546 = vcmp.eq.f32.partialorder %v1543, inf
      %v1547 = vsel %vm1546, %v1543, %v1545
      %vm1548 = vcmp.eq.f32.partialorder %v1543, 0.0
      %v1549 = vand.u32 %v1543, 2147483648
      %v1550 = vsel %vm1548, %v1549, %v1547
      %s1551 = vtos %v1550
      %p1552 = scmp.gt.f32.partialorder %s1551, 1.0
      %s1553 = sadd.f32 %s1551, 1e-07
      %v1554 = vstv %s1553
      %v1555 = vrcp.pop %v1554
      %s1556 = vtos %v1555
      %s1557 = scalar_select %p1552, %s1556, 1.0
      %v1558 = vstv %s1557
      %v1559 = vmul.f32 %v1531, %v1558
      %v1560 = vadd.f32 %v1527, %v1559
      %s1561 = sadd.s32 %s1462, 3
      %s1562 = sld [smem:[#allocation4 + %s1561]]
      %s1563 = scalar_lea.vmem [#allocation5], %s1562
      %v1564 = vld [vmem:[%s1563] sm:$0x1]
      %v1565 = vmul.f32 %v1564, %v1564
      %v1566 = vsel %vm58, %v1565, 0.0
      %1567 = vadd.xlane.f32.xlu0 %v1566
      %v1568 = vpop.xlane.xlu0 %1567
      %v1569 = vrot.slane %v1568, 4
      %v1570 = vadd.f32 %v1568, %v1569
      %v1571 = vrot.slane %v1570, 2
      %v1572 = vadd.f32 %v1570, %v1571
      %v1573 = vrot.slane %v1572, 1
      %v1574 = vadd.f32 %v1572, %v1573
      %s1575 = vtos %v1574
      %v1576 = vstv %s1575
      %v1577 = vrsqrt.pop %v1576
      %v1578 = vmul.f32 %v1576, %v1577
      %vm1579 = vcmp.eq.f32.partialorder %v1576, inf
      %v1580 = vsel %vm1579, %v1576, %v1578
      %vm1581 = vcmp.eq.f32.partialorder %v1576, 0.0
      %v1582 = vand.u32 %v1576, 2147483648
      %v1583 = vsel %vm1581, %v1582, %v1580
      %s1584 = vtos %v1583
      %p1585 = scmp.gt.f32.partialorder %s1584, 1.0
      %s1586 = sadd.f32 %s1584, 1e-07
      %v1587 = vstv %s1586
      %v1588 = vrcp.pop %v1587
      %s1589 = vtos %v1588
      %s1590 = scalar_select %p1585, %s1589, 1.0
      %v1591 = vstv %s1590
      %v1592 = vmul.f32 %v1564, %v1591
      %v1593 = vadd.f32 %v1560, %v1592
      %s1594 = sadd.s32 %s1462, 4
      %s1595 = sld [smem:[#allocation4 + %s1594]]
      %s1596 = scalar_lea.vmem [#allocation5], %s1595
      %v1597 = vld [vmem:[%s1596] sm:$0x1]
      %v1598 = vmul.f32 %v1597, %v1597
      %v1599 = vsel %vm58, %v1598, 0.0
      %1600 = vadd.xlane.f32.xlu0 %v1599
      %v1601 = vpop.xlane.xlu0 %1600
      %v1602 = vrot.slane %v1601, 4
      %v1603 = vadd.f32 %v1601, %v1602
      %v1604 = vrot.slane %v1603, 2
      %v1605 = vadd.f32 %v1603, %v1604
      %v1606 = vrot.slane %v1605, 1
      %v1607 = vadd.f32 %v1605, %v1606
      %s1608 = vtos %v1607
      %v1609 = vstv %s1608
      %v1610 = vrsqrt.pop %v1609
      %v1611 = vmul.f32 %v1609, %v1610
      %vm1612 = vcmp.eq.f32.partialorder %v1609, inf
      %v1613 = vsel %vm1612, %v1609, %v1611
      %vm1614 = vcmp.eq.f32.partialorder %v1609, 0.0
      %v1615 = vand.u32 %v1609, 2147483648
      %v1616 = vsel %vm1614, %v1615, %v1613
      %s1617 = vtos %v1616
      %p1618 = scmp.gt.f32.partialorder %s1617, 1.0
      %s1619 = sadd.f32 %s1617, 1e-07
      %v1620 = vstv %s1619
      %v1621 = vrcp.pop %v1620
      %s1622 = vtos %v1621
      %s1623 = scalar_select %p1618, %s1622, 1.0
      %v1624 = vstv %s1623
      %v1625 = vmul.f32 %v1597, %v1624
      %v1626 = vadd.f32 %v1593, %v1625
      %s1627 = sadd.s32 %s1462, 5
      %s1628 = sld [smem:[#allocation4 + %s1627]]
      %s1629 = scalar_lea.vmem [#allocation5], %s1628
      %v1630 = vld [vmem:[%s1629] sm:$0x1]
      %v1631 = vmul.f32 %v1630, %v1630
      %v1632 = vsel %vm58, %v1631, 0.0
      %1633 = vadd.xlane.f32.xlu0 %v1632
      %v1634 = vpop.xlane.xlu0 %1633
      %v1635 = vrot.slane %v1634, 4
      %v1636 = vadd.f32 %v1634, %v1635
      %v1637 = vrot.slane %v1636, 2
      %v1638 = vadd.f32 %v1636, %v1637
      %v1639 = vrot.slane %v1638, 1
      %v1640 = vadd.f32 %v1638, %v1639
      %s1641 = vtos %v1640
      %v1642 = vstv %s1641
      %v1643 = vrsqrt.pop %v1642
      %v1644 = vmul.f32 %v1642, %v1643
      %vm1645 = vcmp.eq.f32.partialorder %v1642, inf
      %v1646 = vsel %vm1645, %v1642, %v1644
      %vm1647 = vcmp.eq.f32.partialorder %v1642, 0.0
      %v1648 = vand.u32 %v1642, 2147483648
      %v1649 = vsel %vm1647, %v1648, %v1646
      %s1650 = vtos %v1649
      %p1651 = scmp.gt.f32.partialorder %s1650, 1.0
      %s1652 = sadd.f32 %s1650, 1e-07
      %v1653 = vstv %s1652
      %v1654 = vrcp.pop %v1653
      %s1655 = vtos %v1654
      %s1656 = scalar_select %p1651, %s1655, 1.0
      %v1657 = vstv %s1656
      %v1658 = vmul.f32 %v1630, %v1657
      %v1659 = vadd.f32 %v1626, %v1658
      %v1660 = vmul.f32 %v1659, 0.16666667
      %1661 = vst [vmem:[#allocation2 + $0x7] sm:$0x1] %v1660
    $region25: #{tpu_custom_call.1} parent=1 // pred_fallthru
      _
    %v1662 = vld [vmem:[#allocation2] sm:$0xff]
    %v1663 = vpack.c.bf16 %v1662, %v1662
    %v1664 = vld [vmem:[#allocation8] sm:$0xf]
    %v1665 = vld [vmem:[#allocation8 + $0x4] sm:$0xf]
    %v1666 = vld [vmem:[#allocation8 + $0x8] sm:$0xf]
    %v1667 = vld [vmem:[#allocation8 + $0xc] sm:$0xf]
    %v1668 = vld [vmem:[#allocation8 + $0x10] sm:$0xf]
    %v1669 = vld [vmem:[#allocation8 + $0x14] sm:$0xf]
    %v1670 = vld [vmem:[#allocation8 + $0x18] sm:$0xf]
    %v1671 = vld [vmem:[#allocation8 + $0x1c] sm:$0xf]
    %v1672 = vld [vmem:[#allocation8 + $0x20] sm:$0xf]
    %v1673 = vld [vmem:[#allocation8 + $0x24] sm:$0xf]
    %v1674 = vld [vmem:[#allocation8 + $0x28] sm:$0xf]
    %v1675 = vld [vmem:[#allocation8 + $0x2c] sm:$0xf]
    %v1676 = vld [vmem:[#allocation8 + $0x30] sm:$0xf]
    %v1677 = vld [vmem:[#allocation8 + $0x34] sm:$0xf]
    %v1678 = vld [vmem:[#allocation8 + $0x38] sm:$0xf]
    %v1679 = vld [vmem:[#allocation8 + $0x3c] sm:$0xf]
    %v1680 = vld [vmem:[#allocation8 + $0x40] sm:$0xf]
    %v1681 = vld [vmem:[#allocation8 + $0x44] sm:$0xf]
    %v1682 = vld [vmem:[#allocation8 + $0x48] sm:$0xf]
    %v1683 = vld [vmem:[#allocation8 + $0x4c] sm:$0xf]
    %v1684 = vld [vmem:[#allocation8 + $0x50] sm:$0xf]
    %v1685 = vld [vmem:[#allocation8 + $0x54] sm:$0xf]
    %v1686 = vld [vmem:[#allocation8 + $0x58] sm:$0xf]
    %v1687 = vld [vmem:[#allocation8 + $0x5c] sm:$0xf]
    %v1688 = vld [vmem:[#allocation8 + $0x60] sm:$0xf]
    %v1689 = vld [vmem:[#allocation8 + $0x64] sm:$0xf]
    %v1690 = vld [vmem:[#allocation8 + $0x68] sm:$0xf]
    %v1691 = vld [vmem:[#allocation8 + $0x6c] sm:$0xf]
    %v1692 = vld [vmem:[#allocation8 + $0x70] sm:$0xf]
    %v1693 = vld [vmem:[#allocation8 + $0x74] sm:$0xf]
    %v1694 = vld [vmem:[#allocation8 + $0x78] sm:$0xf]
    %v1695 = vld [vmem:[#allocation8 + $0x7c] sm:$0xf]
    %v1696 = vld [vmem:[%s3] sm:$0x3]
    %v1698 = vlaneseq
    %v1699 = vshrl.u32 %v1698, 7
    %v1700 = vsub.s32 0, %v1699
    %v1701 = vrot.slane %v1696, %v1700
    %v1702 = vlaneseq
    %v1703 = vshrl.u32 %v1702, 7
    %v1704 = vsub.s32 1, %v1703
    %v1705 = vrot.slane %v1696, %v1704
    %v1740 = vunpack.c.l.b16 %v1664
    %v1741 = vunpack.c.l.b16 %v1665
    %v1742 = vunpack.c.l.b16 %v1666
    %v1743 = vunpack.c.l.b16 %v1667
    %v1744 = vunpack.c.l.b16 %v1668
    %v1745 = vunpack.c.l.b16 %v1669
    %v1746 = vunpack.c.l.b16 %v1670
    %v1747 = vunpack.c.l.b16 %v1671
    %v1748 = vunpack.c.l.b16 %v1672
    %v1749 = vunpack.c.l.b16 %v1673
    %v1750 = vunpack.c.l.b16 %v1674
    %v1751 = vunpack.c.l.b16 %v1675
    %v1752 = vunpack.c.l.b16 %v1676
    %v1753 = vunpack.c.l.b16 %v1677
    %v1754 = vunpack.c.l.b16 %v1678
    %v1755 = vunpack.c.l.b16 %v1679
    %v1756 = vunpack.c.l.b16 %v1680
    %v1757 = vunpack.c.l.b16 %v1681
    %v1758 = vunpack.c.l.b16 %v1682
    %v1759 = vunpack.c.l.b16 %v1683
    %v1760 = vunpack.c.l.b16 %v1684
    %v1761 = vunpack.c.l.b16 %v1685
    %v1762 = vunpack.c.l.b16 %v1686
    %v1763 = vunpack.c.l.b16 %v1687
    %v1764 = vunpack.c.l.b16 %v1688
    %v1765 = vunpack.c.l.b16 %v1689
    %v1766 = vunpack.c.l.b16 %v1690
    %v1767 = vunpack.c.l.b16 %v1691
    %v1768 = vunpack.c.l.b16 %v1692
    %v1769 = vunpack.c.l.b16 %v1693
    %v1770 = vunpack.c.l.b16 %v1694
    %v1771 = vunpack.c.l.b16 %v1695
    %v1772 = vpack.c.b16 %v1741, %v1740
    %v1773 = vpack.c.b16 %v1743, %v1742
    %v1774 = vpack.c.b16 %v1745, %v1744
    %v1775 = vpack.c.b16 %v1747, %v1746
    %v1776 = vpack.c.b16 %v1749, %v1748
    %v1777 = vpack.c.b16 %v1751, %v1750
    %v1778 = vpack.c.b16 %v1753, %v1752
    %v1779 = vpack.c.b16 %v1755, %v1754
    %v1780 = vpack.c.b16 %v1757, %v1756
    %v1781 = vpack.c.b16 %v1759, %v1758
    %v1782 = vpack.c.b16 %v1761, %v1760
    %v1783 = vpack.c.b16 %v1763, %v1762
    %v1784 = vpack.c.b16 %v1765, %v1764
    %v1785 = vpack.c.b16 %v1767, %v1766
    %v1786 = vpack.c.b16 %v1769, %v1768
    %v1787 = vpack.c.b16 %v1771, %v1770
    %1804 = vmatprep.subr.bf16.mxu0 0
    %1805 = vmatpush1.bf16.xpose.msra.mxu0 %v1779
    %1806 = vmatprep.subr.bf16.mxu0 0
    %1807 = vmatpush1.bf16.xpose.msra.mxu0 %v1778
    %1808 = vmatprep.subr.bf16.mxu0 0
    %1809 = vmatpush1.bf16.xpose.msra.mxu0 %v1777
    %1810 = vmatprep.subr.bf16.mxu0 0
    %1811 = vmatpush1.bf16.xpose.msra.mxu0 %v1776
    %1812 = vmatprep.subr.bf16.mxu0 0
    %1813 = vmatpush1.bf16.xpose.msra.mxu0 %v1775
    %1814 = vmatprep.subr.bf16.mxu0 0
    %1815 = vmatpush1.bf16.xpose.msra.mxu0 %v1774
    %1816 = vmatprep.subr.bf16.mxu0 0
    %1817 = vmatpush1.bf16.xpose.msra.mxu0 %v1773
    %1818 = vmatprep.subr.bf16.mxu0 0
    %1819 = vmatpush1.bf16.xpose.msra.mxu0 %v1772
    %1820 = vmatprep.subr.bf16.mxu0 0
    %1821 = vmatpush2.bf16.xpose.msra.mxu0 %v1787
    %1822 = vmatprep.subr.bf16.mxu0 0
    %1823 = vmatpush2.bf16.xpose.msra.mxu0 %v1786
    %1824 = vmatprep.subr.bf16.mxu0 0
    %1825 = vmatpush2.bf16.xpose.msra.mxu0 %v1785
    %1826 = vmatprep.subr.bf16.mxu0 0
    %1827 = vmatpush2.bf16.xpose.msra.mxu0 %v1784
    %1828 = vmatprep.subr.bf16.mxu0 0
    %1829 = vmatpush2.bf16.xpose.msra.mxu0 %v1783
    %1830 = vmatprep.subr.bf16.mxu0 0
    %1831 = vmatpush2.bf16.xpose.msra.mxu0 %v1782
    %1832 = vmatprep.subr.bf16.mxu0 0
    %1833 = vmatpush2.bf16.xpose.msra.mxu0 %v1781
    %1834 = vmatprep.subr.bf16.mxu0 0
    %1835 = vmatpush2.bf16.xpose.msra.mxu0 %v1780
    %1836 = vmatprep.mubr.bf16.mxu0 0
    %1837 = vmatmul.mubr.bf16.gmra.mxu0 %v1663
    %v1838 = vpop.f32.mrf.mxu0
    %v1839 = vadd.f32 %v1701, %v1838
    %v1840 = vpop.f32.mrf.mxu0
    %v1841 = vadd.f32 %v1705, %v1840
    %v1842 = vpop.f32.mrf.mxu0
    %v1843 = vpop.f32.mrf.mxu0
    %1844 = vdwg.mxu0
    %1845 = vst [vmem:[#allocation10] sm:$0xff] %v1839
    %1846 = vst [vmem:[#allocation10 + $0x8] sm:$0xff] %v1841
    // Predicated region
    $region26: #{tpu_custom_call.1} parent=1 // pred_check
      _
    $region27: #{tpu_custom_call.1} parent=1 // pred_check_branch
      %1848 = sbr.rel (0) target = $region29
    $region28: #{tpu_custom_call.1} parent=1 // pred_region
      %s1850 = ssub.s32 256, 256
      %1851 = vsyncadd [#allocation7], %s1850
      %s1853 = sshll.u32 [#allocation10], 4
      %s1854 = int_to_ptr.vmem [resolvable:$true] %s1853
      %1856 = dma.vmem_to_hbm [thread:$0]  %s1854, 256, %s4, [#allocation7]
    $region29: #{tpu_custom_call.1} parent=1 // pred_fallthru
      _
    // Predicated region
    $region30: #{tpu_custom_call.1} parent=1 // pred_check
      _
    $region31: #{tpu_custom_call.1} parent=1 // pred_check_branch
      %1858 = sbr.rel (0) target = $region33
    $region32: #{tpu_custom_call.1} parent=1 // pred_region
      %1859 = dma.done [#allocation7], 256
    $region33: #{tpu_custom_call.1} parent=1 // pred_fallthru
      _
    %1860 = vsyncpa [#allocation6], 1
    %1861 = vsyncpa [#allocation9], 1
    %1862 = vsyncpa [#allocation7], 1

</llo_original>
